<compile_context>
chip_gen: v5e
topology: v5e:2x2
jax: 0.10.0
libtpu: 0.0.40
codegen_flags: <defaults>
</compile_context>

<pallas_src>
import jax
import jax.numpy as jnp
from jax.experimental import pallas as pl
from jax.experimental.pallas import tpu as pltpu

EPS = 1e-5
_TM_MATMUL = 512                 # row tile (sublane axis) for pass-1 matmul kernels
_TM_ELEMWISE = 1024              # row tile for pass-2 elementwise kernel
_VMEM_LIMIT = 32 * 1024 * 1024   # explicit scoped-VMEM cap (safe on v5e/v6e/v7x)


def _round_up(x, m):
    return (x + m - 1) // m * m


def _row_tiling(m, max_tile):
    """Pick a row tile (multiple of 16 for packed bf16 sublanes) and padded row count."""
    if m <= max_tile:
        t = _round_up(m, 16)
        return t, t
    return max_tile, _round_up(m, max_tile)


# ---------------------------------------------------------------------------
# Pass 1a: matmul + packed per-tile BN partial statistics (rows 0/1 of an (8,Cp) block)
# ---------------------------------------------------------------------------
def _mm_stats_kernel(a_ref, w_ref, y_ref, st_ref):
    y = jnp.dot(a_ref[...], w_ref[...], preferred_element_type=jnp.float32)
    y_ref[...] = y
    s1 = jnp.sum(y, axis=0, keepdims=True)          # (1, Cp)
    s2 = jnp.sum(y * y, axis=0, keepdims=True)      # (1, Cp)
    rows = jax.lax.broadcasted_iota(jnp.int32, st_ref.shape, 0)
    st_ref[...] = jnp.where(rows == 0, s1, jnp.where(rows == 1, s2, 0.0))


def _matmul_bn_pass1(A, w_pad):
    """A: (M, K) bf16 im2col matrix. w_pad: (Kp, Cp) bf16 (pre-padded, VMEM-resident).

    Returns y (Mp, Cp) f32 and global per-channel sum / sum-of-squares over the real
    M rows (padded rows are zeros so they contribute nothing)."""
    M, K = A.shape
    Kp, Cp = w_pad.shape
    tm, Mp = _row_tiling(M, _TM_MATMUL)
    gm = Mp // tm
    if (Mp, Kp) != (M, K):
        A = jnp.pad(A, ((0, Mp - M), (0, Kp - K)))

    cost = pl.CostEstimate(flops=2 * Mp * Kp * Cp, transcendentals=0,
                           bytes_accessed=Mp * Kp * 2 + Kp * Cp * 2 + Mp * Cp * 4)
    y, st = pl.pallas_call(
        _mm_stats_kernel,
        out_shape=(jax.ShapeDtypeStruct((Mp, Cp), jnp.float32),
                   jax.ShapeDtypeStruct((gm * 8, Cp), jnp.float32)),
        grid=(gm,),
        in_specs=[pl.BlockSpec((tm, Kp), lambda i: (i, 0)),
                  pl.BlockSpec((Kp, Cp), lambda i: (0, 0))],   # weight stays resident
        out_specs=(pl.BlockSpec((tm, Cp), lambda i: (i, 0)),
                   pl.BlockSpec((8, Cp), lambda i: (i, 0))),
        compiler_params=pltpu.CompilerParams(
            dimension_semantics=("parallel",), vmem_limit_bytes=_VMEM_LIMIT),
        cost_estimate=cost,
    )(A, w_pad)

    st = st.reshape(gm, 8, Cp)
    return y, st[:, 0, :].sum(axis=0), st[:, 1, :].sum(axis=0)


# ---------------------------------------------------------------------------
# Pass 1b: fully fused matmul + bias + activation (layers without BatchNorm)
# ---------------------------------------------------------------------------
def _make_mm_bias_act_kernel(act):
    def kernel(a_ref, w_ref, b_ref, o_ref):
        y = jnp.dot(a_ref[...], w_ref[...], preferred_element_type=jnp.float32)
        y = y + b_ref[...]
        if act == "relu":
            y = jnp.maximum(y, 0.0)
        elif act == "tanh":
            y = jnp.tanh(y)
        o_ref[...] = y.astype(o_ref.dtype)
    return kernel


def _matmul_bias_act(A, w_pad, bias_pad, act):
    M, K = A.shape
    Kp, Cp = w_pad.shape
    tm, Mp = _row_tiling(M, _TM_MATMUL)
    gm = Mp // tm
    if (Mp, Kp) != (M, K):
        A = jnp.pad(A, ((0, Mp - M), (0, Kp - K)))

    cost = pl.CostEstimate(flops=2 * Mp * Kp * Cp, transcendentals=Mp * Cp,
                           bytes_accessed=Mp * Kp * 2 + Kp * Cp * 2 + Mp * Cp * 4)
    return pl.pallas_call(
        _make_mm_bias_act_kernel(act),
        out_shape=jax.ShapeDtypeStruct((Mp, Cp), jnp.float32),
        grid=(gm,),
        in_specs=[pl.BlockSpec((tm, Kp), lambda i: (i, 0)),
                  pl.BlockSpec((Kp, Cp), lambda i: (0, 0)),
                  pl.BlockSpec((1, Cp), lambda i: (0, 0))],
        out_specs=pl.BlockSpec((tm, Cp), lambda i: (i, 0)),
        compiler_params=pltpu.CompilerParams(
            dimension_semantics=("parallel",), vmem_limit_bytes=_VMEM_LIMIT),
        cost_estimate=cost,
    )(A, w_pad, bias_pad.reshape(1, Cp))


# ---------------------------------------------------------------------------
# Pass 2: lane-dense elementwise kernel: act(y * scale + shift [+ residual]) -> bf16
# ---------------------------------------------------------------------------
def _make_affine_kernel(act, add_res):
    def kernel(*refs):
        if add_res:
            y_ref, sc_ref, sh_ref, r_ref, o_ref = refs
        else:
            y_ref, sc_ref, sh_ref, o_ref = refs
        y = y_ref[...] * sc_ref[...] + sh_ref[...]
        if add_res:
            y = y + r_ref[...].astype(jnp.float32)
        if act == "relu":
            y = jnp.maximum(y, 0.0)
        elif act == "tanh":
            y = jnp.tanh(y)
        o_ref[...] = y.astype(o_ref.dtype)
    return kernel


def _affine_act_pass2(y, scale, shift, residual, act):
    Mp, Cp = y.shape
    if Mp % _TM_ELEMWISE == 0:
        tm = _TM_ELEMWISE
    elif Mp % _TM_MATMUL == 0:
        tm = _TM_MATMUL
    else:
        tm = Mp
    gm = Mp // tm

    row_spec = pl.BlockSpec((tm, Cp), lambda i: (i, 0))
    vec_spec = pl.BlockSpec((1, Cp), lambda i: (0, 0))
    in_specs = [row_spec, vec_spec, vec_spec]
    args = [y, scale.reshape(1, Cp).astype(jnp.float32),
            shift.reshape(1, Cp).astype(jnp.float32)]
    if residual is not None:
        in_specs.append(row_spec)
        args.append(residual)

    return pl.pallas_call(
        _make_affine_kernel(act, residual is not None),
        out_shape=jax.ShapeDtypeStruct((Mp, Cp), jnp.bfloat16),
        grid=(gm,),
        in_specs=in_specs,
        out_specs=row_spec,
        compiler_params=pltpu.CompilerParams(
            dimension_semantics=("parallel",), vmem_limit_bytes=_VMEM_LIMIT),
    )(*args)


def _bn_scale_shift(s1, s2, m_real, gamma, beta):
    mean = s1 / m_real
    var = jnp.maximum(s2 / m_real - mean * mean, 0.0)   # biased variance (training-mode BN)
    # TODO(synk): use a shifted / Welford-style combine if E[x^2]-E[x]^2 cancellation
    # becomes a problem at very large M.
    inv = jax.lax.rsqrt(var + EPS)
    scale = gamma * inv
    shift = beta - mean * scale
    return scale, shift


# ---------------------------------------------------------------------------
# Layout glue: padding / im2col (plain JAX, bf16 end-to-end)
# ---------------------------------------------------------------------------
def _im2col(xp, taps, stride, ho, wo):
    # TODO(synk): replace the HBM-materialized im2col with in-kernel tap accumulation
    # (per-tap pl.ds / Element-offset windows over the padded NHWC activation).
    cols = [xp[:, di:di + stride * (ho - 1) + 1:stride,
               dj:dj + stride * (wo - 1) + 1:stride, :] for (di, dj) in taps]
    a = jnp.concatenate(cols, axis=-1)
    return a.reshape(-1, a.shape[-1])


def conv_layer(x, layer, *, stride=1, pad=0, pad_mode="zero", act="relu",
               residual=None):
    """x: NHWC bf16. Returns NHWC (bf16 for BN layers, f32 for the fused bias+tanh layer)."""
    kh, kw, cout = layer["kh"], layer["kw"], layer["cout"]
    if pad > 0:
        mode = "reflect" if pad_mode == "reflect" else "constant"
        x = jnp.pad(x, ((0, 0), (pad, pad), (pad, pad), (0, 0)), mode=mode)
    n, h, w, _ = x.shape
    ho = (h - kh) // stride + 1
    wo = (w - kw) // stride + 1
    taps = [(i, j) for i in range(kh) for j in range(kw)]
    a = _im2col(x, taps, stride, ho, wo)
    m = n * ho * wo

    if layer["use_bn"]:
        y, s1, s2 = _matmul_bn_pass1(a, layer["w"])
        mp, cp = y.shape
        scale, shift = _bn_scale_shift(s1, s2, float(m), layer["gamma"], layer["beta"])
        res = None
        if residual is not None:
            res = residual.reshape(m, cout).astype(jnp.bfloat16)
            if (mp, cp) != (m, cout):           # only pad when the tiles require it
                res = jnp.pad(res, ((0, mp - m), (0, cp - cout)))
        out = _affine_act_pass2(y, scale, shift, res, act)
    else:
        out = _matmul_bias_act(a, layer["w"], layer["bias"], act)

    return out[:m, :cout].reshape(n, ho, wo, cout)


# ---------------------------------------------------------------------------
# ConvTranspose2d(k=3, s=2, p=1, output_padding=1): all 4 sub-pixel phases merged
# into one matmul:  y[2m+a, 2n+b] = sum_taps  x_pad[m+di, n+dj] @ w[:, :, kh, kw]
# ---------------------------------------------------------------------------
_CT_TAPS = [(0, 0), (0, 1), (1, 0), (1, 1)]
_CT_PHASES = [(0, 0), (0, 1), (1, 0), (1, 1)]
# phase (a, b) -> {input tap (di, dj): weight index (kh, kw)}
_CT_PHASE_TAPS = {
    (0, 0): {(0, 0): (1, 1)},
    (0, 1): {(0, 0): (1, 2), (0, 1): (1, 0)},
    (1, 0): {(0, 0): (2, 1), (1, 0): (0, 1)},
    (1, 1): {(0, 0): (2, 2), (0, 1): (2, 0), (1, 0): (0, 2), (1, 1): (0, 0)},
}


def conv_transpose_layer(x, layer):
    n, h, w, _ = x.shape
    cout = layer["cout"]
    xp = jnp.pad(x, ((0, 0), (0, 1), (0, 1), (0, 0)))     # bottom/right zero pad
    a = _im2col(xp, _CT_TAPS, 1, h, w)                    # (M, 4*cin) bf16
    m = n * h * w

    y, s1f, s2f = _matmul_bn_pass1(a, layer["w"])
    c4 = 4 * cout
    s1 = s1f[:c4].reshape(4, cout).sum(axis=0)            # global stats across phases
    s2 = s2f[:c4].reshape(4, cout).sum(axis=0)
    scale, shift = _bn_scale_shift(s1, s2, float(4 * m), layer["gamma"], layer["beta"])

    cp = y.shape[1]
    scale4 = jnp.pad(jnp.tile(scale, 4), (0, cp - c4))
    shift4 = jnp.pad(jnp.tile(shift, 4), (0, cp - c4))
    out = _affine_act_pass2(y, scale4, shift4, None, "relu")

    out = out[:m, :c4].reshape(n, h, w, 2, 2, cout)        # (n, h, w, a, b, c)
    out = out.transpose(0, 1, 3, 2, 4, 5).reshape(n, 2 * h, 2 * w, cout)
    return out


# ---------------------------------------------------------------------------
# Weight preparation (done ONCE, outside the jitted forward)
# ---------------------------------------------------------------------------
def _prep_conv(w_oihw, gamma, beta, bias):
    cout, cin, kh, kw = w_oihw.shape
    k = kh * kw * cin
    kp, cp = _round_up(k, 128), _round_up(cout, 128)
    w2 = jnp.transpose(w_oihw, (2, 3, 1, 0)).reshape(k, cout)
    w2 = jnp.pad(w2, ((0, kp - k), (0, cp - cout))).astype(jnp.bfloat16)
    layer = {"w": w2, "kh": kh, "kw": kw, "cout": cout, "use_bn": gamma is not None}
    if gamma is not None:
        layer["gamma"] = jnp.pad(gamma, (0, cp - cout)).astype(jnp.float32)
        layer["beta"] = jnp.pad(beta, (0, cp - cout)).astype(jnp.float32)
    else:
        layer["bias"] = jnp.pad(bias, (0, cp - cout)).astype(jnp.float32)
    return layer


def _prep_convT(w_iohw, gamma, beta):
    cin, cout = int(w_iohw.shape[0]), int(w_iohw.shape[1])
    k, c = 4 * cin, 4 * cout
    kp, cp = _round_up(k, 128), _round_up(c, 128)
    w2 = jnp.zeros((k, c), jnp.float32)
    for p_idx, ph in enumerate(_CT_PHASES):
        for t_idx, t in enumerate(_CT_TAPS):
            if t in _CT_PHASE_TAPS[ph]:
                khi, kwi = _CT_PHASE_TAPS[ph][t]
                w2 = w2.at[t_idx * cin:(t_idx + 1) * cin,
                           p_idx * cout:(p_idx + 1) * cout].set(w_iohw[:, :, khi, kwi])
    w2 = jnp.pad(w2, ((0, kp - k), (0, cp - c))).astype(jnp.bfloat16)
    return {"w": w2, "cout": cout,
            "gamma": gamma.astype(jnp.float32), "beta": beta.astype(jnp.float32)}


def prepare_params(p, *, n_blocks, n_down=2):
    L = {"c0": _prep_conv(p["c0_w"], p["c0_g"], p["c0_b"], None)}
    for i in range(n_down):
        L[f"d{i}"] = _prep_conv(p[f"d{i}_w"], p[f"d{i}_g"], p[f"d{i}_b"], None)
    for b in range(n_blocks):
        L[f"r{b}a"] = _prep_conv(p[f"r{b}_w1"], p[f"r{b}_g1"], p[f"r{b}_b1"], None)
        L[f"r{b}b"] = _prep_conv(p[f"r{b}_w2"], p[f"r{b}_g2"], p[f"r{b}_b2"], None)
    for i in range(n_down):
        L[f"u{i}"] = _prep_convT(p[f"u{i}_w"], p[f"u{i}_g"], p[f"u{i}_b"])
    L["cN"] = _prep_conv(p["cN_w"], None, None, p["cN_bias"])
    return L


# ---------------------------------------------------------------------------
# Synthetic parameters (PyTorch layouts) and forward pass
# ---------------------------------------------------------------------------
def build_params(key, input_nc, output_nc, ngf, n_blocks, n_down=2):
    keys = iter(jax.random.split(key, 8 + 4 * n_blocks + 4 * n_down))

    def nrm(shape, scale=0.02):
        return jax.random.normal(next(keys), shape, jnp.float32) * scale

    p = {}
    p["c0_w"] = nrm((ngf, input_nc, 7, 7))
    p["c0_g"] = jnp.ones((ngf,), jnp.float32)
    p["c0_b"] = jnp.zeros((ngf,), jnp.float32)
    for i in range(n_down):
        mult = 2 ** i
        co = ngf * mult * 2
        p[f"d{i}_w"] = nrm((co, ngf * mult, 3, 3))
        p[f"d{i}_g"] = jnp.ones((co,), jnp.float32)
        p[f"d{i}_b"] = jnp.zeros((co,), jnp.float32)
    dim = ngf * (2 ** n_down)
    for b in range(n_blocks):
        p[f"r{b}_w1"] = nrm((dim, dim, 3, 3))
        p[f"r{b}_g1"] = jnp.ones((dim,), jnp.float32)
        p[f"r{b}_b1"] = jnp.zeros((dim,), jnp.float32)
        p[f"r{b}_w2"] = nrm((dim, dim, 3, 3))
        p[f"r{b}_g2"] = jnp.ones((dim,), jnp.float32)
        p[f"r{b}_b2"] = jnp.zeros((dim,), jnp.float32)
    for i in range(n_down):
        mult = 2 ** (n_down - i)
        ci, co = ngf * mult, ngf * mult // 2
        p[f"u{i}_w"] = nrm((ci, co, 3, 3))            # ConvTranspose2d weight layout
        p[f"u{i}_g"] = jnp.ones((co,), jnp.float32)
        p[f"u{i}_b"] = jnp.zeros((co,), jnp.float32)
    p["cN_w"] = nrm((output_nc, ngf, 7, 7))
    p["cN_bias"] = nrm((output_nc,))                  # final conv keeps its default bias
    return p


def resnet_generator_forward(layers, x_nchw, *, n_blocks=2, n_down=2):
    # input NCHW (PyTorch convention) -> compute NHWC bf16 -> output NCHW f32
    x = jnp.transpose(x_nchw, (0, 2, 3, 1)).astype(jnp.bfloat16)

    # ReflectionPad2d(3) + Conv 7x7 + BN + ReLU
    x = conv_layer(x, layers["c0"], stride=1, pad=3, pad_mode="reflect", act="relu")

    # two stride-2 downsampling convs + BN + ReLU
    for i in range(n_down):
        x = conv_layer(x, layers[f"d{i}"], stride=2, pad=1, pad_mode="zero", act="relu")

    # ResnetBlocks (reflect pad, no dropout): x + BN(conv(ReLU(BN(conv(x)))))
    for b in range(n_blocks):
        h = conv_layer(x, layers[f"r{b}a"], stride=1, pad=1, pad_mode="reflect", act="relu")
        x = conv_layer(h, layers[f"r{b}b"], stride=1, pad=1, pad_mode="reflect",
                       act="none", residual=x)

    # two ConvTranspose2d upsamplings + BN + ReLU (merged 4-phase sub-pixel matmul)
    for i in range(n_down):
        x = conv_transpose_layer(x, layers[f"u{i}"])

    # ReflectionPad2d(3) + Conv 7x7 (with bias) + Tanh — fully fused into pass 1
    x = conv_layer(x, layers["cN"], stride=1, pad=3, pad_mode="reflect", act="tanh")

    return jnp.transpose(x, (0, 3, 1, 2)).astype(jnp.float32)


if __name__ == "__main__":
    key = jax.random.PRNGKey(0)
    kparam, kx = jax.random.split(key)

    # Small shapes consistent with the module: batch=2, input_nc=output_nc=3,
    # ngf=8, n_blocks=2, 16x16 spatial (two stride-2 downsamples -> 4x4 bottleneck).
    input_nc, output_nc, ngf, n_blocks = 3, 3, 8, 2
    params = build_params(kparam, input_nc, output_nc, ngf, n_blocks)
    layers = prepare_params(params, n_blocks=n_blocks)   # weight prep hoisted out of jit

    x = jax.random.normal(kx, (2, input_nc, 16, 16), jnp.float32)

    fwd = jax.jit(lambda inp: resnet_generator_forward(layers, inp, n_blocks=n_blocks))
    y = fwd(x)
    jax.block_until_ready(y)

    assert y.shape == (2, output_nc, 16, 16), y.shape
    assert bool(jnp.all(jnp.isfinite(y)))
    assert bool(jnp.all(jnp.abs(y) <= 1.0 + 1e-6))   # tanh output range sanity check
    print("KERNEL_OK")
</pallas_src>

<mosaic_0001>
module attributes {stable_mosaic.version = 11 : i64} {
  func.func @_mm_stats_kernel(%arg0: i32, %arg1: memref<512x256xbf16, #tpu.memory_space<vmem>>, %arg2: memref<256x128xbf16, #tpu.memory_space<vmem>>, %arg3: memref<512x128xf32, #tpu.memory_space<vmem>>, %arg4: memref<8x128xf32, #tpu.memory_space<vmem>>) attributes {dimension_semantics = [#tpu.dimension_semantics<parallel>], iteration_bounds = array<i64: 1>, scalar_prefetch = 0 : i64, scratch_operands = 0 : i64, tpu.core_type = #tpu.core_type<tc>, window_params = [{transform_indices = @transform_0, window_bounds = array<i64: 512, 256>}, {pipeline_mode = #tpu.pipeline_mode<synchronous>, transform_indices = @transform_1, window_bounds = array<i64: 256, 128>}, {transform_indices = @transform_2, window_bounds = array<i64: 512, 128>}, {transform_indices = @transform_3, window_bounds = array<i64: 8, 128>}]} {
    %c0 = arith.constant 0 : index
    %c0_0 = arith.constant 0 : index
    %0 = vector.load %arg1[%c0, %c0_0] : memref<512x256xbf16, #tpu.memory_space<vmem>>, vector<512x256xbf16>
    %c0_1 = arith.constant 0 : index
    %c0_2 = arith.constant 0 : index
    %1 = vector.load %arg2[%c0_1, %c0_2] : memref<256x128xbf16, #tpu.memory_space<vmem>>, vector<256x128xbf16>
    %cst = arith.constant dense<0.000000e+00> : vector<512x128xf32>
    %2 = tpu.matmul %0, %1, %cst {dimension_numbers = #tpu.dot_dimension_numbers<[1], [0], [0], [1], [0, 0, 1, 1], [], []>} : vector<512x256xbf16>, vector<256x128xbf16>, vector<512x128xf32> -> vector<512x128xf32>
    %c0_3 = arith.constant 0 : index
    %c0_4 = arith.constant 0 : index
    %3 = vector.load %arg3[%c0_3, %c0_4] : memref<512x128xf32, #tpu.memory_space<vmem>>, vector<512x128xf32>
    tpu.vector_store %arg3[%c0_3, %c0_4], %2 {strides = array<i32>} : memref<512x128xf32, #tpu.memory_space<vmem>>, vector<512x128xf32>,
    %cst_5 = arith.constant dense<0.000000e+00> : vector<128xf32>
    %4 = vector.multi_reduction <add>, %2, %cst_5 [0] : vector<512x128xf32> to vector<128xf32>
    %5 = vector.shape_cast %4 : vector<128xf32> to vector<1x128xf32>
    %6 = arith.mulf %2, %2 : vector<512x128xf32>
    %cst_6 = arith.constant dense<0.000000e+00> : vector<128xf32>
    %7 = vector.multi_reduction <add>, %6, %cst_6 [0] : vector<512x128xf32> to vector<128xf32>
    %8 = vector.shape_cast %7 : vector<128xf32> to vector<1x128xf32>
    %9 = tpu.iota {dimensions = array<i32: 0>} : vector<8x128xi32>
    %c0_i32 = arith.constant 0 : i32
    %10 = vector.broadcast %c0_i32 : i32 to vector<8x128xi32>
    %11 = arith.cmpi eq, %9, %10 : vector<8x128xi32>
    %c1_i32 = arith.constant 1 : i32
    %12 = vector.broadcast %c1_i32 : i32 to vector<8x128xi32>
    %13 = arith.cmpi eq, %9, %12 : vector<8x128xi32>
    %cst_7 = arith.constant 0.000000e+00 : f32
    %14 = vector.shape_cast %8 : vector<1x128xf32> to vector<1x128xf32>
    %15 = vector.broadcast %14 : vector<1x128xf32> to vector<8x128xf32>
    %16 = vector.broadcast %cst_7 : f32 to vector<8x128xf32>
    %17 = arith.select %13, %15, %16 : vector<8x128xi1>, vector<8x128xf32>
    %18 = vector.shape_cast %5 : vector<1x128xf32> to vector<1x128xf32>
    %19 = vector.broadcast %18 : vector<1x128xf32> to vector<8x128xf32>
    %20 = arith.select %11, %19, %17 : vector<8x128xi1>, vector<8x128xf32>
    %c0_8 = arith.constant 0 : index
    %c0_9 = arith.constant 0 : index
    %21 = vector.load %arg4[%c0_8, %c0_9] : memref<8x128xf32, #tpu.memory_space<vmem>>, vector<8x128xf32>
    tpu.vector_store %arg4[%c0_8, %c0_9], %20 {strides = array<i32>} : memref<8x128xf32, #tpu.memory_space<vmem>>, vector<8x128xf32>,
    return
  }
  func.func @transform_0(%arg0: i32) -> (i32, i32) {
    %c0_i32 = arith.constant 0 : i32
    %c0_i32_0 = arith.constant 0 : i32
    return %arg0, %c0_i32 : i32, i32
  }
  func.func @transform_1(%arg0: i32) -> (i32, i32) {
    %c0_i32 = arith.constant 0 : i32
    %c0_i32_0 = arith.constant 0 : i32
    %c0_i32_1 = arith.constant 0 : i32
    return %c0_i32, %c0_i32_0 : i32, i32
  }
  func.func @transform_2(%arg0: i32) -> (i32, i32) {
    %c0_i32 = arith.constant 0 : i32
    %c0_i32_0 = arith.constant 0 : i32
    return %arg0, %c0_i32 : i32, i32
  }
  func.func @transform_3(%arg0: i32) -> (i32, i32) {
    %c0_i32 = arith.constant 0 : i32
    %c0_i32_0 = arith.constant 0 : i32
    return %arg0, %c0_i32 : i32, i32
  }
}

module attributes {stable_mosaic.version = 11 : i64} {
  func.func @kernel(%arg0: i32, %arg1: memref<512x128xf32, #tpu.memory_space<vmem>>, %arg2: memref<1x128xf32, #tpu.memory_space<vmem>>, %arg3: memref<1x128xf32, #tpu.memory_space<vmem>>, %arg4: memref<512x128xbf16, #tpu.memory_space<vmem>>) attributes {dimension_semantics = [#tpu.dimension_semantics<parallel>], iteration_bounds = array<i64: 1>, scalar_prefetch = 0 : i64, scratch_operands = 0 : i64, tpu.core_type = #tpu.core_type<tc>, window_params = [{transform_indices = @transform_0, window_bounds = array<i64: 512, 128>}, {pipeline_mode = #tpu.pipeline_mode<synchronous>, transform_indices = @transform_1, window_bounds = array<i64: 1, 128>}, {pipeline_mode = #tpu.pipeline_mode<synchronous>, transform_indices = @transform_2, window_bounds = array<i64: 1, 128>}, {transform_indices = @transform_3, window_bounds = array<i64: 512, 128>}]} {
    %c0 = arith.constant 0 : index
    %c0_0 = arith.constant 0 : index
    %0 = vector.load %arg1[%c0, %c0_0] : memref<512x128xf32, #tpu.memory_space<vmem>>, vector<512x128xf32>
    %c0_1 = arith.constant 0 : index
    %c0_2 = arith.constant 0 : index
    %1 = vector.load %arg2[%c0_1, %c0_2] : memref<1x128xf32, #tpu.memory_space<vmem>>, vector<1x128xf32>
    %2 = vector.broadcast %1 : vector<1x128xf32> to vector<512x128xf32>
    %3 = arith.mulf %0, %2 : vector<512x128xf32>
    %c0_3 = arith.constant 0 : index
    %c0_4 = arith.constant 0 : index
    %4 = vector.load %arg3[%c0_3, %c0_4] : memref<1x128xf32, #tpu.memory_space<vmem>>, vector<1x128xf32>
    %5 = vector.broadcast %4 : vector<1x128xf32> to vector<512x128xf32>
    %6 = arith.addf %3, %5 : vector<512x128xf32>
    %cst = arith.constant 0.000000e+00 : f32
    %7 = vector.broadcast %cst : f32 to vector<512x128xf32>
    %8 = arith.maximumf %6, %7 : vector<512x128xf32>
    %9 = arith.truncf %8 : vector<512x128xf32> to vector<512x128xbf16>
    %c0_5 = arith.constant 0 : index
    %c0_6 = arith.constant 0 : index
    %10 = vector.load %arg4[%c0_5, %c0_6] : memref<512x128xbf16, #tpu.memory_space<vmem>>, vector<512x128xbf16>
    tpu.vector_store %arg4[%c0_5, %c0_6], %9 {strides = array<i32>} : memref<512x128xbf16, #tpu.memory_space<vmem>>, vector<512x128xbf16>,
    return
  }
  func.func @transform_0(%arg0: i32) -> (i32, i32) {
    %c0_i32 = arith.constant 0 : i32
    %c0_i32_0 = arith.constant 0 : i32
    return %arg0, %c0_i32 : i32, i32
  }
  func.func @transform_1(%arg0: i32) -> (i32, i32) {
    %c0_i32 = arith.constant 0 : i32
    %c0_i32_0 = arith.constant 0 : i32
    %c0_i32_1 = arith.constant 0 : i32
    return %c0_i32, %c0_i32_0 : i32, i32
  }
  func.func @transform_2(%arg0: i32) -> (i32, i32) {
    %c0_i32 = arith.constant 0 : i32
    %c0_i32_0 = arith.constant 0 : i32
    %c0_i32_1 = arith.constant 0 : i32
    return %c0_i32, %c0_i32_0 : i32, i32
  }
  func.func @transform_3(%arg0: i32) -> (i32, i32) {
    %c0_i32 = arith.constant 0 : i32
    %c0_i32_0 = arith.constant 0 : i32
    return %arg0, %c0_i32 : i32, i32
  }
}

module attributes {stable_mosaic.version = 11 : i64} {
  func.func @_mm_stats_kernel(%arg0: i32, %arg1: memref<128x128xbf16, #tpu.memory_space<vmem>>, %arg2: memref<128x128xbf16, #tpu.memory_space<vmem>>, %arg3: memref<128x128xf32, #tpu.memory_space<vmem>>, %arg4: memref<8x128xf32, #tpu.memory_space<vmem>>) attributes {dimension_semantics = [#tpu.dimension_semantics<parallel>], iteration_bounds = array<i64: 1>, scalar_prefetch = 0 : i64, scratch_operands = 0 : i64, tpu.core_type = #tpu.core_type<tc>, window_params = [{transform_indices = @transform_0, window_bounds = array<i64: 128, 128>}, {pipeline_mode = #tpu.pipeline_mode<synchronous>, transform_indices = @transform_1, window_bounds = array<i64: 128, 128>}, {transform_indices = @transform_2, window_bounds = array<i64: 128, 128>}, {transform_indices = @transform_3, window_bounds = array<i64: 8, 128>}]} {
    %c0 = arith.constant 0 : index
    %c0_0 = arith.constant 0 : index
    %0 = vector.load %arg1[%c0, %c0_0] : memref<128x128xbf16, #tpu.memory_space<vmem>>, vector<128x128xbf16>
    %c0_1 = arith.constant 0 : index
    %c0_2 = arith.constant 0 : index
    %1 = vector.load %arg2[%c0_1, %c0_2] : memref<128x128xbf16, #tpu.memory_space<vmem>>, vector<128x128xbf16>
    %cst = arith.constant dense<0.000000e+00> : vector<128x128xf32>
    %2 = tpu.matmul %0, %1, %cst {dimension_numbers = #tpu.dot_dimension_numbers<[1], [0], [0], [1], [0, 0, 1, 1], [], []>} : vector<128x128xbf16>, vector<128x128xbf16>, vector<128x128xf32> -> vector<128x128xf32>
    %c0_3 = arith.constant 0 : index
    %c0_4 = arith.constant 0 : index
    %3 = vector.load %arg3[%c0_3, %c0_4] : memref<128x128xf32, #tpu.memory_space<vmem>>, vector<128x128xf32>
    tpu.vector_store %arg3[%c0_3, %c0_4], %2 {strides = array<i32>} : memref<128x128xf32, #tpu.memory_space<vmem>>, vector<128x128xf32>,
    %cst_5 = arith.constant dense<0.000000e+00> : vector<128xf32>
    %4 = vector.multi_reduction <add>, %2, %cst_5 [0] : vector<128x128xf32> to vector<128xf32>
    %5 = vector.shape_cast %4 : vector<128xf32> to vector<1x128xf32>
    %6 = arith.mulf %2, %2 : vector<128x128xf32>
    %cst_6 = arith.constant dense<0.000000e+00> : vector<128xf32>
    %7 = vector.multi_reduction <add>, %6, %cst_6 [0] : vector<128x128xf32> to vector<128xf32>
    %8 = vector.shape_cast %7 : vector<128xf32> to vector<1x128xf32>
    %9 = tpu.iota {dimensions = array<i32: 0>} : vector<8x128xi32>
    %c0_i32 = arith.constant 0 : i32
    %10 = vector.broadcast %c0_i32 : i32 to vector<8x128xi32>
    %11 = arith.cmpi eq, %9, %10 : vector<8x128xi32>
    %c1_i32 = arith.constant 1 : i32
    %12 = vector.broadcast %c1_i32 : i32 to vector<8x128xi32>
    %13 = arith.cmpi eq, %9, %12 : vector<8x128xi32>
    %cst_7 = arith.constant 0.000000e+00 : f32
    %14 = vector.shape_cast %8 : vector<1x128xf32> to vector<1x128xf32>
    %15 = vector.broadcast %14 : vector<1x128xf32> to vector<8x128xf32>
    %16 = vector.broadcast %cst_7 : f32 to vector<8x128xf32>
    %17 = arith.select %13, %15, %16 : vector<8x128xi1>, vector<8x128xf32>
    %18 = vector.shape_cast %5 : vector<1x128xf32> to vector<1x128xf32>
    %19 = vector.broadcast %18 : vector<1x128xf32> to vector<8x128xf32>
    %20 = arith.select %11, %19, %17 : vector<8x128xi1>, vector<8x128xf32>
    %c0_8 = arith.constant 0 : index
    %c0_9 = arith.constant 0 : index
    %21 = vector.load %arg4[%c0_8, %c0_9] : memref<8x128xf32, #tpu.memory_space<vmem>>, vector<8x128xf32>
    tpu.vector_store %arg4[%c0_8, %c0_9], %20 {strides = array<i32>} : memref<8x128xf32, #tpu.memory_space<vmem>>, vector<8x128xf32>,
    return
  }
  func.func @transform_0(%arg0: i32) -> (i32, i32) {
    %c0_i32 = arith.constant 0 : i32
    %c0_i32_0 = arith.constant 0 : i32
    return %arg0, %c0_i32 : i32, i32
  }
  func.func @transform_1(%arg0: i32) -> (i32, i32) {
    %c0_i32 = arith.constant 0 : i32
    %c0_i32_0 = arith.constant 0 : i32
    %c0_i32_1 = arith.constant 0 : i32
    return %c0_i32, %c0_i32_0 : i32, i32
  }
  func.func @transform_2(%arg0: i32) -> (i32, i32) {
    %c0_i32 = arith.constant 0 : i32
    %c0_i32_0 = arith.constant 0 : i32
    return %arg0, %c0_i32 : i32, i32
  }
  func.func @transform_3(%arg0: i32) -> (i32, i32) {
    %c0_i32 = arith.constant 0 : i32
    %c0_i32_0 = arith.constant 0 : i32
    return %arg0, %c0_i32 : i32, i32
  }
}

module attributes {stable_mosaic.version = 11 : i64} {
  func.func @kernel(%arg0: i32, %arg1: memref<128x128xf32, #tpu.memory_space<vmem>>, %arg2: memref<1x128xf32, #tpu.memory_space<vmem>>, %arg3: memref<1x128xf32, #tpu.memory_space<vmem>>, %arg4: memref<128x128xbf16, #tpu.memory_space<vmem>>) attributes {dimension_semantics = [#tpu.dimension_semantics<parallel>], iteration_bounds = array<i64: 1>, scalar_prefetch = 0 : i64, scratch_operands = 0 : i64, tpu.core_type = #tpu.core_type<tc>, window_params = [{transform_indices = @transform_0, window_bounds = array<i64: 128, 128>}, {pipeline_mode = #tpu.pipeline_mode<synchronous>, transform_indices = @transform_1, window_bounds = array<i64: 1, 128>}, {pipeline_mode = #tpu.pipeline_mode<synchronous>, transform_indices = @transform_2, window_bounds = array<i64: 1, 128>}, {transform_indices = @transform_3, window_bounds = array<i64: 128, 128>}]} {
    %c0 = arith.constant 0 : index
    %c0_0 = arith.constant 0 : index
    %0 = vector.load %arg1[%c0, %c0_0] : memref<128x128xf32, #tpu.memory_space<vmem>>, vector<128x128xf32>
    %c0_1 = arith.constant 0 : index
    %c0_2 = arith.constant 0 : index
    %1 = vector.load %arg2[%c0_1, %c0_2] : memref<1x128xf32, #tpu.memory_space<vmem>>, vector<1x128xf32>
    %2 = vector.broadcast %1 : vector<1x128xf32> to vector<128x128xf32>
    %3 = arith.mulf %0, %2 : vector<128x128xf32>
    %c0_3 = arith.constant 0 : index
    %c0_4 = arith.constant 0 : index
    %4 = vector.load %arg3[%c0_3, %c0_4] : memref<1x128xf32, #tpu.memory_space<vmem>>, vector<1x128xf32>
    %5 = vector.broadcast %4 : vector<1x128xf32> to vector<128x128xf32>
    %6 = arith.addf %3, %5 : vector<128x128xf32>
    %cst = arith.constant 0.000000e+00 : f32
    %7 = vector.broadcast %cst : f32 to vector<128x128xf32>
    %8 = arith.maximumf %6, %7 : vector<128x128xf32>
    %9 = arith.truncf %8 : vector<128x128xf32> to vector<128x128xbf16>
    %c0_5 = arith.constant 0 : index
    %c0_6 = arith.constant 0 : index
    %10 = vector.load %arg4[%c0_5, %c0_6] : memref<128x128xbf16, #tpu.memory_space<vmem>>, vector<128x128xbf16>
    tpu.vector_store %arg4[%c0_5, %c0_6], %9 {strides = array<i32>} : memref<128x128xbf16, #tpu.memory_space<vmem>>, vector<128x128xbf16>,
    return
  }
  func.func @transform_0(%arg0: i32) -> (i32, i32) {
    %c0_i32 = arith.constant 0 : i32
    %c0_i32_0 = arith.constant 0 : i32
    return %arg0, %c0_i32 : i32, i32
  }
  func.func @transform_1(%arg0: i32) -> (i32, i32) {
    %c0_i32 = arith.constant 0 : i32
    %c0_i32_0 = arith.constant 0 : i32
    %c0_i32_1 = arith.constant 0 : i32
    return %c0_i32, %c0_i32_0 : i32, i32
  }
  func.func @transform_2(%arg0: i32) -> (i32, i32) {
    %c0_i32 = arith.constant 0 : i32
    %c0_i32_0 = arith.constant 0 : i32
    %c0_i32_1 = arith.constant 0 : i32
    return %c0_i32, %c0_i32_0 : i32, i32
  }
  func.func @transform_3(%arg0: i32) -> (i32, i32) {
    %c0_i32 = arith.constant 0 : i32
    %c0_i32_0 = arith.constant 0 : i32
    return %arg0, %c0_i32 : i32, i32
  }
}

module attributes {stable_mosaic.version = 11 : i64} {
  func.func @kernel(%arg0: i32, %arg1: memref<32x128xf32, #tpu.memory_space<vmem>>, %arg2: memref<1x128xf32, #tpu.memory_space<vmem>>, %arg3: memref<1x128xf32, #tpu.memory_space<vmem>>, %arg4: memref<32x128xbf16, #tpu.memory_space<vmem>>) attributes {dimension_semantics = [#tpu.dimension_semantics<parallel>], iteration_bounds = array<i64: 1>, scalar_prefetch = 0 : i64, scratch_operands = 0 : i64, tpu.core_type = #tpu.core_type<tc>, window_params = [{transform_indices = @transform_0, window_bounds = array<i64: 32, 128>}, {pipeline_mode = #tpu.pipeline_mode<synchronous>, transform_indices = @transform_1, window_bounds = array<i64: 1, 128>}, {pipeline_mode = #tpu.pipeline_mode<synchronous>, transform_indices = @transform_2, window_bounds = array<i64: 1, 128>}, {transform_indices = @transform_3, window_bounds = array<i64: 32, 128>}]} {
    %c0 = arith.constant 0 : index
    %c0_0 = arith.constant 0 : index
    %0 = vector.load %arg1[%c0, %c0_0] : memref<32x128xf32, #tpu.memory_space<vmem>>, vector<32x128xf32>
    %c0_1 = arith.constant 0 : index
    %c0_2 = arith.constant 0 : index
    %1 = vector.load %arg2[%c0_1, %c0_2] : memref<1x128xf32, #tpu.memory_space<vmem>>, vector<1x128xf32>
    %2 = vector.broadcast %1 : vector<1x128xf32> to vector<32x128xf32>
    %3 = arith.mulf %0, %2 : vector<32x128xf32>
    %c0_3 = arith.constant 0 : index
    %c0_4 = arith.constant 0 : index
    %4 = vector.load %arg3[%c0_3, %c0_4] : memref<1x128xf32, #tpu.memory_space<vmem>>, vector<1x128xf32>
    %5 = vector.broadcast %4 : vector<1x128xf32> to vector<32x128xf32>
    %6 = arith.addf %3, %5 : vector<32x128xf32>
    %cst = arith.constant 0.000000e+00 : f32
    %7 = vector.broadcast %cst : f32 to vector<32x128xf32>
    %8 = arith.maximumf %6, %7 : vector<32x128xf32>
    %9 = arith.truncf %8 : vector<32x128xf32> to vector<32x128xbf16>
    %c0_5 = arith.constant 0 : index
    %c0_6 = arith.constant 0 : index
    %10 = vector.load %arg4[%c0_5, %c0_6] : memref<32x128xbf16, #tpu.memory_space<vmem>>, vector<32x128xbf16>
    tpu.vector_store %arg4[%c0_5, %c0_6], %9 {strides = array<i32>} : memref<32x128xbf16, #tpu.memory_space<vmem>>, vector<32x128xbf16>,
    return
  }
  func.func @transform_0(%arg0: i32) -> (i32, i32) {
    %c0_i32 = arith.constant 0 : i32
    %c0_i32_0 = arith.constant 0 : i32
    return %arg0, %c0_i32 : i32, i32
  }
  func.func @transform_1(%arg0: i32) -> (i32, i32) {
    %c0_i32 = arith.constant 0 : i32
    %c0_i32_0 = arith.constant 0 : i32
    %c0_i32_1 = arith.constant 0 : i32
    return %c0_i32, %c0_i32_0 : i32, i32
  }
  func.func @transform_2(%arg0: i32) -> (i32, i32) {
    %c0_i32 = arith.constant 0 : i32
    %c0_i32_0 = arith.constant 0 : i32
    %c0_i32_1 = arith.constant 0 : i32
    return %c0_i32, %c0_i32_0 : i32, i32
  }
  func.func @transform_3(%arg0: i32) -> (i32, i32) {
    %c0_i32 = arith.constant 0 : i32
    %c0_i32_0 = arith.constant 0 : i32
    return %arg0, %c0_i32 : i32, i32
  }
}

module attributes {stable_mosaic.version = 11 : i64} {
  func.func @_mm_stats_kernel(%arg0: i32, %arg1: memref<32x256xbf16, #tpu.memory_space<vmem>>, %arg2: memref<256x128xbf16, #tpu.memory_space<vmem>>, %arg3: memref<32x128xf32, #tpu.memory_space<vmem>>, %arg4: memref<8x128xf32, #tpu.memory_space<vmem>>) attributes {dimension_semantics = [#tpu.dimension_semantics<parallel>], iteration_bounds = array<i64: 1>, scalar_prefetch = 0 : i64, scratch_operands = 0 : i64, tpu.core_type = #tpu.core_type<tc>, window_params = [{transform_indices = @transform_0, window_bounds = array<i64: 32, 256>}, {pipeline_mode = #tpu.pipeline_mode<synchronous>, transform_indices = @transform_1, window_bounds = array<i64: 256, 128>}, {transform_indices = @transform_2, window_bounds = array<i64: 32, 128>}, {transform_indices = @transform_3, window_bounds = array<i64: 8, 128>}]} {
    %c0 = arith.constant 0 : index
    %c0_0 = arith.constant 0 : index
    %0 = vector.load %arg1[%c0, %c0_0] : memref<32x256xbf16, #tpu.memory_space<vmem>>, vector<32x256xbf16>
    %c0_1 = arith.constant 0 : index
    %c0_2 = arith.constant 0 : index
    %1 = vector.load %arg2[%c0_1, %c0_2] : memref<256x128xbf16, #tpu.memory_space<vmem>>, vector<256x128xbf16>
    %cst = arith.constant dense<0.000000e+00> : vector<32x128xf32>
    %2 = tpu.matmul %0, %1, %cst {dimension_numbers = #tpu.dot_dimension_numbers<[1], [0], [0], [1], [0, 0, 1, 1], [], []>} : vector<32x256xbf16>, vector<256x128xbf16>, vector<32x128xf32> -> vector<32x128xf32>
    %c0_3 = arith.constant 0 : index
    %c0_4 = arith.constant 0 : index
    %3 = vector.load %arg3[%c0_3, %c0_4] : memref<32x128xf32, #tpu.memory_space<vmem>>, vector<32x128xf32>
    tpu.vector_store %arg3[%c0_3, %c0_4], %2 {strides = array<i32>} : memref<32x128xf32, #tpu.memory_space<vmem>>, vector<32x128xf32>,
    %cst_5 = arith.constant dense<0.000000e+00> : vector<128xf32>
    %4 = vector.multi_reduction <add>, %2, %cst_5 [0] : vector<32x128xf32> to vector<128xf32>
    %5 = vector.shape_cast %4 : vector<128xf32> to vector<1x128xf32>
    %6 = arith.mulf %2, %2 : vector<32x128xf32>
    %cst_6 = arith.constant dense<0.000000e+00> : vector<128xf32>
    %7 = vector.multi_reduction <add>, %6, %cst_6 [0] : vector<32x128xf32> to vector<128xf32>
    %8 = vector.shape_cast %7 : vector<128xf32> to vector<1x128xf32>
    %9 = tpu.iota {dimensions = array<i32: 0>} : vector<8x128xi32>
    %c0_i32 = arith.constant 0 : i32
    %10 = vector.broadcast %c0_i32 : i32 to vector<8x128xi32>
    %11 = arith.cmpi eq, %9, %10 : vector<8x128xi32>
    %c1_i32 = arith.constant 1 : i32
    %12 = vector.broadcast %c1_i32 : i32 to vector<8x128xi32>
    %13 = arith.cmpi eq, %9, %12 : vector<8x128xi32>
    %cst_7 = arith.constant 0.000000e+00 : f32
    %14 = vector.shape_cast %8 : vector<1x128xf32> to vector<1x128xf32>
    %15 = vector.broadcast %14 : vector<1x128xf32> to vector<8x128xf32>
    %16 = vector.broadcast %cst_7 : f32 to vector<8x128xf32>
    %17 = arith.select %13, %15, %16 : vector<8x128xi1>, vector<8x128xf32>
    %18 = vector.shape_cast %5 : vector<1x128xf32> to vector<1x128xf32>
    %19 = vector.broadcast %18 : vector<1x128xf32> to vector<8x128xf32>
    %20 = arith.select %11, %19, %17 : vector<8x128xi1>, vector<8x128xf32>
    %c0_8 = arith.constant 0 : index
    %c0_9 = arith.constant 0 : index
    %21 = vector.load %arg4[%c0_8, %c0_9] : memref<8x128xf32, #tpu.memory_space<vmem>>, vector<8x128xf32>
    tpu.vector_store %arg4[%c0_8, %c0_9], %20 {strides = array<i32>} : memref<8x128xf32, #tpu.memory_space<vmem>>, vector<8x128xf32>,
    return
  }
  func.func @transform_0(%arg0: i32) -> (i32, i32) {
    %c0_i32 = arith.constant 0 : i32
    %c0_i32_0 = arith.constant 0 : i32
    return %arg0, %c0_i32 : i32, i32
  }
  func.func @transform_1(%arg0: i32) -> (i32, i32) {
    %c0_i32 = arith.constant 0 : i32
    %c0_i32_0 = arith.constant 0 : i32
    %c0_i32_1 = arith.constant 0 : i32
    return %c0_i32, %c0_i32_0 : i32, i32
  }
  func.func @transform_2(%arg0: i32) -> (i32, i32) {
    %c0_i32 = arith.constant 0 : i32
    %c0_i32_0 = arith.constant 0 : i32
    return %arg0, %c0_i32 : i32, i32
  }
  func.func @transform_3(%arg0: i32) -> (i32, i32) {
    %c0_i32 = arith.constant 0 : i32
    %c0_i32_0 = arith.constant 0 : i32
    return %arg0, %c0_i32 : i32, i32
  }
}

module attributes {stable_mosaic.version = 11 : i64} {
  func.func @kernel(%arg0: i32, %arg1: memref<32x128xf32, #tpu.memory_space<vmem>>, %arg2: memref<1x128xf32, #tpu.memory_space<vmem>>, %arg3: memref<1x128xf32, #tpu.memory_space<vmem>>, %arg4: memref<32x128xbf16, #tpu.memory_space<vmem>>, %arg5: memref<32x128xbf16, #tpu.memory_space<vmem>>) attributes {dimension_semantics = [#tpu.dimension_semantics<parallel>], iteration_bounds = array<i64: 1>, scalar_prefetch = 0 : i64, scratch_operands = 0 : i64, tpu.core_type = #tpu.core_type<tc>, window_params = [{transform_indices = @transform_0, window_bounds = array<i64: 32, 128>}, {pipeline_mode = #tpu.pipeline_mode<synchronous>, transform_indices = @transform_1, window_bounds = array<i64: 1, 128>}, {pipeline_mode = #tpu.pipeline_mode<synchronous>, transform_indices = @transform_2, window_bounds = array<i64: 1, 128>}, {transform_indices = @transform_3, window_bounds = array<i64: 32, 128>}, {transform_indices = @transform_4, window_bounds = array<i64: 32, 128>}]} {
    %c0 = arith.constant 0 : index
    %c0_0 = arith.constant 0 : index
    %0 = vector.load %arg1[%c0, %c0_0] : memref<32x128xf32, #tpu.memory_space<vmem>>, vector<32x128xf32>
    %c0_1 = arith.constant 0 : index
    %c0_2 = arith.constant 0 : index
    %1 = vector.load %arg2[%c0_1, %c0_2] : memref<1x128xf32, #tpu.memory_space<vmem>>, vector<1x128xf32>
    %2 = vector.broadcast %1 : vector<1x128xf32> to vector<32x128xf32>
    %3 = arith.mulf %0, %2 : vector<32x128xf32>
    %c0_3 = arith.constant 0 : index
    %c0_4 = arith.constant 0 : index
    %4 = vector.load %arg3[%c0_3, %c0_4] : memref<1x128xf32, #tpu.memory_space<vmem>>, vector<1x128xf32>
    %5 = vector.broadcast %4 : vector<1x128xf32> to vector<32x128xf32>
    %6 = arith.addf %3, %5 : vector<32x128xf32>
    %c0_5 = arith.constant 0 : index
    %c0_6 = arith.constant 0 : index
    %7 = vector.load %arg4[%c0_5, %c0_6] : memref<32x128xbf16, #tpu.memory_space<vmem>>, vector<32x128xbf16>
    %8 = arith.extf %7 : vector<32x128xbf16> to vector<32x128xf32>
    %9 = arith.addf %6, %8 : vector<32x128xf32>
    %10 = arith.truncf %9 : vector<32x128xf32> to vector<32x128xbf16>
    %c0_7 = arith.constant 0 : index
    %c0_8 = arith.constant 0 : index
    %11 = vector.load %arg5[%c0_7, %c0_8] : memref<32x128xbf16, #tpu.memory_space<vmem>>, vector<32x128xbf16>
    tpu.vector_store %arg5[%c0_7, %c0_8], %10 {strides = array<i32>} : memref<32x128xbf16, #tpu.memory_space<vmem>>, vector<32x128xbf16>,
    return
  }
  func.func @transform_0(%arg0: i32) -> (i32, i32) {
    %c0_i32 = arith.constant 0 : i32
    %c0_i32_0 = arith.constant 0 : i32
    return %arg0, %c0_i32 : i32, i32
  }
  func.func @transform_1(%arg0: i32) -> (i32, i32) {
    %c0_i32 = arith.constant 0 : i32
    %c0_i32_0 = arith.constant 0 : i32
    %c0_i32_1 = arith.constant 0 : i32
    return %c0_i32, %c0_i32_0 : i32, i32
  }
  func.func @transform_2(%arg0: i32) -> (i32, i32) {
    %c0_i32 = arith.constant 0 : i32
    %c0_i32_0 = arith.constant 0 : i32
    %c0_i32_1 = arith.constant 0 : i32
    return %c0_i32, %c0_i32_0 : i32, i32
  }
  func.func @transform_3(%arg0: i32) -> (i32, i32) {
    %c0_i32 = arith.constant 0 : i32
    %c0_i32_0 = arith.constant 0 : i32
    return %arg0, %c0_i32 : i32, i32
  }
  func.func @transform_4(%arg0: i32) -> (i32, i32) {
    %c0_i32 = arith.constant 0 : i32
    %c0_i32_0 = arith.constant 0 : i32
    return %arg0, %c0_i32 : i32, i32
  }
}

module attributes {stable_mosaic.version = 11 : i64} {
  func.func @_mm_stats_kernel(%arg0: i32, %arg1: memref<32x384xbf16, #tpu.memory_space<vmem>>, %arg2: memref<384x128xbf16, #tpu.memory_space<vmem>>, %arg3: memref<32x128xf32, #tpu.memory_space<vmem>>, %arg4: memref<8x128xf32, #tpu.memory_space<vmem>>) attributes {dimension_semantics = [#tpu.dimension_semantics<parallel>], iteration_bounds = array<i64: 1>, scalar_prefetch = 0 : i64, scratch_operands = 0 : i64, tpu.core_type = #tpu.core_type<tc>, window_params = [{transform_indices = @transform_0, window_bounds = array<i64: 32, 384>}, {pipeline_mode = #tpu.pipeline_mode<synchronous>, transform_indices = @transform_1, window_bounds = array<i64: 384, 128>}, {transform_indices = @transform_2, window_bounds = array<i64: 32, 128>}, {transform_indices = @transform_3, window_bounds = array<i64: 8, 128>}]} {
    %c0 = arith.constant 0 : index
    %c0_0 = arith.constant 0 : index
    %0 = vector.load %arg1[%c0, %c0_0] : memref<32x384xbf16, #tpu.memory_space<vmem>>, vector<32x384xbf16>
    %c0_1 = arith.constant 0 : index
    %c0_2 = arith.constant 0 : index
    %1 = vector.load %arg2[%c0_1, %c0_2] : memref<384x128xbf16, #tpu.memory_space<vmem>>, vector<384x128xbf16>
    %cst = arith.constant dense<0.000000e+00> : vector<32x128xf32>
    %2 = tpu.matmul %0, %1, %cst {dimension_numbers = #tpu.dot_dimension_numbers<[1], [0], [0], [1], [0, 0, 1, 1], [], []>} : vector<32x384xbf16>, vector<384x128xbf16>, vector<32x128xf32> -> vector<32x128xf32>
    %c0_3 = arith.constant 0 : index
    %c0_4 = arith.constant 0 : index
    %3 = vector.load %arg3[%c0_3, %c0_4] : memref<32x128xf32, #tpu.memory_space<vmem>>, vector<32x128xf32>
    tpu.vector_store %arg3[%c0_3, %c0_4], %2 {strides = array<i32>} : memref<32x128xf32, #tpu.memory_space<vmem>>, vector<32x128xf32>,
    %cst_5 = arith.constant dense<0.000000e+00> : vector<128xf32>
    %4 = vector.multi_reduction <add>, %2, %cst_5 [0] : vector<32x128xf32> to vector<128xf32>
    %5 = vector.shape_cast %4 : vector<128xf32> to vector<1x128xf32>
    %6 = arith.mulf %2, %2 : vector<32x128xf32>
    %cst_6 = arith.constant dense<0.000000e+00> : vector<128xf32>
    %7 = vector.multi_reduction <add>, %6, %cst_6 [0] : vector<32x128xf32> to vector<128xf32>
    %8 = vector.shape_cast %7 : vector<128xf32> to vector<1x128xf32>
    %9 = tpu.iota {dimensions = array<i32: 0>} : vector<8x128xi32>
    %c0_i32 = arith.constant 0 : i32
    %10 = vector.broadcast %c0_i32 : i32 to vector<8x128xi32>
    %11 = arith.cmpi eq, %9, %10 : vector<8x128xi32>
    %c1_i32 = arith.constant 1 : i32
    %12 = vector.broadcast %c1_i32 : i32 to vector<8x128xi32>
    %13 = arith.cmpi eq, %9, %12 : vector<8x128xi32>
    %cst_7 = arith.constant 0.000000e+00 : f32
    %14 = vector.shape_cast %8 : vector<1x128xf32> to vector<1x128xf32>
    %15 = vector.broadcast %14 : vector<1x128xf32> to vector<8x128xf32>
    %16 = vector.broadcast %cst_7 : f32 to vector<8x128xf32>
    %17 = arith.select %13, %15, %16 : vector<8x128xi1>, vector<8x128xf32>
    %18 = vector.shape_cast %5 : vector<1x128xf32> to vector<1x128xf32>
    %19 = vector.broadcast %18 : vector<1x128xf32> to vector<8x128xf32>
    %20 = arith.select %11, %19, %17 : vector<8x128xi1>, vector<8x128xf32>
    %c0_8 = arith.constant 0 : index
    %c0_9 = arith.constant 0 : index
    %21 = vector.load %arg4[%c0_8, %c0_9] : memref<8x128xf32, #tpu.memory_space<vmem>>, vector<8x128xf32>
    tpu.vector_store %arg4[%c0_8, %c0_9], %20 {strides = array<i32>} : memref<8x128xf32, #tpu.memory_space<vmem>>, vector<8x128xf32>,
    return
  }
  func.func @transform_0(%arg0: i32) -> (i32, i32) {
    %c0_i32 = arith.constant 0 : i32
    %c0_i32_0 = arith.constant 0 : i32
    return %arg0, %c0_i32 : i32, i32
  }
  func.func @transform_1(%arg0: i32) -> (i32, i32) {
    %c0_i32 = arith.constant 0 : i32
    %c0_i32_0 = arith.constant 0 : i32
    %c0_i32_1 = arith.constant 0 : i32
    return %c0_i32, %c0_i32_0 : i32, i32
  }
  func.func @transform_2(%arg0: i32) -> (i32, i32) {
    %c0_i32 = arith.constant 0 : i32
    %c0_i32_0 = arith.constant 0 : i32
    return %arg0, %c0_i32 : i32, i32
  }
  func.func @transform_3(%arg0: i32) -> (i32, i32) {
    %c0_i32 = arith.constant 0 : i32
    %c0_i32_0 = arith.constant 0 : i32
    return %arg0, %c0_i32 : i32, i32
  }
}

module attributes {stable_mosaic.version = 11 : i64} {
  func.func @_mm_stats_kernel(%arg0: i32, %arg1: memref<32x128xbf16, #tpu.memory_space<vmem>>, %arg2: memref<128x128xbf16, #tpu.memory_space<vmem>>, %arg3: memref<32x128xf32, #tpu.memory_space<vmem>>, %arg4: memref<8x128xf32, #tpu.memory_space<vmem>>) attributes {dimension_semantics = [#tpu.dimension_semantics<parallel>], iteration_bounds = array<i64: 1>, scalar_prefetch = 0 : i64, scratch_operands = 0 : i64, tpu.core_type = #tpu.core_type<tc>, window_params = [{transform_indices = @transform_0, window_bounds = array<i64: 32, 128>}, {pipeline_mode = #tpu.pipeline_mode<synchronous>, transform_indices = @transform_1, window_bounds = array<i64: 128, 128>}, {transform_indices = @transform_2, window_bounds = array<i64: 32, 128>}, {transform_indices = @transform_3, window_bounds = array<i64: 8, 128>}]} {
    %c0 = arith.constant 0 : index
    %c0_0 = arith.constant 0 : index
    %0 = vector.load %arg1[%c0, %c0_0] : memref<32x128xbf16, #tpu.memory_space<vmem>>, vector<32x128xbf16>
    %c0_1 = arith.constant 0 : index
    %c0_2 = arith.constant 0 : index
    %1 = vector.load %arg2[%c0_1, %c0_2] : memref<128x128xbf16, #tpu.memory_space<vmem>>, vector<128x128xbf16>
    %cst = arith.constant dense<0.000000e+00> : vector<32x128xf32>
    %2 = tpu.matmul %0, %1, %cst {dimension_numbers = #tpu.dot_dimension_numbers<[1], [0], [0], [1], [0, 0, 1, 1], [], []>} : vector<32x128xbf16>, vector<128x128xbf16>, vector<32x128xf32> -> vector<32x128xf32>
    %c0_3 = arith.constant 0 : index
    %c0_4 = arith.constant 0 : index
    %3 = vector.load %arg3[%c0_3, %c0_4] : memref<32x128xf32, #tpu.memory_space<vmem>>, vector<32x128xf32>
    tpu.vector_store %arg3[%c0_3, %c0_4], %2 {strides = array<i32>} : memref<32x128xf32, #tpu.memory_space<vmem>>, vector<32x128xf32>,
    %cst_5 = arith.constant dense<0.000000e+00> : vector<128xf32>
    %4 = vector.multi_reduction <add>, %2, %cst_5 [0] : vector<32x128xf32> to vector<128xf32>
    %5 = vector.shape_cast %4 : vector<128xf32> to vector<1x128xf32>
    %6 = arith.mulf %2, %2 : vector<32x128xf32>
    %cst_6 = arith.constant dense<0.000000e+00> : vector<128xf32>
    %7 = vector.multi_reduction <add>, %6, %cst_6 [0] : vector<32x128xf32> to vector<128xf32>
    %8 = vector.shape_cast %7 : vector<128xf32> to vector<1x128xf32>
    %9 = tpu.iota {dimensions = array<i32: 0>} : vector<8x128xi32>
    %c0_i32 = arith.constant 0 : i32
    %10 = vector.broadcast %c0_i32 : i32 to vector<8x128xi32>
    %11 = arith.cmpi eq, %9, %10 : vector<8x128xi32>
    %c1_i32 = arith.constant 1 : i32
    %12 = vector.broadcast %c1_i32 : i32 to vector<8x128xi32>
    %13 = arith.cmpi eq, %9, %12 : vector<8x128xi32>
    %cst_7 = arith.constant 0.000000e+00 : f32
    %14 = vector.shape_cast %8 : vector<1x128xf32> to vector<1x128xf32>
    %15 = vector.broadcast %14 : vector<1x128xf32> to vector<8x128xf32>
    %16 = vector.broadcast %cst_7 : f32 to vector<8x128xf32>
    %17 = arith.select %13, %15, %16 : vector<8x128xi1>, vector<8x128xf32>
    %18 = vector.shape_cast %5 : vector<1x128xf32> to vector<1x128xf32>
    %19 = vector.broadcast %18 : vector<1x128xf32> to vector<8x128xf32>
    %20 = arith.select %11, %19, %17 : vector<8x128xi1>, vector<8x128xf32>
    %c0_8 = arith.constant 0 : index
    %c0_9 = arith.constant 0 : index
    %21 = vector.load %arg4[%c0_8, %c0_9] : memref<8x128xf32, #tpu.memory_space<vmem>>, vector<8x128xf32>
    tpu.vector_store %arg4[%c0_8, %c0_9], %20 {strides = array<i32>} : memref<8x128xf32, #tpu.memory_space<vmem>>, vector<8x128xf32>,
    return
  }
  func.func @transform_0(%arg0: i32) -> (i32, i32) {
    %c0_i32 = arith.constant 0 : i32
    %c0_i32_0 = arith.constant 0 : i32
    return %arg0, %c0_i32 : i32, i32
  }
  func.func @transform_1(%arg0: i32) -> (i32, i32) {
    %c0_i32 = arith.constant 0 : i32
    %c0_i32_0 = arith.constant 0 : i32
    %c0_i32_1 = arith.constant 0 : i32
    return %c0_i32, %c0_i32_0 : i32, i32
  }
  func.func @transform_2(%arg0: i32) -> (i32, i32) {
    %c0_i32 = arith.constant 0 : i32
    %c0_i32_0 = arith.constant 0 : i32
    return %arg0, %c0_i32 : i32, i32
  }
  func.func @transform_3(%arg0: i32) -> (i32, i32) {
    %c0_i32 = arith.constant 0 : i32
    %c0_i32_0 = arith.constant 0 : i32
    return %arg0, %c0_i32 : i32, i32
  }
}

module attributes {stable_mosaic.version = 11 : i64} {
  func.func @kernel(%arg0: i32, %arg1: memref<512x512xbf16, #tpu.memory_space<vmem>>, %arg2: memref<512x128xbf16, #tpu.memory_space<vmem>>, %arg3: memref<1x128xf32, #tpu.memory_space<vmem>>, %arg4: memref<512x128xf32, #tpu.memory_space<vmem>>) attributes {dimension_semantics = [#tpu.dimension_semantics<parallel>], iteration_bounds = array<i64: 1>, scalar_prefetch = 0 : i64, scratch_operands = 0 : i64, tpu.core_type = #tpu.core_type<tc>, window_params = [{transform_indices = @transform_0, window_bounds = array<i64: 512, 512>}, {pipeline_mode = #tpu.pipeline_mode<synchronous>, transform_indices = @transform_1, window_bounds = array<i64: 512, 128>}, {pipeline_mode = #tpu.pipeline_mode<synchronous>, transform_indices = @transform_2, window_bounds = array<i64: 1, 128>}, {transform_indices = @transform_3, window_bounds = array<i64: 512, 128>}]} {
    %c0 = arith.constant 0 : index
    %c0_0 = arith.constant 0 : index
    %0 = vector.load %arg1[%c0, %c0_0] : memref<512x512xbf16, #tpu.memory_space<vmem>>, vector<512x512xbf16>
    %c0_1 = arith.constant 0 : index
    %c0_2 = arith.constant 0 : index
    %1 = vector.load %arg2[%c0_1, %c0_2] : memref<512x128xbf16, #tpu.memory_space<vmem>>, vector<512x128xbf16>
    %cst = arith.constant dense<0.000000e+00> : vector<512x128xf32>
    %2 = tpu.matmul %0, %1, %cst {dimension_numbers = #tpu.dot_dimension_numbers<[1], [0], [0], [1], [0, 0, 1, 1], [], []>} : vector<512x512xbf16>, vector<512x128xbf16>, vector<512x128xf32> -> vector<512x128xf32>
    %c0_3 = arith.constant 0 : index
    %c0_4 = arith.constant 0 : index
    %3 = vector.load %arg3[%c0_3, %c0_4] : memref<1x128xf32, #tpu.memory_space<vmem>>, vector<1x128xf32>
    %4 = vector.broadcast %3 : vector<1x128xf32> to vector<512x128xf32>
    %5 = arith.addf %2, %4 : vector<512x128xf32>
    %6 = math.tanh %5 : vector<512x128xf32>
    %c0_5 = arith.constant 0 : index
    %c0_6 = arith.constant 0 : index
    %7 = vector.load %arg4[%c0_5, %c0_6] : memref<512x128xf32, #tpu.memory_space<vmem>>, vector<512x128xf32>
    tpu.vector_store %arg4[%c0_5, %c0_6], %6 {strides = array<i32>} : memref<512x128xf32, #tpu.memory_space<vmem>>, vector<512x128xf32>,
    return
  }
  func.func @transform_0(%arg0: i32) -> (i32, i32) {
    %c0_i32 = arith.constant 0 : i32
    %c0_i32_0 = arith.constant 0 : i32
    return %arg0, %c0_i32 : i32, i32
  }
  func.func @transform_1(%arg0: i32) -> (i32, i32) {
    %c0_i32 = arith.constant 0 : i32
    %c0_i32_0 = arith.constant 0 : i32
    %c0_i32_1 = arith.constant 0 : i32
    return %c0_i32, %c0_i32_0 : i32, i32
  }
  func.func @transform_2(%arg0: i32) -> (i32, i32) {
    %c0_i32 = arith.constant 0 : i32
    %c0_i32_0 = arith.constant 0 : i32
    %c0_i32_1 = arith.constant 0 : i32
    return %c0_i32, %c0_i32_0 : i32, i32
  }
  func.func @transform_3(%arg0: i32) -> (i32, i32) {
    %c0_i32 = arith.constant 0 : i32
    %c0_i32_0 = arith.constant 0 : i32
    return %arg0, %c0_i32 : i32, i32
  }
}

</mosaic_0001>

<llo_original>
// kernel: _lambda_.20
$region0: #{_lambda_.20}
  #allocation0 [shape = 'u32[]', space=smem, size = 0x4, offset = 0x4, fixed_abs, tag = 'smem constant byte address 0x4 - core index']
  #allocation1 [shape = 'u32[72,128]{1,0:T(1,128)}', space=vmem, size = 0x9000, scoped, tag = 'internal scratch']
  %s0 = inlined_call_operand.vmem [shape: f32[512,128], index: 0, kind: input, shape index: {}]
  %s1 = inlined_call_operand.vmem [shape: f32[1,128], index: 1, kind: input, shape index: {}]
  %s2 = inlined_call_operand.vmem [shape: f32[1,128], index: 2, kind: input, shape index: {}]
  %s3 = inlined_call_operand.vmem [shape: bf16[512,128], index: 3, kind: output, shape index: {}]
  %s4 = sld [smem:[#allocation0]]
  $region22: #{_lambda_.20} parent=0
    _
  %s6 = ssub.s32 1, %s4
  %s7 = scalar_select 0, %s6, %s4
  // Predicated region
  $region2: #{_lambda_.20} parent=0 // pred_check
    _
  $region3: #{_lambda_.20} parent=0 // pred_check_branch
    %9 = sbr.rel (0) target = $region5
  $region4: #{_lambda_.20} parent=0 // pred_region
    _
  $region5: #{_lambda_.20} parent=0 // pred_fallthru
    _
  // Predicated region
  $region6: #{_lambda_.20} parent=0 // pred_check
    _
  $region7: #{_lambda_.20} parent=0 // pred_check_branch
    %11 = sbr.rel (0) target = $region9
  $region8: #{_lambda_.20} parent=0 // pred_region
    _
  $region9: #{_lambda_.20} parent=0 // pred_fallthru
    _
  // Predicated region
  $region10: #{_lambda_.20} parent=0 // pred_check
    _
  $region11: #{_lambda_.20} parent=0 // pred_check_branch
    %13 = sbr.rel (0) target = $region13
  $region12: #{_lambda_.20} parent=0 // pred_region
    _
  $region13: #{_lambda_.20} parent=0 // pred_fallthru
    _
  %v14 = vld [vmem:[%s0] sm:$0xff]
  %v15 = vld [vmem:[%s0 + $0x8] sm:$0xff]
  %v16 = vld [vmem:[%s0 + $0x10] sm:$0xff]
  %v17 = vld [vmem:[%s0 + $0x18] sm:$0xff]
  %v18 = vld [vmem:[%s0 + $0x20] sm:$0xff]
  %v19 = vld [vmem:[%s0 + $0x28] sm:$0xff]
  %v20 = vld [vmem:[%s0 + $0x30] sm:$0xff]
  %v21 = vld [vmem:[%s0 + $0x38] sm:$0xff]
  %v22 = vld [vmem:[%s0 + $0x40] sm:$0xff]
  %v23 = vld [vmem:[%s0 + $0x48] sm:$0xff]
  %v24 = vld [vmem:[%s0 + $0x50] sm:$0xff]
  %v25 = vld [vmem:[%s0 + $0x58] sm:$0xff]
  %v26 = vld [vmem:[%s0 + $0x60] sm:$0xff]
  %v27 = vld [vmem:[%s0 + $0x68] sm:$0xff]
  %v28 = vld [vmem:[%s0 + $0x70] sm:$0xff]
  %v29 = vld [vmem:[%s0 + $0x78] sm:$0xff]
  %v30 = vld [vmem:[%s0 + $0x80] sm:$0xff]
  %v31 = vld [vmem:[%s0 + $0x88] sm:$0xff]
  %v32 = vld [vmem:[%s0 + $0x90] sm:$0xff]
  %v33 = vld [vmem:[%s0 + $0x98] sm:$0xff]
  %v34 = vld [vmem:[%s0 + $0xa0] sm:$0xff]
  %v35 = vld [vmem:[%s0 + $0xa8] sm:$0xff]
  %v36 = vld [vmem:[%s0 + $0xb0] sm:$0xff]
  %v37 = vld [vmem:[%s0 + $0xb8] sm:$0xff]
  %v38 = vld [vmem:[%s0 + $0xc0] sm:$0xff]
  %v39 = vld [vmem:[%s0 + $0xc8] sm:$0xff]
  %v40 = vld [vmem:[%s0 + $0xd0] sm:$0xff]
  %v41 = vld [vmem:[%s0 + $0xd8] sm:$0xff]
  %v42 = vld [vmem:[%s0 + $0xe0] sm:$0xff]
  %v43 = vld [vmem:[%s0 + $0xe8] sm:$0xff]
  %v44 = vld [vmem:[%s0 + $0xf0] sm:$0xff]
  %v45 = vld [vmem:[%s0 + $0xf8] sm:$0xff]
  %v46 = vld [vmem:[%s0 + $0x100] sm:$0xff]
  %v47 = vld [vmem:[%s0 + $0x108] sm:$0xff]
  %v48 = vld [vmem:[%s0 + $0x110] sm:$0xff]
  %v49 = vld [vmem:[%s0 + $0x118] sm:$0xff]
  %v50 = vld [vmem:[%s0 + $0x120] sm:$0xff]
  %v51 = vld [vmem:[%s0 + $0x128] sm:$0xff]
  %v52 = vld [vmem:[%s0 + $0x130] sm:$0xff]
  %v53 = vld [vmem:[%s0 + $0x138] sm:$0xff]
  %v54 = vld [vmem:[%s0 + $0x140] sm:$0xff]
  %v55 = vld [vmem:[%s0 + $0x148] sm:$0xff]
  %v56 = vld [vmem:[%s0 + $0x150] sm:$0xff]
  %v57 = vld [vmem:[%s0 + $0x158] sm:$0xff]
  %v58 = vld [vmem:[%s0 + $0x160] sm:$0xff]
  %v59 = vld [vmem:[%s0 + $0x168] sm:$0xff]
  %v60 = vld [vmem:[%s0 + $0x170] sm:$0xff]
  %v61 = vld [vmem:[%s0 + $0x178] sm:$0xff]
  %v62 = vld [vmem:[%s0 + $0x180] sm:$0xff]
  %v63 = vld [vmem:[%s0 + $0x188] sm:$0xff]
  %v64 = vld [vmem:[%s0 + $0x190] sm:$0xff]
  %v65 = vld [vmem:[%s0 + $0x198] sm:$0xff]
  %v66 = vld [vmem:[%s0 + $0x1a0] sm:$0xff]
  %v67 = vld [vmem:[%s0 + $0x1a8] sm:$0xff]
  %v68 = vld [vmem:[%s0 + $0x1b0] sm:$0xff]
  %v69 = vld [vmem:[%s0 + $0x1b8] sm:$0xff]
  %v70 = vld [vmem:[%s0 + $0x1c0] sm:$0xff]
  %v71 = vld [vmem:[%s0 + $0x1c8] sm:$0xff]
  %v72 = vld [vmem:[%s0 + $0x1d0] sm:$0xff]
  %v73 = vld [vmem:[%s0 + $0x1d8] sm:$0xff]
  %v74 = vld [vmem:[%s0 + $0x1e0] sm:$0xff]
  %v75 = vld [vmem:[%s0 + $0x1e8] sm:$0xff]
  %v76 = vld [vmem:[%s0 + $0x1f0] sm:$0xff]
  %v77 = vld [vmem:[%s0 + $0x1f8] sm:$0xff]
  %v78 = vld [vmem:[%s1] sm:$0x1]
  %v80 = vperm.slane %v78, 0
  %v82 = vmul.f32 %v14, %v80
  %v83 = vmul.f32 %v15, %v80
  %v84 = vmul.f32 %v16, %v80
  %v85 = vmul.f32 %v17, %v80
  %v86 = vmul.f32 %v18, %v80
  %v87 = vmul.f32 %v19, %v80
  %v88 = vmul.f32 %v20, %v80
  %v89 = vmul.f32 %v21, %v80
  %v90 = vmul.f32 %v22, %v80
  %v91 = vmul.f32 %v23, %v80
  %v92 = vmul.f32 %v24, %v80
  %v93 = vmul.f32 %v25, %v80
  %v94 = vmul.f32 %v26, %v80
  %v95 = vmul.f32 %v27, %v80
  %v96 = vmul.f32 %v28, %v80
  %v97 = vmul.f32 %v29, %v80
  %v98 = vmul.f32 %v30, %v80
  %v99 = vmul.f32 %v31, %v80
  %v100 = vmul.f32 %v32, %v80
  %v101 = vmul.f32 %v33, %v80
  %v102 = vmul.f32 %v34, %v80
  %v103 = vmul.f32 %v35, %v80
  %v104 = vmul.f32 %v36, %v80
  %v105 = vmul.f32 %v37, %v80
  %v106 = vmul.f32 %v38, %v80
  %v107 = vmul.f32 %v39, %v80
  %v108 = vmul.f32 %v40, %v80
  %v109 = vmul.f32 %v41, %v80
  %v110 = vmul.f32 %v42, %v80
  %v111 = vmul.f32 %v43, %v80
  %v112 = vmul.f32 %v44, %v80
  %v113 = vmul.f32 %v45, %v80
  %v114 = vmul.f32 %v46, %v80
  %v115 = vmul.f32 %v47, %v80
  %v116 = vmul.f32 %v48, %v80
  %v117 = vmul.f32 %v49, %v80
  %v118 = vmul.f32 %v50, %v80
  %v119 = vmul.f32 %v51, %v80
  %v120 = vmul.f32 %v52, %v80
  %v121 = vmul.f32 %v53, %v80
  %v122 = vmul.f32 %v54, %v80
  %v123 = vmul.f32 %v55, %v80
  %v124 = vmul.f32 %v56, %v80
  %v125 = vmul.f32 %v57, %v80
  %v126 = vmul.f32 %v58, %v80
  %v127 = vmul.f32 %v59, %v80
  %v128 = vmul.f32 %v60, %v80
  %v129 = vmul.f32 %v61, %v80
  %v130 = vmul.f32 %v62, %v80
  %v131 = vmul.f32 %v63, %v80
  %v132 = vmul.f32 %v64, %v80
  %v133 = vmul.f32 %v65, %v80
  %v134 = vmul.f32 %v66, %v80
  %v135 = vmul.f32 %v67, %v80
  %v136 = vmul.f32 %v68, %v80
  %v137 = vmul.f32 %v69, %v80
  %v138 = vmul.f32 %v70, %v80
  %v139 = vmul.f32 %v71, %v80
  %v140 = vmul.f32 %v72, %v80
  %v141 = vmul.f32 %v73, %v80
  %v142 = vmul.f32 %v74, %v80
  %v143 = vmul.f32 %v75, %v80
  %v144 = vmul.f32 %v76, %v80
  %v145 = vmul.f32 %v77, %v80
  %v146 = vld [vmem:[%s2] sm:$0x1]
  %v148 = vperm.slane %v146, 0
  %v150 = vadd.f32 %v82, %v148
  %v151 = vadd.f32 %v83, %v148
  %v152 = vadd.f32 %v84, %v148
  %v153 = vadd.f32 %v85, %v148
  %v154 = vadd.f32 %v86, %v148
  %v155 = vadd.f32 %v87, %v148
  %v156 = vadd.f32 %v88, %v148
  %v157 = vadd.f32 %v89, %v148
  %v158 = vadd.f32 %v90, %v148
  %v159 = vadd.f32 %v91, %v148
  %v160 = vadd.f32 %v92, %v148
  %v161 = vadd.f32 %v93, %v148
  %v162 = vadd.f32 %v94, %v148
  %v163 = vadd.f32 %v95, %v148
  %v164 = vadd.f32 %v96, %v148
  %v165 = vadd.f32 %v97, %v148
  %v166 = vadd.f32 %v98, %v148
  %v167 = vadd.f32 %v99, %v148
  %v168 = vadd.f32 %v100, %v148
  %v169 = vadd.f32 %v101, %v148
  %v170 = vadd.f32 %v102, %v148
  %v171 = vadd.f32 %v103, %v148
  %v172 = vadd.f32 %v104, %v148
  %v173 = vadd.f32 %v105, %v148
  %v174 = vadd.f32 %v106, %v148
  %v175 = vadd.f32 %v107, %v148
  %v176 = vadd.f32 %v108, %v148
  %v177 = vadd.f32 %v109, %v148
  %v178 = vadd.f32 %v110, %v148
  %v179 = vadd.f32 %v111, %v148
  %v180 = vadd.f32 %v112, %v148
  %v181 = vadd.f32 %v113, %v148
  %v182 = vadd.f32 %v114, %v148
  %v183 = vadd.f32 %v115, %v148
  %v184 = vadd.f32 %v116, %v148
  %v185 = vadd.f32 %v117, %v148
  %v186 = vadd.f32 %v118, %v148
  %v187 = vadd.f32 %v119, %v148
  %v188 = vadd.f32 %v120, %v148
  %v189 = vadd.f32 %v121, %v148
  %v190 = vadd.f32 %v122, %v148
  %v191 = vadd.f32 %v123, %v148
  %v192 = vadd.f32 %v124, %v148
  %v193 = vadd.f32 %v125, %v148
  %v194 = vadd.f32 %v126, %v148
  %v195 = vadd.f32 %v127, %v148
  %v196 = vadd.f32 %v128, %v148
  %v197 = vadd.f32 %v129, %v148
  %v198 = vadd.f32 %v130, %v148
  %v199 = vadd.f32 %v131, %v148
  %v200 = vadd.f32 %v132, %v148
  %v201 = vadd.f32 %v133, %v148
  %v202 = vadd.f32 %v134, %v148
  %v203 = vadd.f32 %v135, %v148
  %v204 = vadd.f32 %v136, %v148
  %v205 = vadd.f32 %v137, %v148
  %v206 = vadd.f32 %v138, %v148
  %v207 = vadd.f32 %v139, %v148
  %v208 = vadd.f32 %v140, %v148
  %v209 = vadd.f32 %v141, %v148
  %v210 = vadd.f32 %v142, %v148
  %v211 = vadd.f32 %v143, %v148
  %v212 = vadd.f32 %v144, %v148
  %v213 = vadd.f32 %v145, %v148
  %v214 = vmax.f32 %v150, 0.0
  %v215 = vmax.f32 %v151, 0.0
  %v216 = vmax.f32 %v152, 0.0
  %v217 = vmax.f32 %v153, 0.0
  %v218 = vmax.f32 %v154, 0.0
  %v219 = vmax.f32 %v155, 0.0
  %v220 = vmax.f32 %v156, 0.0
  %v221 = vmax.f32 %v157, 0.0
  %v222 = vmax.f32 %v158, 0.0
  %v223 = vmax.f32 %v159, 0.0
  %v224 = vmax.f32 %v160, 0.0
  %v225 = vmax.f32 %v161, 0.0
  %v226 = vmax.f32 %v162, 0.0
  %v227 = vmax.f32 %v163, 0.0
  %v228 = vmax.f32 %v164, 0.0
  %v229 = vmax.f32 %v165, 0.0
  %v230 = vmax.f32 %v166, 0.0
  %v231 = vmax.f32 %v167, 0.0
  %v232 = vmax.f32 %v168, 0.0
  %v233 = vmax.f32 %v169, 0.0
  %v234 = vmax.f32 %v170, 0.0
  %v235 = vmax.f32 %v171, 0.0
  %v236 = vmax.f32 %v172, 0.0
  %v237 = vmax.f32 %v173, 0.0
  %v238 = vmax.f32 %v174, 0.0
  %v239 = vmax.f32 %v175, 0.0
  %v240 = vmax.f32 %v176, 0.0
  %v241 = vmax.f32 %v177, 0.0
  %v242 = vmax.f32 %v178, 0.0
  %v243 = vmax.f32 %v179, 0.0
  %v244 = vmax.f32 %v180, 0.0
  %v245 = vmax.f32 %v181, 0.0
  %v246 = vmax.f32 %v182, 0.0
  %v247 = vmax.f32 %v183, 0.0
  %v248 = vmax.f32 %v184, 0.0
  %v249 = vmax.f32 %v185, 0.0
  %v250 = vmax.f32 %v186, 0.0
  %v251 = vmax.f32 %v187, 0.0
  %v252 = vmax.f32 %v188, 0.0
  %v253 = vmax.f32 %v189, 0.0
  %v254 = vmax.f32 %v190, 0.0
  %v255 = vmax.f32 %v191, 0.0
  %v256 = vmax.f32 %v192, 0.0
  %v257 = vmax.f32 %v193, 0.0
  %v258 = vmax.f32 %v194, 0.0
  %v259 = vmax.f32 %v195, 0.0
  %v260 = vmax.f32 %v196, 0.0
  %v261 = vmax.f32 %v197, 0.0
  %v262 = vmax.f32 %v198, 0.0
  %v263 = vmax.f32 %v199, 0.0
  %v264 = vmax.f32 %v200, 0.0
  %v265 = vmax.f32 %v201, 0.0
  %v266 = vmax.f32 %v202, 0.0
  %v267 = vmax.f32 %v203, 0.0
  %v268 = vmax.f32 %v204, 0.0
  %v269 = vmax.f32 %v205, 0.0
  %v270 = vmax.f32 %v206, 0.0
  %v271 = vmax.f32 %v207, 0.0
  %v272 = vmax.f32 %v208, 0.0
  %v273 = vmax.f32 %v209, 0.0
  %v274 = vmax.f32 %v210, 0.0
  %v275 = vmax.f32 %v211, 0.0
  %v276 = vmax.f32 %v212, 0.0
  %v277 = vmax.f32 %v213, 0.0
  %v278 = vpack.c.bf16 %v214, %v214
  %v279 = vpack.c.bf16 %v215, %v215
  %v280 = vpack.c.bf16 %v216, %v216
  %v281 = vpack.c.bf16 %v217, %v217
  %v282 = vpack.c.bf16 %v218, %v218
  %v283 = vpack.c.bf16 %v219, %v219
  %v284 = vpack.c.bf16 %v220, %v220
  %v285 = vpack.c.bf16 %v221, %v221
  %v286 = vpack.c.bf16 %v222, %v222
  %v287 = vpack.c.bf16 %v223, %v223
  %v288 = vpack.c.bf16 %v224, %v224
  %v289 = vpack.c.bf16 %v225, %v225
  %v290 = vpack.c.bf16 %v226, %v226
  %v291 = vpack.c.bf16 %v227, %v227
  %v292 = vpack.c.bf16 %v228, %v228
  %v293 = vpack.c.bf16 %v229, %v229
  %v294 = vpack.c.bf16 %v230, %v230
  %v295 = vpack.c.bf16 %v231, %v231
  %v296 = vpack.c.bf16 %v232, %v232
  %v297 = vpack.c.bf16 %v233, %v233
  %v298 = vpack.c.bf16 %v234, %v234
  %v299 = vpack.c.bf16 %v235, %v235
  %v300 = vpack.c.bf16 %v236, %v236
  %v301 = vpack.c.bf16 %v237, %v237
  %v302 = vpack.c.bf16 %v238, %v238
  %v303 = vpack.c.bf16 %v239, %v239
  %v304 = vpack.c.bf16 %v240, %v240
  %v305 = vpack.c.bf16 %v241, %v241
  %v306 = vpack.c.bf16 %v242, %v242
  %v307 = vpack.c.bf16 %v243, %v243
  %v308 = vpack.c.bf16 %v244, %v244
  %v309 = vpack.c.bf16 %v245, %v245
  %v310 = vpack.c.bf16 %v246, %v246
  %v311 = vpack.c.bf16 %v247, %v247
  %v312 = vpack.c.bf16 %v248, %v248
  %v313 = vpack.c.bf16 %v249, %v249
  %v314 = vpack.c.bf16 %v250, %v250
  %v315 = vpack.c.bf16 %v251, %v251
  %v316 = vpack.c.bf16 %v252, %v252
  %v317 = vpack.c.bf16 %v253, %v253
  %v318 = vpack.c.bf16 %v254, %v254
  %v319 = vpack.c.bf16 %v255, %v255
  %v320 = vpack.c.bf16 %v256, %v256
  %v321 = vpack.c.bf16 %v257, %v257
  %v322 = vpack.c.bf16 %v258, %v258
  %v323 = vpack.c.bf16 %v259, %v259
  %v324 = vpack.c.bf16 %v260, %v260
  %v325 = vpack.c.bf16 %v261, %v261
  %v326 = vpack.c.bf16 %v262, %v262
  %v327 = vpack.c.bf16 %v263, %v263
  %v328 = vpack.c.bf16 %v264, %v264
  %v329 = vpack.c.bf16 %v265, %v265
  %v330 = vpack.c.bf16 %v266, %v266
  %v331 = vpack.c.bf16 %v267, %v267
  %v332 = vpack.c.bf16 %v268, %v268
  %v333 = vpack.c.bf16 %v269, %v269
  %v334 = vpack.c.bf16 %v270, %v270
  %v335 = vpack.c.bf16 %v271, %v271
  %v336 = vpack.c.bf16 %v272, %v272
  %v337 = vpack.c.bf16 %v273, %v273
  %v338 = vpack.c.bf16 %v274, %v274
  %v339 = vpack.c.bf16 %v275, %v275
  %v340 = vpack.c.bf16 %v276, %v276
  %v341 = vpack.c.bf16 %v277, %v277
  %342 = vst [vmem:[%s3] sm:$0xf] %v278
  %343 = vst [vmem:[%s3 + $0x4] sm:$0xf] %v279
  %344 = vst [vmem:[%s3 + $0x8] sm:$0xf] %v280
  %345 = vst [vmem:[%s3 + $0xc] sm:$0xf] %v281
  %346 = vst [vmem:[%s3 + $0x10] sm:$0xf] %v282
  %347 = vst [vmem:[%s3 + $0x14] sm:$0xf] %v283
  %348 = vst [vmem:[%s3 + $0x18] sm:$0xf] %v284
  %349 = vst [vmem:[%s3 + $0x1c] sm:$0xf] %v285
  %350 = vst [vmem:[%s3 + $0x20] sm:$0xf] %v286
  %351 = vst [vmem:[%s3 + $0x24] sm:$0xf] %v287
  %352 = vst [vmem:[%s3 + $0x28] sm:$0xf] %v288
  %353 = vst [vmem:[%s3 + $0x2c] sm:$0xf] %v289
  %354 = vst [vmem:[%s3 + $0x30] sm:$0xf] %v290
  %355 = vst [vmem:[%s3 + $0x34] sm:$0xf] %v291
  %356 = vst [vmem:[%s3 + $0x38] sm:$0xf] %v292
  %357 = vst [vmem:[%s3 + $0x3c] sm:$0xf] %v293
  %358 = vst [vmem:[%s3 + $0x40] sm:$0xf] %v294
  %359 = vst [vmem:[%s3 + $0x44] sm:$0xf] %v295
  %360 = vst [vmem:[%s3 + $0x48] sm:$0xf] %v296
  %361 = vst [vmem:[%s3 + $0x4c] sm:$0xf] %v297
  %362 = vst [vmem:[%s3 + $0x50] sm:$0xf] %v298
  %363 = vst [vmem:[%s3 + $0x54] sm:$0xf] %v299
  %364 = vst [vmem:[%s3 + $0x58] sm:$0xf] %v300
  %365 = vst [vmem:[%s3 + $0x5c] sm:$0xf] %v301
  %366 = vst [vmem:[%s3 + $0x60] sm:$0xf] %v302
  %367 = vst [vmem:[%s3 + $0x64] sm:$0xf] %v303
  %368 = vst [vmem:[%s3 + $0x68] sm:$0xf] %v304
  %369 = vst [vmem:[%s3 + $0x6c] sm:$0xf] %v305
  %370 = vst [vmem:[%s3 + $0x70] sm:$0xf] %v306
  %371 = vst [vmem:[%s3 + $0x74] sm:$0xf] %v307
  %372 = vst [vmem:[%s3 + $0x78] sm:$0xf] %v308
  %373 = vst [vmem:[%s3 + $0x7c] sm:$0xf] %v309
  %374 = vst [vmem:[%s3 + $0x80] sm:$0xf] %v310
  %375 = vst [vmem:[%s3 + $0x84] sm:$0xf] %v311
  %376 = vst [vmem:[%s3 + $0x88] sm:$0xf] %v312
  %377 = vst [vmem:[%s3 + $0x8c] sm:$0xf] %v313
  %378 = vst [vmem:[%s3 + $0x90] sm:$0xf] %v314
  %379 = vst [vmem:[%s3 + $0x94] sm:$0xf] %v315
  %380 = vst [vmem:[%s3 + $0x98] sm:$0xf] %v316
  %381 = vst [vmem:[%s3 + $0x9c] sm:$0xf] %v317
  %382 = vst [vmem:[%s3 + $0xa0] sm:$0xf] %v318
  %383 = vst [vmem:[%s3 + $0xa4] sm:$0xf] %v319
  %384 = vst [vmem:[%s3 + $0xa8] sm:$0xf] %v320
  %385 = vst [vmem:[%s3 + $0xac] sm:$0xf] %v321
  %386 = vst [vmem:[%s3 + $0xb0] sm:$0xf] %v322
  %387 = vst [vmem:[%s3 + $0xb4] sm:$0xf] %v323
  %388 = vst [vmem:[%s3 + $0xb8] sm:$0xf] %v324
  %389 = vst [vmem:[%s3 + $0xbc] sm:$0xf] %v325
  %390 = vst [vmem:[%s3 + $0xc0] sm:$0xf] %v326
  %391 = vst [vmem:[%s3 + $0xc4] sm:$0xf] %v327
  %392 = vst [vmem:[%s3 + $0xc8] sm:$0xf] %v328
  %393 = vst [vmem:[%s3 + $0xcc] sm:$0xf] %v329
  %394 = vst [vmem:[%s3 + $0xd0] sm:$0xf] %v330
  %395 = vst [vmem:[%s3 + $0xd4] sm:$0xf] %v331
  %396 = vst [vmem:[%s3 + $0xd8] sm:$0xf] %v332
  %397 = vst [vmem:[%s3 + $0xdc] sm:$0xf] %v333
  %398 = vst [vmem:[%s3 + $0xe0] sm:$0xf] %v334
  %399 = vst [vmem:[%s3 + $0xe4] sm:$0xf] %v335
  %400 = vst [vmem:[%s3 + $0xe8] sm:$0xf] %v336
  %401 = vst [vmem:[%s3 + $0xec] sm:$0xf] %v337
  %402 = vst [vmem:[%s3 + $0xf0] sm:$0xf] %v338
  %403 = vst [vmem:[%s3 + $0xf4] sm:$0xf] %v339
  %404 = vst [vmem:[%s3 + $0xf8] sm:$0xf] %v340
  %405 = vst [vmem:[%s3 + $0xfc] sm:$0xf] %v341
  // Predicated region
  $region14: #{_lambda_.20} parent=0 // pred_check
    _
  $region15: #{_lambda_.20} parent=0 // pred_check_branch
    %407 = sbr.rel (0) target = $region17
  $region16: #{_lambda_.20} parent=0 // pred_region
    _
  $region17: #{_lambda_.20} parent=0 // pred_fallthru
    _
  // Predicated region
  $region18: #{_lambda_.20} parent=0 // pred_check
    _
  $region19: #{_lambda_.20} parent=0 // pred_check_branch
    %409 = sbr.rel (0) target = $region21
  $region20: #{_lambda_.20} parent=0 // pred_region
    _
  $region21: #{_lambda_.20} parent=0 // pred_fallthru
    _

// kernel: _lambda_.19
$region0: #{_lambda_.19}
  #allocation0 [shape = 'u32[]', space=smem, size = 0x4, offset = 0x4, fixed_abs, tag = 'smem constant byte address 0x4 - core index']
  #allocation1 [shape = 'u32[72,128]{1,0:T(1,128)}', space=vmem, size = 0x9000, scoped, tag = 'internal scratch']
  %s0 = inlined_call_operand.vmem [shape: bf16[512,256], index: 0, kind: input, shape index: {}]
  %s1 = inlined_call_operand.vmem [shape: bf16[256,128], index: 1, kind: input, shape index: {}]
  %s2 = inlined_call_operand.vmem [shape: f32[512,128], index: 2, kind: output, shape index: {0}]
  %s3 = inlined_call_operand.vmem [shape: f32[8,128], index: 3, kind: output, shape index: {1}]
  %4 = xla_tuple %s2, %s3
  %s5 = sld [smem:[#allocation0]]
  $region26: #{_lambda_.19} parent=0
    _
  %s7 = ssub.s32 1, %s5
  %s8 = scalar_select 0, %s7, %s5
  // Predicated region
  $region2: #{_lambda_.19} parent=0 // pred_check
    _
  $region3: #{_lambda_.19} parent=0 // pred_check_branch
    %10 = sbr.rel (0) target = $region5
  $region4: #{_lambda_.19} parent=0 // pred_region
    _
  $region5: #{_lambda_.19} parent=0 // pred_fallthru
    _
  // Predicated region
  $region6: #{_lambda_.19} parent=0 // pred_check
    _
  $region7: #{_lambda_.19} parent=0 // pred_check_branch
    %12 = sbr.rel (0) target = $region9
  $region8: #{_lambda_.19} parent=0 // pred_region
    _
  $region9: #{_lambda_.19} parent=0 // pred_fallthru
    _
  %v13 = vld [vmem:[%s0] sm:$0xff]
  %v14 = vld [vmem:[%s0 + $0x8] sm:$0xff]
  %v15 = vld [vmem:[%s0 + $0x10] sm:$0xff]
  %v16 = vld [vmem:[%s0 + $0x18] sm:$0xff]
  %v17 = vld [vmem:[%s0 + $0x20] sm:$0xff]
  %v18 = vld [vmem:[%s0 + $0x28] sm:$0xff]
  %v19 = vld [vmem:[%s0 + $0x30] sm:$0xff]
  %v20 = vld [vmem:[%s0 + $0x38] sm:$0xff]
  %v21 = vld [vmem:[%s0 + $0x40] sm:$0xff]
  %v22 = vld [vmem:[%s0 + $0x48] sm:$0xff]
  %v23 = vld [vmem:[%s0 + $0x50] sm:$0xff]
  %v24 = vld [vmem:[%s0 + $0x58] sm:$0xff]
  %v25 = vld [vmem:[%s0 + $0x60] sm:$0xff]
  %v26 = vld [vmem:[%s0 + $0x68] sm:$0xff]
  %v27 = vld [vmem:[%s0 + $0x70] sm:$0xff]
  %v28 = vld [vmem:[%s0 + $0x78] sm:$0xff]
  %v29 = vld [vmem:[%s0 + $0x80] sm:$0xff]
  %v30 = vld [vmem:[%s0 + $0x88] sm:$0xff]
  %v31 = vld [vmem:[%s0 + $0x90] sm:$0xff]
  %v32 = vld [vmem:[%s0 + $0x98] sm:$0xff]
  %v33 = vld [vmem:[%s0 + $0xa0] sm:$0xff]
  %v34 = vld [vmem:[%s0 + $0xa8] sm:$0xff]
  %v35 = vld [vmem:[%s0 + $0xb0] sm:$0xff]
  %v36 = vld [vmem:[%s0 + $0xb8] sm:$0xff]
  %v37 = vld [vmem:[%s0 + $0xc0] sm:$0xff]
  %v38 = vld [vmem:[%s0 + $0xc8] sm:$0xff]
  %v39 = vld [vmem:[%s0 + $0xd0] sm:$0xff]
  %v40 = vld [vmem:[%s0 + $0xd8] sm:$0xff]
  %v41 = vld [vmem:[%s0 + $0xe0] sm:$0xff]
  %v42 = vld [vmem:[%s0 + $0xe8] sm:$0xff]
  %v43 = vld [vmem:[%s0 + $0xf0] sm:$0xff]
  %v44 = vld [vmem:[%s0 + $0xf8] sm:$0xff]
  %v45 = vld [vmem:[%s0 + $0x100] sm:$0xff]
  %v46 = vld [vmem:[%s0 + $0x108] sm:$0xff]
  %v47 = vld [vmem:[%s0 + $0x110] sm:$0xff]
  %v48 = vld [vmem:[%s0 + $0x118] sm:$0xff]
  %v49 = vld [vmem:[%s0 + $0x120] sm:$0xff]
  %v50 = vld [vmem:[%s0 + $0x128] sm:$0xff]
  %v51 = vld [vmem:[%s0 + $0x130] sm:$0xff]
  %v52 = vld [vmem:[%s0 + $0x138] sm:$0xff]
  %v53 = vld [vmem:[%s0 + $0x140] sm:$0xff]
  %v54 = vld [vmem:[%s0 + $0x148] sm:$0xff]
  %v55 = vld [vmem:[%s0 + $0x150] sm:$0xff]
  %v56 = vld [vmem:[%s0 + $0x158] sm:$0xff]
  %v57 = vld [vmem:[%s0 + $0x160] sm:$0xff]
  %v58 = vld [vmem:[%s0 + $0x168] sm:$0xff]
  %v59 = vld [vmem:[%s0 + $0x170] sm:$0xff]
  %v60 = vld [vmem:[%s0 + $0x178] sm:$0xff]
  %v61 = vld [vmem:[%s0 + $0x180] sm:$0xff]
  %v62 = vld [vmem:[%s0 + $0x188] sm:$0xff]
  %v63 = vld [vmem:[%s0 + $0x190] sm:$0xff]
  %v64 = vld [vmem:[%s0 + $0x198] sm:$0xff]
  %v65 = vld [vmem:[%s0 + $0x1a0] sm:$0xff]
  %v66 = vld [vmem:[%s0 + $0x1a8] sm:$0xff]
  %v67 = vld [vmem:[%s0 + $0x1b0] sm:$0xff]
  %v68 = vld [vmem:[%s0 + $0x1b8] sm:$0xff]
  %v69 = vld [vmem:[%s0 + $0x1c0] sm:$0xff]
  %v70 = vld [vmem:[%s0 + $0x1c8] sm:$0xff]
  %v71 = vld [vmem:[%s0 + $0x1d0] sm:$0xff]
  %v72 = vld [vmem:[%s0 + $0x1d8] sm:$0xff]
  %v73 = vld [vmem:[%s0 + $0x1e0] sm:$0xff]
  %v74 = vld [vmem:[%s0 + $0x1e8] sm:$0xff]
  %v75 = vld [vmem:[%s0 + $0x1f0] sm:$0xff]
  %v76 = vld [vmem:[%s0 + $0x1f8] sm:$0xff]
  %v77 = vld [vmem:[%s1] sm:$0xf]
  %v78 = vld [vmem:[%s1 + $0x4] sm:$0xf]
  %v79 = vld [vmem:[%s1 + $0x8] sm:$0xf]
  %v80 = vld [vmem:[%s1 + $0xc] sm:$0xf]
  %v81 = vld [vmem:[%s1 + $0x10] sm:$0xf]
  %v82 = vld [vmem:[%s1 + $0x14] sm:$0xf]
  %v83 = vld [vmem:[%s1 + $0x18] sm:$0xf]
  %v84 = vld [vmem:[%s1 + $0x1c] sm:$0xf]
  %v85 = vld [vmem:[%s1 + $0x20] sm:$0xf]
  %v86 = vld [vmem:[%s1 + $0x24] sm:$0xf]
  %v87 = vld [vmem:[%s1 + $0x28] sm:$0xf]
  %v88 = vld [vmem:[%s1 + $0x2c] sm:$0xf]
  %v89 = vld [vmem:[%s1 + $0x30] sm:$0xf]
  %v90 = vld [vmem:[%s1 + $0x34] sm:$0xf]
  %v91 = vld [vmem:[%s1 + $0x38] sm:$0xf]
  %v92 = vld [vmem:[%s1 + $0x3c] sm:$0xf]
  %v93 = vld [vmem:[%s1 + $0x40] sm:$0xf]
  %v94 = vld [vmem:[%s1 + $0x44] sm:$0xf]
  %v95 = vld [vmem:[%s1 + $0x48] sm:$0xf]
  %v96 = vld [vmem:[%s1 + $0x4c] sm:$0xf]
  %v97 = vld [vmem:[%s1 + $0x50] sm:$0xf]
  %v98 = vld [vmem:[%s1 + $0x54] sm:$0xf]
  %v99 = vld [vmem:[%s1 + $0x58] sm:$0xf]
  %v100 = vld [vmem:[%s1 + $0x5c] sm:$0xf]
  %v101 = vld [vmem:[%s1 + $0x60] sm:$0xf]
  %v102 = vld [vmem:[%s1 + $0x64] sm:$0xf]
  %v103 = vld [vmem:[%s1 + $0x68] sm:$0xf]
  %v104 = vld [vmem:[%s1 + $0x6c] sm:$0xf]
  %v105 = vld [vmem:[%s1 + $0x70] sm:$0xf]
  %v106 = vld [vmem:[%s1 + $0x74] sm:$0xf]
  %v107 = vld [vmem:[%s1 + $0x78] sm:$0xf]
  %v108 = vld [vmem:[%s1 + $0x7c] sm:$0xf]
  %v173 = vunpack.c.l.b16 %v13
  %v174 = vunpack.c.h.b16 %v13
  %v175 = vunpack.c.l.b16 %v14
  %v176 = vunpack.c.h.b16 %v14
  %v177 = vunpack.c.l.b16 %v15
  %v178 = vunpack.c.h.b16 %v15
  %v179 = vunpack.c.l.b16 %v16
  %v180 = vunpack.c.h.b16 %v16
  %v181 = vunpack.c.l.b16 %v17
  %v182 = vunpack.c.h.b16 %v17
  %v183 = vunpack.c.l.b16 %v18
  %v184 = vunpack.c.h.b16 %v18
  %v185 = vunpack.c.l.b16 %v19
  %v186 = vunpack.c.h.b16 %v19
  %v187 = vunpack.c.l.b16 %v20
  %v188 = vunpack.c.h.b16 %v20
  %v189 = vunpack.c.l.b16 %v21
  %v190 = vunpack.c.h.b16 %v21
  %v191 = vunpack.c.l.b16 %v22
  %v192 = vunpack.c.h.b16 %v22
  %v193 = vunpack.c.l.b16 %v23
  %v194 = vunpack.c.h.b16 %v23
  %v195 = vunpack.c.l.b16 %v24
  %v196 = vunpack.c.h.b16 %v24
  %v197 = vunpack.c.l.b16 %v25
  %v198 = vunpack.c.h.b16 %v25
  %v199 = vunpack.c.l.b16 %v26
  %v200 = vunpack.c.h.b16 %v26
  %v201 = vunpack.c.l.b16 %v27
  %v202 = vunpack.c.h.b16 %v27
  %v203 = vunpack.c.l.b16 %v28
  %v204 = vunpack.c.h.b16 %v28
  %v205 = vunpack.c.l.b16 %v29
  %v206 = vunpack.c.h.b16 %v29
  %v207 = vunpack.c.l.b16 %v30
  %v208 = vunpack.c.h.b16 %v30
  %v209 = vunpack.c.l.b16 %v31
  %v210 = vunpack.c.h.b16 %v31
  %v211 = vunpack.c.l.b16 %v32
  %v212 = vunpack.c.h.b16 %v32
  %v213 = vunpack.c.l.b16 %v33
  %v214 = vunpack.c.h.b16 %v33
  %v215 = vunpack.c.l.b16 %v34
  %v216 = vunpack.c.h.b16 %v34
  %v217 = vunpack.c.l.b16 %v35
  %v218 = vunpack.c.h.b16 %v35
  %v219 = vunpack.c.l.b16 %v36
  %v220 = vunpack.c.h.b16 %v36
  %v221 = vunpack.c.l.b16 %v37
  %v222 = vunpack.c.h.b16 %v37
  %v223 = vunpack.c.l.b16 %v38
  %v224 = vunpack.c.h.b16 %v38
  %v225 = vunpack.c.l.b16 %v39
  %v226 = vunpack.c.h.b16 %v39
  %v227 = vunpack.c.l.b16 %v40
  %v228 = vunpack.c.h.b16 %v40
  %v229 = vunpack.c.l.b16 %v41
  %v230 = vunpack.c.h.b16 %v41
  %v231 = vunpack.c.l.b16 %v42
  %v232 = vunpack.c.h.b16 %v42
  %v233 = vunpack.c.l.b16 %v43
  %v234 = vunpack.c.h.b16 %v43
  %v235 = vunpack.c.l.b16 %v44
  %v236 = vunpack.c.h.b16 %v44
  %v237 = vunpack.c.l.b16 %v45
  %v238 = vunpack.c.h.b16 %v45
  %v239 = vunpack.c.l.b16 %v46
  %v240 = vunpack.c.h.b16 %v46
  %v241 = vunpack.c.l.b16 %v47
  %v242 = vunpack.c.h.b16 %v47
  %v243 = vunpack.c.l.b16 %v48
  %v244 = vunpack.c.h.b16 %v48
  %v245 = vunpack.c.l.b16 %v49
  %v246 = vunpack.c.h.b16 %v49
  %v247 = vunpack.c.l.b16 %v50
  %v248 = vunpack.c.h.b16 %v50
  %v249 = vunpack.c.l.b16 %v51
  %v250 = vunpack.c.h.b16 %v51
  %v251 = vunpack.c.l.b16 %v52
  %v252 = vunpack.c.h.b16 %v52
  %v253 = vunpack.c.l.b16 %v53
  %v254 = vunpack.c.h.b16 %v53
  %v255 = vunpack.c.l.b16 %v54
  %v256 = vunpack.c.h.b16 %v54
  %v257 = vunpack.c.l.b16 %v55
  %v258 = vunpack.c.h.b16 %v55
  %v259 = vunpack.c.l.b16 %v56
  %v260 = vunpack.c.h.b16 %v56
  %v261 = vunpack.c.l.b16 %v57
  %v262 = vunpack.c.h.b16 %v57
  %v263 = vunpack.c.l.b16 %v58
  %v264 = vunpack.c.h.b16 %v58
  %v265 = vunpack.c.l.b16 %v59
  %v266 = vunpack.c.h.b16 %v59
  %v267 = vunpack.c.l.b16 %v60
  %v268 = vunpack.c.h.b16 %v60
  %v269 = vunpack.c.l.b16 %v61
  %v270 = vunpack.c.h.b16 %v61
  %v271 = vunpack.c.l.b16 %v62
  %v272 = vunpack.c.h.b16 %v62
  %v273 = vunpack.c.l.b16 %v63
  %v274 = vunpack.c.h.b16 %v63
  %v275 = vunpack.c.l.b16 %v64
  %v276 = vunpack.c.h.b16 %v64
  %v277 = vunpack.c.l.b16 %v65
  %v278 = vunpack.c.h.b16 %v65
  %v279 = vunpack.c.l.b16 %v66
  %v280 = vunpack.c.h.b16 %v66
  %v281 = vunpack.c.l.b16 %v67
  %v282 = vunpack.c.h.b16 %v67
  %v283 = vunpack.c.l.b16 %v68
  %v284 = vunpack.c.h.b16 %v68
  %v285 = vunpack.c.l.b16 %v69
  %v286 = vunpack.c.h.b16 %v69
  %v287 = vunpack.c.l.b16 %v70
  %v288 = vunpack.c.h.b16 %v70
  %v289 = vunpack.c.l.b16 %v71
  %v290 = vunpack.c.h.b16 %v71
  %v291 = vunpack.c.l.b16 %v72
  %v292 = vunpack.c.h.b16 %v72
  %v293 = vunpack.c.l.b16 %v73
  %v294 = vunpack.c.h.b16 %v73
  %v295 = vunpack.c.l.b16 %v74
  %v296 = vunpack.c.h.b16 %v74
  %v297 = vunpack.c.l.b16 %v75
  %v298 = vunpack.c.h.b16 %v75
  %v299 = vunpack.c.l.b16 %v76
  %v300 = vunpack.c.h.b16 %v76
  %v301 = vpack.c.b16 %v175, %v173
  %v302 = vpack.c.b16 %v176, %v174
  %v303 = vpack.c.b16 %v179, %v177
  %v304 = vpack.c.b16 %v180, %v178
  %v305 = vpack.c.b16 %v183, %v181
  %v306 = vpack.c.b16 %v184, %v182
  %v307 = vpack.c.b16 %v187, %v185
  %v308 = vpack.c.b16 %v188, %v186
  %v309 = vpack.c.b16 %v191, %v189
  %v310 = vpack.c.b16 %v192, %v190
  %v311 = vpack.c.b16 %v195, %v193
  %v312 = vpack.c.b16 %v196, %v194
  %v313 = vpack.c.b16 %v199, %v197
  %v314 = vpack.c.b16 %v200, %v198
  %v315 = vpack.c.b16 %v203, %v201
  %v316 = vpack.c.b16 %v204, %v202
  %v317 = vpack.c.b16 %v207, %v205
  %v318 = vpack.c.b16 %v208, %v206
  %v319 = vpack.c.b16 %v211, %v209
  %v320 = vpack.c.b16 %v212, %v210
  %v321 = vpack.c.b16 %v215, %v213
  %v322 = vpack.c.b16 %v216, %v214
  %v323 = vpack.c.b16 %v219, %v217
  %v324 = vpack.c.b16 %v220, %v218
  %v325 = vpack.c.b16 %v223, %v221
  %v326 = vpack.c.b16 %v224, %v222
  %v327 = vpack.c.b16 %v227, %v225
  %v328 = vpack.c.b16 %v228, %v226
  %v329 = vpack.c.b16 %v231, %v229
  %v330 = vpack.c.b16 %v232, %v230
  %v331 = vpack.c.b16 %v235, %v233
  %v332 = vpack.c.b16 %v236, %v234
  %v333 = vpack.c.b16 %v239, %v237
  %v334 = vpack.c.b16 %v240, %v238
  %v335 = vpack.c.b16 %v243, %v241
  %v336 = vpack.c.b16 %v244, %v242
  %v337 = vpack.c.b16 %v247, %v245
  %v338 = vpack.c.b16 %v248, %v246
  %v339 = vpack.c.b16 %v251, %v249
  %v340 = vpack.c.b16 %v252, %v250
  %v341 = vpack.c.b16 %v255, %v253
  %v342 = vpack.c.b16 %v256, %v254
  %v343 = vpack.c.b16 %v259, %v257
  %v344 = vpack.c.b16 %v260, %v258
  %v345 = vpack.c.b16 %v263, %v261
  %v346 = vpack.c.b16 %v264, %v262
  %v347 = vpack.c.b16 %v267, %v265
  %v348 = vpack.c.b16 %v268, %v266
  %v349 = vpack.c.b16 %v271, %v269
  %v350 = vpack.c.b16 %v272, %v270
  %v351 = vpack.c.b16 %v275, %v273
  %v352 = vpack.c.b16 %v276, %v274
  %v353 = vpack.c.b16 %v279, %v277
  %v354 = vpack.c.b16 %v280, %v278
  %v355 = vpack.c.b16 %v283, %v281
  %v356 = vpack.c.b16 %v284, %v282
  %v357 = vpack.c.b16 %v287, %v285
  %v358 = vpack.c.b16 %v288, %v286
  %v359 = vpack.c.b16 %v291, %v289
  %v360 = vpack.c.b16 %v292, %v290
  %v361 = vpack.c.b16 %v295, %v293
  %v362 = vpack.c.b16 %v296, %v294
  %v363 = vpack.c.b16 %v299, %v297
  %v364 = vpack.c.b16 %v300, %v298
  %v461 = vunpack.c.l.b16 %v77
  %v462 = vunpack.c.l.b16 %v78
  %v463 = vunpack.c.l.b16 %v79
  %v464 = vunpack.c.l.b16 %v80
  %v465 = vunpack.c.l.b16 %v81
  %v466 = vunpack.c.l.b16 %v82
  %v467 = vunpack.c.l.b16 %v83
  %v468 = vunpack.c.l.b16 %v84
  %v469 = vunpack.c.l.b16 %v85
  %v470 = vunpack.c.l.b16 %v86
  %v471 = vunpack.c.l.b16 %v87
  %v472 = vunpack.c.l.b16 %v88
  %v473 = vunpack.c.l.b16 %v89
  %v474 = vunpack.c.l.b16 %v90
  %v475 = vunpack.c.l.b16 %v91
  %v476 = vunpack.c.l.b16 %v92
  %v477 = vunpack.c.l.b16 %v93
  %v478 = vunpack.c.l.b16 %v94
  %v479 = vunpack.c.l.b16 %v95
  %v480 = vunpack.c.l.b16 %v96
  %v481 = vunpack.c.l.b16 %v97
  %v482 = vunpack.c.l.b16 %v98
  %v483 = vunpack.c.l.b16 %v99
  %v484 = vunpack.c.l.b16 %v100
  %v485 = vunpack.c.l.b16 %v101
  %v486 = vunpack.c.l.b16 %v102
  %v487 = vunpack.c.l.b16 %v103
  %v488 = vunpack.c.l.b16 %v104
  %v489 = vunpack.c.l.b16 %v105
  %v490 = vunpack.c.l.b16 %v106
  %v491 = vunpack.c.l.b16 %v107
  %v492 = vunpack.c.l.b16 %v108
  %v493 = vpack.c.b16 %v462, %v461
  %v494 = vpack.c.b16 %v464, %v463
  %v495 = vpack.c.b16 %v466, %v465
  %v496 = vpack.c.b16 %v468, %v467
  %v497 = vpack.c.b16 %v470, %v469
  %v498 = vpack.c.b16 %v472, %v471
  %v499 = vpack.c.b16 %v474, %v473
  %v500 = vpack.c.b16 %v476, %v475
  %v501 = vpack.c.b16 %v478, %v477
  %v502 = vpack.c.b16 %v480, %v479
  %v503 = vpack.c.b16 %v482, %v481
  %v504 = vpack.c.b16 %v484, %v483
  %v505 = vpack.c.b16 %v486, %v485
  %v506 = vpack.c.b16 %v488, %v487
  %v507 = vpack.c.b16 %v490, %v489
  %v508 = vpack.c.b16 %v492, %v491
  %525 = vmatpush.bf16.msra.mxu0 %v500
  %526 = vmatpush.bf16.msra.mxu0 %v499
  %527 = vmatpush.bf16.msra.mxu0 %v498
  %528 = vmatpush.bf16.msra.mxu0 %v497
  %529 = vmatpush.bf16.msra.mxu0 %v496
  %530 = vmatpush.bf16.msra.mxu0 %v495
  %531 = vmatpush.bf16.msra.mxu0 %v494
  %532 = vmatpush.bf16.msra.mxu0 %v493
  %533 = vmatmul.bf16.gmra.mxu0 %v301
  %v534 = vpop.f32.mrf.mxu0
  %v535 = vadd.f32 0.0, %v534
  %v536 = vpop.f32.mrf.mxu0
  %v537 = vadd.f32 0.0, %v536
  %538 = vmatmul.bf16.gmra.mxu0 %v303
  %v539 = vpop.f32.mrf.mxu0
  %v540 = vadd.f32 0.0, %v539
  %v541 = vpop.f32.mrf.mxu0
  %v542 = vadd.f32 0.0, %v541
  %543 = vmatmul.bf16.gmra.mxu0 %v305
  %v544 = vpop.f32.mrf.mxu0
  %v545 = vadd.f32 0.0, %v544
  %v546 = vpop.f32.mrf.mxu0
  %v547 = vadd.f32 0.0, %v546
  %548 = vmatmul.bf16.gmra.mxu0 %v307
  %v549 = vpop.f32.mrf.mxu0
  %v550 = vadd.f32 0.0, %v549
  %v551 = vpop.f32.mrf.mxu0
  %v552 = vadd.f32 0.0, %v551
  %553 = vmatmul.bf16.gmra.mxu0 %v309
  %v554 = vpop.f32.mrf.mxu0
  %v555 = vadd.f32 0.0, %v554
  %v556 = vpop.f32.mrf.mxu0
  %v557 = vadd.f32 0.0, %v556
  %558 = vmatmul.bf16.gmra.mxu0 %v311
  %v559 = vpop.f32.mrf.mxu0
  %v560 = vadd.f32 0.0, %v559
  %v561 = vpop.f32.mrf.mxu0
  %v562 = vadd.f32 0.0, %v561
  %563 = vmatmul.bf16.gmra.mxu0 %v313
  %v564 = vpop.f32.mrf.mxu0
  %v565 = vadd.f32 0.0, %v564
  %v566 = vpop.f32.mrf.mxu0
  %v567 = vadd.f32 0.0, %v566
  %568 = vmatmul.bf16.gmra.mxu0 %v315
  %v569 = vpop.f32.mrf.mxu0
  %v570 = vadd.f32 0.0, %v569
  %v571 = vpop.f32.mrf.mxu0
  %v572 = vadd.f32 0.0, %v571
  %573 = vmatmul.bf16.gmra.mxu0 %v317
  %v574 = vpop.f32.mrf.mxu0
  %v575 = vadd.f32 0.0, %v574
  %v576 = vpop.f32.mrf.mxu0
  %v577 = vadd.f32 0.0, %v576
  %578 = vmatmul.bf16.gmra.mxu0 %v319
  %v579 = vpop.f32.mrf.mxu0
  %v580 = vadd.f32 0.0, %v579
  %v581 = vpop.f32.mrf.mxu0
  %v582 = vadd.f32 0.0, %v581
  %583 = vmatmul.bf16.gmra.mxu0 %v321
  %v584 = vpop.f32.mrf.mxu0
  %v585 = vadd.f32 0.0, %v584
  %v586 = vpop.f32.mrf.mxu0
  %v587 = vadd.f32 0.0, %v586
  %588 = vmatmul.bf16.gmra.mxu0 %v323
  %v589 = vpop.f32.mrf.mxu0
  %v590 = vadd.f32 0.0, %v589
  %v591 = vpop.f32.mrf.mxu0
  %v592 = vadd.f32 0.0, %v591
  %593 = vmatmul.bf16.gmra.mxu0 %v325
  %v594 = vpop.f32.mrf.mxu0
  %v595 = vadd.f32 0.0, %v594
  %v596 = vpop.f32.mrf.mxu0
  %v597 = vadd.f32 0.0, %v596
  %598 = vmatmul.bf16.gmra.mxu0 %v327
  %v599 = vpop.f32.mrf.mxu0
  %v600 = vadd.f32 0.0, %v599
  %v601 = vpop.f32.mrf.mxu0
  %v602 = vadd.f32 0.0, %v601
  %603 = vmatmul.bf16.gmra.mxu0 %v329
  %v604 = vpop.f32.mrf.mxu0
  %v605 = vadd.f32 0.0, %v604
  %v606 = vpop.f32.mrf.mxu0
  %v607 = vadd.f32 0.0, %v606
  %608 = vmatmul.bf16.gmra.mxu0 %v331
  %v609 = vpop.f32.mrf.mxu0
  %v610 = vadd.f32 0.0, %v609
  %v611 = vpop.f32.mrf.mxu0
  %v612 = vadd.f32 0.0, %v611
  %613 = vmatmul.bf16.gmra.mxu0 %v333
  %v614 = vpop.f32.mrf.mxu0
  %v615 = vadd.f32 0.0, %v614
  %v616 = vpop.f32.mrf.mxu0
  %v617 = vadd.f32 0.0, %v616
  %618 = vmatmul.bf16.gmra.mxu0 %v335
  %v619 = vpop.f32.mrf.mxu0
  %v620 = vadd.f32 0.0, %v619
  %v621 = vpop.f32.mrf.mxu0
  %v622 = vadd.f32 0.0, %v621
  %623 = vmatmul.bf16.gmra.mxu0 %v337
  %v624 = vpop.f32.mrf.mxu0
  %v625 = vadd.f32 0.0, %v624
  %v626 = vpop.f32.mrf.mxu0
  %v627 = vadd.f32 0.0, %v626
  %628 = vmatmul.bf16.gmra.mxu0 %v339
  %v629 = vpop.f32.mrf.mxu0
  %v630 = vadd.f32 0.0, %v629
  %v631 = vpop.f32.mrf.mxu0
  %v632 = vadd.f32 0.0, %v631
  %633 = vmatmul.bf16.gmra.mxu0 %v341
  %v634 = vpop.f32.mrf.mxu0
  %v635 = vadd.f32 0.0, %v634
  %v636 = vpop.f32.mrf.mxu0
  %v637 = vadd.f32 0.0, %v636
  %638 = vmatmul.bf16.gmra.mxu0 %v343
  %v639 = vpop.f32.mrf.mxu0
  %v640 = vadd.f32 0.0, %v639
  %v641 = vpop.f32.mrf.mxu0
  %v642 = vadd.f32 0.0, %v641
  %643 = vmatmul.bf16.gmra.mxu0 %v345
  %v644 = vpop.f32.mrf.mxu0
  %v645 = vadd.f32 0.0, %v644
  %v646 = vpop.f32.mrf.mxu0
  %v647 = vadd.f32 0.0, %v646
  %648 = vmatmul.bf16.gmra.mxu0 %v347
  %v649 = vpop.f32.mrf.mxu0
  %v650 = vadd.f32 0.0, %v649
  %v651 = vpop.f32.mrf.mxu0
  %v652 = vadd.f32 0.0, %v651
  %653 = vmatmul.bf16.gmra.mxu0 %v349
  %v654 = vpop.f32.mrf.mxu0
  %v655 = vadd.f32 0.0, %v654
  %v656 = vpop.f32.mrf.mxu0
  %v657 = vadd.f32 0.0, %v656
  %658 = vmatmul.bf16.gmra.mxu0 %v351
  %v659 = vpop.f32.mrf.mxu0
  %v660 = vadd.f32 0.0, %v659
  %v661 = vpop.f32.mrf.mxu0
  %v662 = vadd.f32 0.0, %v661
  %663 = vmatmul.bf16.gmra.mxu0 %v353
  %v664 = vpop.f32.mrf.mxu0
  %v665 = vadd.f32 0.0, %v664
  %v666 = vpop.f32.mrf.mxu0
  %v667 = vadd.f32 0.0, %v666
  %668 = vmatmul.bf16.gmra.mxu0 %v355
  %v669 = vpop.f32.mrf.mxu0
  %v670 = vadd.f32 0.0, %v669
  %v671 = vpop.f32.mrf.mxu0
  %v672 = vadd.f32 0.0, %v671
  %673 = vmatmul.bf16.gmra.mxu0 %v357
  %v674 = vpop.f32.mrf.mxu0
  %v675 = vadd.f32 0.0, %v674
  %v676 = vpop.f32.mrf.mxu0
  %v677 = vadd.f32 0.0, %v676
  %678 = vmatmul.bf16.gmra.mxu0 %v359
  %v679 = vpop.f32.mrf.mxu0
  %v680 = vadd.f32 0.0, %v679
  %v681 = vpop.f32.mrf.mxu0
  %v682 = vadd.f32 0.0, %v681
  %683 = vmatmul.bf16.gmra.mxu0 %v361
  %v684 = vpop.f32.mrf.mxu0
  %v685 = vadd.f32 0.0, %v684
  %v686 = vpop.f32.mrf.mxu0
  %v687 = vadd.f32 0.0, %v686
  %688 = vmatmul.bf16.gmra.mxu0 %v363
  %v689 = vpop.f32.mrf.mxu0
  %v690 = vadd.f32 0.0, %v689
  %v691 = vpop.f32.mrf.mxu0
  %v692 = vadd.f32 0.0, %v691
  %693 = vdwg.mxu0
  %694 = vmatpush.bf16.msra.mxu0 %v508
  %695 = vmatpush.bf16.msra.mxu0 %v507
  %696 = vmatpush.bf16.msra.mxu0 %v506
  %697 = vmatpush.bf16.msra.mxu0 %v505
  %698 = vmatpush.bf16.msra.mxu0 %v504
  %699 = vmatpush.bf16.msra.mxu0 %v503
  %700 = vmatpush.bf16.msra.mxu0 %v502
  %701 = vmatpush.bf16.msra.mxu0 %v501
  %702 = vmatmul.bf16.gmra.mxu0 %v302
  %v703 = vpop.f32.mrf.mxu0
  %v704 = vadd.f32 %v535, %v703
  %v705 = vpop.f32.mrf.mxu0
  %v706 = vadd.f32 %v537, %v705
  %707 = vmatmul.bf16.gmra.mxu0 %v304
  %v708 = vpop.f32.mrf.mxu0
  %v709 = vadd.f32 %v540, %v708
  %v710 = vpop.f32.mrf.mxu0
  %v711 = vadd.f32 %v542, %v710
  %712 = vmatmul.bf16.gmra.mxu0 %v306
  %v713 = vpop.f32.mrf.mxu0
  %v714 = vadd.f32 %v545, %v713
  %v715 = vpop.f32.mrf.mxu0
  %v716 = vadd.f32 %v547, %v715
  %717 = vmatmul.bf16.gmra.mxu0 %v308
  %v718 = vpop.f32.mrf.mxu0
  %v719 = vadd.f32 %v550, %v718
  %v720 = vpop.f32.mrf.mxu0
  %v721 = vadd.f32 %v552, %v720
  %722 = vmatmul.bf16.gmra.mxu0 %v310
  %v723 = vpop.f32.mrf.mxu0
  %v724 = vadd.f32 %v555, %v723
  %v725 = vpop.f32.mrf.mxu0
  %v726 = vadd.f32 %v557, %v725
  %727 = vmatmul.bf16.gmra.mxu0 %v312
  %v728 = vpop.f32.mrf.mxu0
  %v729 = vadd.f32 %v560, %v728
  %v730 = vpop.f32.mrf.mxu0
  %v731 = vadd.f32 %v562, %v730
  %732 = vmatmul.bf16.gmra.mxu0 %v314
  %v733 = vpop.f32.mrf.mxu0
  %v734 = vadd.f32 %v565, %v733
  %v735 = vpop.f32.mrf.mxu0
  %v736 = vadd.f32 %v567, %v735
  %737 = vmatmul.bf16.gmra.mxu0 %v316
  %v738 = vpop.f32.mrf.mxu0
  %v739 = vadd.f32 %v570, %v738
  %v740 = vpop.f32.mrf.mxu0
  %v741 = vadd.f32 %v572, %v740
  %742 = vmatmul.bf16.gmra.mxu0 %v318
  %v743 = vpop.f32.mrf.mxu0
  %v744 = vadd.f32 %v575, %v743
  %v745 = vpop.f32.mrf.mxu0
  %v746 = vadd.f32 %v577, %v745
  %747 = vmatmul.bf16.gmra.mxu0 %v320
  %v748 = vpop.f32.mrf.mxu0
  %v749 = vadd.f32 %v580, %v748
  %v750 = vpop.f32.mrf.mxu0
  %v751 = vadd.f32 %v582, %v750
  %752 = vmatmul.bf16.gmra.mxu0 %v322
  %v753 = vpop.f32.mrf.mxu0
  %v754 = vadd.f32 %v585, %v753
  %v755 = vpop.f32.mrf.mxu0
  %v756 = vadd.f32 %v587, %v755
  %757 = vmatmul.bf16.gmra.mxu0 %v324
  %v758 = vpop.f32.mrf.mxu0
  %v759 = vadd.f32 %v590, %v758
  %v760 = vpop.f32.mrf.mxu0
  %v761 = vadd.f32 %v592, %v760
  %762 = vmatmul.bf16.gmra.mxu0 %v326
  %v763 = vpop.f32.mrf.mxu0
  %v764 = vadd.f32 %v595, %v763
  %v765 = vpop.f32.mrf.mxu0
  %v766 = vadd.f32 %v597, %v765
  %767 = vmatmul.bf16.gmra.mxu0 %v328
  %v768 = vpop.f32.mrf.mxu0
  %v769 = vadd.f32 %v600, %v768
  %v770 = vpop.f32.mrf.mxu0
  %v771 = vadd.f32 %v602, %v770
  %772 = vmatmul.bf16.gmra.mxu0 %v330
  %v773 = vpop.f32.mrf.mxu0
  %v774 = vadd.f32 %v605, %v773
  %v775 = vpop.f32.mrf.mxu0
  %v776 = vadd.f32 %v607, %v775
  %777 = vmatmul.bf16.gmra.mxu0 %v332
  %v778 = vpop.f32.mrf.mxu0
  %v779 = vadd.f32 %v610, %v778
  %v780 = vpop.f32.mrf.mxu0
  %v781 = vadd.f32 %v612, %v780
  %782 = vmatmul.bf16.gmra.mxu0 %v334
  %v783 = vpop.f32.mrf.mxu0
  %v784 = vadd.f32 %v615, %v783
  %v785 = vpop.f32.mrf.mxu0
  %v786 = vadd.f32 %v617, %v785
  %787 = vmatmul.bf16.gmra.mxu0 %v336
  %v788 = vpop.f32.mrf.mxu0
  %v789 = vadd.f32 %v620, %v788
  %v790 = vpop.f32.mrf.mxu0
  %v791 = vadd.f32 %v622, %v790
  %792 = vmatmul.bf16.gmra.mxu0 %v338
  %v793 = vpop.f32.mrf.mxu0
  %v794 = vadd.f32 %v625, %v793
  %v795 = vpop.f32.mrf.mxu0
  %v796 = vadd.f32 %v627, %v795
  %797 = vmatmul.bf16.gmra.mxu0 %v340
  %v798 = vpop.f32.mrf.mxu0
  %v799 = vadd.f32 %v630, %v798
  %v800 = vpop.f32.mrf.mxu0
  %v801 = vadd.f32 %v632, %v800
  %802 = vmatmul.bf16.gmra.mxu0 %v342
  %v803 = vpop.f32.mrf.mxu0
  %v804 = vadd.f32 %v635, %v803
  %v805 = vpop.f32.mrf.mxu0
  %v806 = vadd.f32 %v637, %v805
  %807 = vmatmul.bf16.gmra.mxu0 %v344
  %v808 = vpop.f32.mrf.mxu0
  %v809 = vadd.f32 %v640, %v808
  %v810 = vpop.f32.mrf.mxu0
  %v811 = vadd.f32 %v642, %v810
  %812 = vmatmul.bf16.gmra.mxu0 %v346
  %v813 = vpop.f32.mrf.mxu0
  %v814 = vadd.f32 %v645, %v813
  %v815 = vpop.f32.mrf.mxu0
  %v816 = vadd.f32 %v647, %v815
  %817 = vmatmul.bf16.gmra.mxu0 %v348
  %v818 = vpop.f32.mrf.mxu0
  %v819 = vadd.f32 %v650, %v818
  %v820 = vpop.f32.mrf.mxu0
  %v821 = vadd.f32 %v652, %v820
  %822 = vmatmul.bf16.gmra.mxu0 %v350
  %v823 = vpop.f32.mrf.mxu0
  %v824 = vadd.f32 %v655, %v823
  %v825 = vpop.f32.mrf.mxu0
  %v826 = vadd.f32 %v657, %v825
  %827 = vmatmul.bf16.gmra.mxu0 %v352
  %v828 = vpop.f32.mrf.mxu0
  %v829 = vadd.f32 %v660, %v828
  %v830 = vpop.f32.mrf.mxu0
  %v831 = vadd.f32 %v662, %v830
  %832 = vmatmul.bf16.gmra.mxu0 %v354
  %v833 = vpop.f32.mrf.mxu0
  %v834 = vadd.f32 %v665, %v833
  %v835 = vpop.f32.mrf.mxu0
  %v836 = vadd.f32 %v667, %v835
  %837 = vmatmul.bf16.gmra.mxu0 %v356
  %v838 = vpop.f32.mrf.mxu0
  %v839 = vadd.f32 %v670, %v838
  %v840 = vpop.f32.mrf.mxu0
  %v841 = vadd.f32 %v672, %v840
  %842 = vmatmul.bf16.gmra.mxu0 %v358
  %v843 = vpop.f32.mrf.mxu0
  %v844 = vadd.f32 %v675, %v843
  %v845 = vpop.f32.mrf.mxu0
  %v846 = vadd.f32 %v677, %v845
  %847 = vmatmul.bf16.gmra.mxu0 %v360
  %v848 = vpop.f32.mrf.mxu0
  %v849 = vadd.f32 %v680, %v848
  %v850 = vpop.f32.mrf.mxu0
  %v851 = vadd.f32 %v682, %v850
  %852 = vmatmul.bf16.gmra.mxu0 %v362
  %v853 = vpop.f32.mrf.mxu0
  %v854 = vadd.f32 %v685, %v853
  %v855 = vpop.f32.mrf.mxu0
  %v856 = vadd.f32 %v687, %v855
  %857 = vmatmul.bf16.gmra.mxu0 %v364
  %v858 = vpop.f32.mrf.mxu0
  %v859 = vadd.f32 %v690, %v858
  %v860 = vpop.f32.mrf.mxu0
  %v861 = vadd.f32 %v692, %v860
  %862 = vdwg.mxu0
  %863 = vst [vmem:[%s2] sm:$0xff] %v704
  %864 = vst [vmem:[%s2 + $0x8] sm:$0xff] %v706
  %865 = vst [vmem:[%s2 + $0x10] sm:$0xff] %v709
  %866 = vst [vmem:[%s2 + $0x18] sm:$0xff] %v711
  %867 = vst [vmem:[%s2 + $0x20] sm:$0xff] %v714
  %868 = vst [vmem:[%s2 + $0x28] sm:$0xff] %v716
  %869 = vst [vmem:[%s2 + $0x30] sm:$0xff] %v719
  %870 = vst [vmem:[%s2 + $0x38] sm:$0xff] %v721
  %871 = vst [vmem:[%s2 + $0x40] sm:$0xff] %v724
  %872 = vst [vmem:[%s2 + $0x48] sm:$0xff] %v726
  %873 = vst [vmem:[%s2 + $0x50] sm:$0xff] %v729
  %874 = vst [vmem:[%s2 + $0x58] sm:$0xff] %v731
  %875 = vst [vmem:[%s2 + $0x60] sm:$0xff] %v734
  %876 = vst [vmem:[%s2 + $0x68] sm:$0xff] %v736
  %877 = vst [vmem:[%s2 + $0x70] sm:$0xff] %v739
  %878 = vst [vmem:[%s2 + $0x78] sm:$0xff] %v741
  %879 = vst [vmem:[%s2 + $0x80] sm:$0xff] %v744
  %880 = vst [vmem:[%s2 + $0x88] sm:$0xff] %v746
  %881 = vst [vmem:[%s2 + $0x90] sm:$0xff] %v749
  %882 = vst [vmem:[%s2 + $0x98] sm:$0xff] %v751
  %883 = vst [vmem:[%s2 + $0xa0] sm:$0xff] %v754
  %884 = vst [vmem:[%s2 + $0xa8] sm:$0xff] %v756
  %885 = vst [vmem:[%s2 + $0xb0] sm:$0xff] %v759
  %886 = vst [vmem:[%s2 + $0xb8] sm:$0xff] %v761
  %887 = vst [vmem:[%s2 + $0xc0] sm:$0xff] %v764
  %888 = vst [vmem:[%s2 + $0xc8] sm:$0xff] %v766
  %889 = vst [vmem:[%s2 + $0xd0] sm:$0xff] %v769
  %890 = vst [vmem:[%s2 + $0xd8] sm:$0xff] %v771
  %891 = vst [vmem:[%s2 + $0xe0] sm:$0xff] %v774
  %892 = vst [vmem:[%s2 + $0xe8] sm:$0xff] %v776
  %893 = vst [vmem:[%s2 + $0xf0] sm:$0xff] %v779
  %894 = vst [vmem:[%s2 + $0xf8] sm:$0xff] %v781
  %895 = vst [vmem:[%s2 + $0x100] sm:$0xff] %v784
  %896 = vst [vmem:[%s2 + $0x108] sm:$0xff] %v786
  %897 = vst [vmem:[%s2 + $0x110] sm:$0xff] %v789
  %898 = vst [vmem:[%s2 + $0x118] sm:$0xff] %v791
  %899 = vst [vmem:[%s2 + $0x120] sm:$0xff] %v794
  %900 = vst [vmem:[%s2 + $0x128] sm:$0xff] %v796
  %901 = vst [vmem:[%s2 + $0x130] sm:$0xff] %v799
  %902 = vst [vmem:[%s2 + $0x138] sm:$0xff] %v801
  %903 = vst [vmem:[%s2 + $0x140] sm:$0xff] %v804
  %904 = vst [vmem:[%s2 + $0x148] sm:$0xff] %v806
  %905 = vst [vmem:[%s2 + $0x150] sm:$0xff] %v809
  %906 = vst [vmem:[%s2 + $0x158] sm:$0xff] %v811
  %907 = vst [vmem:[%s2 + $0x160] sm:$0xff] %v814
  %908 = vst [vmem:[%s2 + $0x168] sm:$0xff] %v816
  %909 = vst [vmem:[%s2 + $0x170] sm:$0xff] %v819
  %910 = vst [vmem:[%s2 + $0x178] sm:$0xff] %v821
  %911 = vst [vmem:[%s2 + $0x180] sm:$0xff] %v824
  %912 = vst [vmem:[%s2 + $0x188] sm:$0xff] %v826
  %913 = vst [vmem:[%s2 + $0x190] sm:$0xff] %v829
  %914 = vst [vmem:[%s2 + $0x198] sm:$0xff] %v831
  %915 = vst [vmem:[%s2 + $0x1a0] sm:$0xff] %v834
  %916 = vst [vmem:[%s2 + $0x1a8] sm:$0xff] %v836
  %917 = vst [vmem:[%s2 + $0x1b0] sm:$0xff] %v839
  %918 = vst [vmem:[%s2 + $0x1b8] sm:$0xff] %v841
  %919 = vst [vmem:[%s2 + $0x1c0] sm:$0xff] %v844
  %920 = vst [vmem:[%s2 + $0x1c8] sm:$0xff] %v846
  %921 = vst [vmem:[%s2 + $0x1d0] sm:$0xff] %v849
  %922 = vst [vmem:[%s2 + $0x1d8] sm:$0xff] %v851
  %923 = vst [vmem:[%s2 + $0x1e0] sm:$0xff] %v854
  %924 = vst [vmem:[%s2 + $0x1e8] sm:$0xff] %v856
  %925 = vst [vmem:[%s2 + $0x1f0] sm:$0xff] %v859
  %926 = vst [vmem:[%s2 + $0x1f8] sm:$0xff] %v861
  %v927 = vadd.f32 %v704, %v706
  %v928 = vadd.f32 %v927, %v709
  %v929 = vadd.f32 %v928, %v711
  %v930 = vadd.f32 %v929, %v714
  %v931 = vadd.f32 %v930, %v716
  %v932 = vadd.f32 %v931, %v719
  %v933 = vadd.f32 %v932, %v721
  %v934 = vadd.f32 %v933, %v724
  %v935 = vadd.f32 %v934, %v726
  %v936 = vadd.f32 %v935, %v729
  %v937 = vadd.f32 %v936, %v731
  %v938 = vadd.f32 %v937, %v734
  %v939 = vadd.f32 %v938, %v736
  %v940 = vadd.f32 %v939, %v739
  %v941 = vadd.f32 %v940, %v741
  %v942 = vadd.f32 %v941, %v744
  %v943 = vadd.f32 %v942, %v746
  %v944 = vadd.f32 %v943, %v749
  %v945 = vadd.f32 %v944, %v751
  %v946 = vadd.f32 %v945, %v754
  %v947 = vadd.f32 %v946, %v756
  %v948 = vadd.f32 %v947, %v759
  %v949 = vadd.f32 %v948, %v761
  %v950 = vadd.f32 %v949, %v764
  %v951 = vadd.f32 %v950, %v766
  %v952 = vadd.f32 %v951, %v769
  %v953 = vadd.f32 %v952, %v771
  %v954 = vadd.f32 %v953, %v774
  %v955 = vadd.f32 %v954, %v776
  %v956 = vadd.f32 %v955, %v779
  %v957 = vadd.f32 %v956, %v781
  %v958 = vadd.f32 %v957, %v784
  %v959 = vadd.f32 %v958, %v786
  %v960 = vadd.f32 %v959, %v789
  %v961 = vadd.f32 %v960, %v791
  %v962 = vadd.f32 %v961, %v794
  %v963 = vadd.f32 %v962, %v796
  %v964 = vadd.f32 %v963, %v799
  %v965 = vadd.f32 %v964, %v801
  %v966 = vadd.f32 %v965, %v804
  %v967 = vadd.f32 %v966, %v806
  %v968 = vadd.f32 %v967, %v809
  %v969 = vadd.f32 %v968, %v811
  %v970 = vadd.f32 %v969, %v814
  %v971 = vadd.f32 %v970, %v816
  %v972 = vadd.f32 %v971, %v819
  %v973 = vadd.f32 %v972, %v821
  %v974 = vadd.f32 %v973, %v824
  %v975 = vadd.f32 %v974, %v826
  %v976 = vadd.f32 %v975, %v829
  %v977 = vadd.f32 %v976, %v831
  %v978 = vadd.f32 %v977, %v834
  %v979 = vadd.f32 %v978, %v836
  %v980 = vadd.f32 %v979, %v839
  %v981 = vadd.f32 %v980, %v841
  %v982 = vadd.f32 %v981, %v844
  %v983 = vadd.f32 %v982, %v846
  %v984 = vadd.f32 %v983, %v849
  %v985 = vadd.f32 %v984, %v851
  %v986 = vadd.f32 %v985, %v854
  %v987 = vadd.f32 %v986, %v856
  %v988 = vadd.f32 %v987, %v859
  %v989 = vadd.f32 %v988, %v861
  %v990 = vrot.slane %v989, 4
  %v991 = vadd.f32 %v989, %v990
  %v992 = vrot.slane %v991, 2
  %v993 = vadd.f32 %v991, %v992
  %v994 = vrot.slane %v993, 1
  %v995 = vadd.f32 %v993, %v994
  %v996 = vmul.f32 %v704, %v704
  %v997 = vmul.f32 %v706, %v706
  %v998 = vmul.f32 %v709, %v709
  %v999 = vmul.f32 %v711, %v711
  %v1000 = vmul.f32 %v714, %v714
  %v1001 = vmul.f32 %v716, %v716
  %v1002 = vmul.f32 %v719, %v719
  %v1003 = vmul.f32 %v721, %v721
  %v1004 = vmul.f32 %v724, %v724
  %v1005 = vmul.f32 %v726, %v726
  %v1006 = vmul.f32 %v729, %v729
  %v1007 = vmul.f32 %v731, %v731
  %v1008 = vmul.f32 %v734, %v734
  %v1009 = vmul.f32 %v736, %v736
  %v1010 = vmul.f32 %v739, %v739
  %v1011 = vmul.f32 %v741, %v741
  %v1012 = vmul.f32 %v744, %v744
  %v1013 = vmul.f32 %v746, %v746
  %v1014 = vmul.f32 %v749, %v749
  %v1015 = vmul.f32 %v751, %v751
  %v1016 = vmul.f32 %v754, %v754
  %v1017 = vmul.f32 %v756, %v756
  %v1018 = vmul.f32 %v759, %v759
  %v1019 = vmul.f32 %v761, %v761
  %v1020 = vmul.f32 %v764, %v764
  %v1021 = vmul.f32 %v766, %v766
  %v1022 = vmul.f32 %v769, %v769
  %v1023 = vmul.f32 %v771, %v771
  %v1024 = vmul.f32 %v774, %v774
  %v1025 = vmul.f32 %v776, %v776
  %v1026 = vmul.f32 %v779, %v779
  %v1027 = vmul.f32 %v781, %v781
  %v1028 = vmul.f32 %v784, %v784
  %v1029 = vmul.f32 %v786, %v786
  %v1030 = vmul.f32 %v789, %v789
  %v1031 = vmul.f32 %v791, %v791
  %v1032 = vmul.f32 %v794, %v794
  %v1033 = vmul.f32 %v796, %v796
  %v1034 = vmul.f32 %v799, %v799
  %v1035 = vmul.f32 %v801, %v801
  %v1036 = vmul.f32 %v804, %v804
  %v1037 = vmul.f32 %v806, %v806
  %v1038 = vmul.f32 %v809, %v809
  %v1039 = vmul.f32 %v811, %v811
  %v1040 = vmul.f32 %v814, %v814
  %v1041 = vmul.f32 %v816, %v816
  %v1042 = vmul.f32 %v819, %v819
  %v1043 = vmul.f32 %v821, %v821
  %v1044 = vmul.f32 %v824, %v824
  %v1045 = vmul.f32 %v826, %v826
  %v1046 = vmul.f32 %v829, %v829
  %v1047 = vmul.f32 %v831, %v831
  %v1048 = vmul.f32 %v834, %v834
  %v1049 = vmul.f32 %v836, %v836
  %v1050 = vmul.f32 %v839, %v839
  %v1051 = vmul.f32 %v841, %v841
  %v1052 = vmul.f32 %v844, %v844
  %v1053 = vmul.f32 %v846, %v846
  %v1054 = vmul.f32 %v849, %v849
  %v1055 = vmul.f32 %v851, %v851
  %v1056 = vmul.f32 %v854, %v854
  %v1057 = vmul.f32 %v856, %v856
  %v1058 = vmul.f32 %v859, %v859
  %v1059 = vmul.f32 %v861, %v861
  %v1060 = vadd.f32 %v996, %v997
  %v1061 = vadd.f32 %v1060, %v998
  %v1062 = vadd.f32 %v1061, %v999
  %v1063 = vadd.f32 %v1062, %v1000
  %v1064 = vadd.f32 %v1063, %v1001
  %v1065 = vadd.f32 %v1064, %v1002
  %v1066 = vadd.f32 %v1065, %v1003
  %v1067 = vadd.f32 %v1066, %v1004
  %v1068 = vadd.f32 %v1067, %v1005
  %v1069 = vadd.f32 %v1068, %v1006
  %v1070 = vadd.f32 %v1069, %v1007
  %v1071 = vadd.f32 %v1070, %v1008
  %v1072 = vadd.f32 %v1071, %v1009
  %v1073 = vadd.f32 %v1072, %v1010
  %v1074 = vadd.f32 %v1073, %v1011
  %v1075 = vadd.f32 %v1074, %v1012
  %v1076 = vadd.f32 %v1075, %v1013
  %v1077 = vadd.f32 %v1076, %v1014
  %v1078 = vadd.f32 %v1077, %v1015
  %v1079 = vadd.f32 %v1078, %v1016
  %v1080 = vadd.f32 %v1079, %v1017
  %v1081 = vadd.f32 %v1080, %v1018
  %v1082 = vadd.f32 %v1081, %v1019
  %v1083 = vadd.f32 %v1082, %v1020
  %v1084 = vadd.f32 %v1083, %v1021
  %v1085 = vadd.f32 %v1084, %v1022
  %v1086 = vadd.f32 %v1085, %v1023
  %v1087 = vadd.f32 %v1086, %v1024
  %v1088 = vadd.f32 %v1087, %v1025
  %v1089 = vadd.f32 %v1088, %v1026
  %v1090 = vadd.f32 %v1089, %v1027
  %v1091 = vadd.f32 %v1090, %v1028
  %v1092 = vadd.f32 %v1091, %v1029
  %v1093 = vadd.f32 %v1092, %v1030
  %v1094 = vadd.f32 %v1093, %v1031
  %v1095 = vadd.f32 %v1094, %v1032
  %v1096 = vadd.f32 %v1095, %v1033
  %v1097 = vadd.f32 %v1096, %v1034
  %v1098 = vadd.f32 %v1097, %v1035
  %v1099 = vadd.f32 %v1098, %v1036
  %v1100 = vadd.f32 %v1099, %v1037
  %v1101 = vadd.f32 %v1100, %v1038
  %v1102 = vadd.f32 %v1101, %v1039
  %v1103 = vadd.f32 %v1102, %v1040
  %v1104 = vadd.f32 %v1103, %v1041
  %v1105 = vadd.f32 %v1104, %v1042
  %v1106 = vadd.f32 %v1105, %v1043
  %v1107 = vadd.f32 %v1106, %v1044
  %v1108 = vadd.f32 %v1107, %v1045
  %v1109 = vadd.f32 %v1108, %v1046
  %v1110 = vadd.f32 %v1109, %v1047
  %v1111 = vadd.f32 %v1110, %v1048
  %v1112 = vadd.f32 %v1111, %v1049
  %v1113 = vadd.f32 %v1112, %v1050
  %v1114 = vadd.f32 %v1113, %v1051
  %v1115 = vadd.f32 %v1114, %v1052
  %v1116 = vadd.f32 %v1115, %v1053
  %v1117 = vadd.f32 %v1116, %v1054
  %v1118 = vadd.f32 %v1117, %v1055
  %v1119 = vadd.f32 %v1118, %v1056
  %v1120 = vadd.f32 %v1119, %v1057
  %v1121 = vadd.f32 %v1120, %v1058
  %v1122 = vadd.f32 %v1121, %v1059
  %v1123 = vrot.slane %v1122, 4
  %v1124 = vadd.f32 %v1122, %v1123
  %v1125 = vrot.slane %v1124, 2
  %v1126 = vadd.f32 %v1124, %v1125
  %v1127 = vrot.slane %v1126, 1
  %v1128 = vadd.f32 %v1126, %v1127
  %v1129 = vlaneseq
  %v1130 = vshrl.u32 %v1129, 7
  %vm1131 = vcmp.eq.s32.totalorder %v1130, 0
  %vm1132 = vcmp.eq.s32.totalorder %v1130, 1
  %v1133 = vsel %vm1132, %v1128, 0.0
  %v1134 = vsel %vm1131, %v995, %v1133
  %1135 = vst [vmem:[%s3] sm:$0xff] %v1134
  // Predicated region
  $region10: #{_lambda_.19} parent=0 // pred_check
    _
  $region11: #{_lambda_.19} parent=0 // pred_check_branch
    %1137 = sbr.rel (0) target = $region13
  $region12: #{_lambda_.19} parent=0 // pred_region
    _
  $region13: #{_lambda_.19} parent=0 // pred_fallthru
    _
  // Predicated region
  $region14: #{_lambda_.19} parent=0 // pred_check
    _
  $region15: #{_lambda_.19} parent=0 // pred_check_branch
    %1139 = sbr.rel (0) target = $region17
  $region16: #{_lambda_.19} parent=0 // pred_region
    _
  $region17: #{_lambda_.19} parent=0 // pred_fallthru
    _
  // Predicated region
  $region18: #{_lambda_.19} parent=0 // pred_check
    _
  $region19: #{_lambda_.19} parent=0 // pred_check_branch
    %1141 = sbr.rel (0) target = $region21
  $region20: #{_lambda_.19} parent=0 // pred_region
    _
  $region21: #{_lambda_.19} parent=0 // pred_fallthru
    _
  // Predicated region
  $region22: #{_lambda_.19} parent=0 // pred_check
    _
  $region23: #{_lambda_.19} parent=0 // pred_check_branch
    %1143 = sbr.rel (0) target = $region25
  $region24: #{_lambda_.19} parent=0 // pred_region
    _
  $region25: #{_lambda_.19} parent=0 // pred_fallthru
    _

// kernel: _lambda_.21
$region0: #{_lambda_.21}
  #allocation0 [shape = 'u32[]', space=smem, size = 0x4, offset = 0x4, fixed_abs, tag = 'smem constant byte address 0x4 - core index']
  #allocation1 [shape = 'u32[72,128]{1,0:T(1,128)}', space=vmem, size = 0x9000, scoped, tag = 'internal scratch']
  %s0 = inlined_call_operand.vmem [shape: bf16[128,128], index: 0, kind: input, shape index: {}]
  %s1 = inlined_call_operand.vmem [shape: bf16[128,128], index: 1, kind: input, shape index: {}]
  %s2 = inlined_call_operand.vmem [shape: f32[128,128], index: 2, kind: output, shape index: {0}]
  %s3 = inlined_call_operand.vmem [shape: f32[8,128], index: 3, kind: output, shape index: {1}]
  %4 = xla_tuple %s2, %s3
  %s5 = sld [smem:[#allocation0]]
  $region26: #{_lambda_.21} parent=0
    _
  %s7 = ssub.s32 1, %s5
  %s8 = scalar_select 0, %s7, %s5
  // Predicated region
  $region2: #{_lambda_.21} parent=0 // pred_check
    _
  $region3: #{_lambda_.21} parent=0 // pred_check_branch
    %10 = sbr.rel (0) target = $region5
  $region4: #{_lambda_.21} parent=0 // pred_region
    _
  $region5: #{_lambda_.21} parent=0 // pred_fallthru
    _
  // Predicated region
  $region6: #{_lambda_.21} parent=0 // pred_check
    _
  $region7: #{_lambda_.21} parent=0 // pred_check_branch
    %12 = sbr.rel (0) target = $region9
  $region8: #{_lambda_.21} parent=0 // pred_region
    _
  $region9: #{_lambda_.21} parent=0 // pred_fallthru
    _
  %v13 = vld [vmem:[%s0] sm:$0xf]
  %v14 = vld [vmem:[%s0 + $0x4] sm:$0xf]
  %v15 = vld [vmem:[%s0 + $0x8] sm:$0xf]
  %v16 = vld [vmem:[%s0 + $0xc] sm:$0xf]
  %v17 = vld [vmem:[%s0 + $0x10] sm:$0xf]
  %v18 = vld [vmem:[%s0 + $0x14] sm:$0xf]
  %v19 = vld [vmem:[%s0 + $0x18] sm:$0xf]
  %v20 = vld [vmem:[%s0 + $0x1c] sm:$0xf]
  %v21 = vld [vmem:[%s0 + $0x20] sm:$0xf]
  %v22 = vld [vmem:[%s0 + $0x24] sm:$0xf]
  %v23 = vld [vmem:[%s0 + $0x28] sm:$0xf]
  %v24 = vld [vmem:[%s0 + $0x2c] sm:$0xf]
  %v25 = vld [vmem:[%s0 + $0x30] sm:$0xf]
  %v26 = vld [vmem:[%s0 + $0x34] sm:$0xf]
  %v27 = vld [vmem:[%s0 + $0x38] sm:$0xf]
  %v28 = vld [vmem:[%s0 + $0x3c] sm:$0xf]
  %v29 = vld [vmem:[%s1] sm:$0xf]
  %v30 = vld [vmem:[%s1 + $0x4] sm:$0xf]
  %v31 = vld [vmem:[%s1 + $0x8] sm:$0xf]
  %v32 = vld [vmem:[%s1 + $0xc] sm:$0xf]
  %v33 = vld [vmem:[%s1 + $0x10] sm:$0xf]
  %v34 = vld [vmem:[%s1 + $0x14] sm:$0xf]
  %v35 = vld [vmem:[%s1 + $0x18] sm:$0xf]
  %v36 = vld [vmem:[%s1 + $0x1c] sm:$0xf]
  %v37 = vld [vmem:[%s1 + $0x20] sm:$0xf]
  %v38 = vld [vmem:[%s1 + $0x24] sm:$0xf]
  %v39 = vld [vmem:[%s1 + $0x28] sm:$0xf]
  %v40 = vld [vmem:[%s1 + $0x2c] sm:$0xf]
  %v41 = vld [vmem:[%s1 + $0x30] sm:$0xf]
  %v42 = vld [vmem:[%s1 + $0x34] sm:$0xf]
  %v43 = vld [vmem:[%s1 + $0x38] sm:$0xf]
  %v44 = vld [vmem:[%s1 + $0x3c] sm:$0xf]
  %v61 = vunpack.c.l.b16 %v13
  %v62 = vunpack.c.l.b16 %v14
  %v63 = vunpack.c.l.b16 %v15
  %v64 = vunpack.c.l.b16 %v16
  %v65 = vunpack.c.l.b16 %v17
  %v66 = vunpack.c.l.b16 %v18
  %v67 = vunpack.c.l.b16 %v19
  %v68 = vunpack.c.l.b16 %v20
  %v69 = vunpack.c.l.b16 %v21
  %v70 = vunpack.c.l.b16 %v22
  %v71 = vunpack.c.l.b16 %v23
  %v72 = vunpack.c.l.b16 %v24
  %v73 = vunpack.c.l.b16 %v25
  %v74 = vunpack.c.l.b16 %v26
  %v75 = vunpack.c.l.b16 %v27
  %v76 = vunpack.c.l.b16 %v28
  %v77 = vpack.c.b16 %v62, %v61
  %v78 = vpack.c.b16 %v64, %v63
  %v79 = vpack.c.b16 %v66, %v65
  %v80 = vpack.c.b16 %v68, %v67
  %v81 = vpack.c.b16 %v70, %v69
  %v82 = vpack.c.b16 %v72, %v71
  %v83 = vpack.c.b16 %v74, %v73
  %v84 = vpack.c.b16 %v76, %v75
  %v109 = vunpack.c.l.b16 %v29
  %v110 = vunpack.c.l.b16 %v30
  %v111 = vunpack.c.l.b16 %v31
  %v112 = vunpack.c.l.b16 %v32
  %v113 = vunpack.c.l.b16 %v33
  %v114 = vunpack.c.l.b16 %v34
  %v115 = vunpack.c.l.b16 %v35
  %v116 = vunpack.c.l.b16 %v36
  %v117 = vunpack.c.l.b16 %v37
  %v118 = vunpack.c.l.b16 %v38
  %v119 = vunpack.c.l.b16 %v39
  %v120 = vunpack.c.l.b16 %v40
  %v121 = vunpack.c.l.b16 %v41
  %v122 = vunpack.c.l.b16 %v42
  %v123 = vunpack.c.l.b16 %v43
  %v124 = vunpack.c.l.b16 %v44
  %v125 = vpack.c.b16 %v110, %v109
  %v126 = vpack.c.b16 %v112, %v111
  %v127 = vpack.c.b16 %v114, %v113
  %v128 = vpack.c.b16 %v116, %v115
  %v129 = vpack.c.b16 %v118, %v117
  %v130 = vpack.c.b16 %v120, %v119
  %v131 = vpack.c.b16 %v122, %v121
  %v132 = vpack.c.b16 %v124, %v123
  %141 = vmatpush.bf16.msra.mxu0 %v132
  %142 = vmatpush.bf16.msra.mxu0 %v131
  %143 = vmatpush.bf16.msra.mxu0 %v130
  %144 = vmatpush.bf16.msra.mxu0 %v129
  %145 = vmatpush.bf16.msra.mxu0 %v128
  %146 = vmatpush.bf16.msra.mxu0 %v127
  %147 = vmatpush.bf16.msra.mxu0 %v126
  %148 = vmatpush.bf16.msra.mxu0 %v125
  %149 = vmatmul.bf16.gmra.mxu0 %v77
  %v150 = vpop.f32.mrf.mxu0
  %v151 = vadd.f32 0.0, %v150
  %v152 = vpop.f32.mrf.mxu0
  %v153 = vadd.f32 0.0, %v152
  %154 = vmatmul.bf16.gmra.mxu0 %v78
  %v155 = vpop.f32.mrf.mxu0
  %v156 = vadd.f32 0.0, %v155
  %v157 = vpop.f32.mrf.mxu0
  %v158 = vadd.f32 0.0, %v157
  %159 = vmatmul.bf16.gmra.mxu0 %v79
  %v160 = vpop.f32.mrf.mxu0
  %v161 = vadd.f32 0.0, %v160
  %v162 = vpop.f32.mrf.mxu0
  %v163 = vadd.f32 0.0, %v162
  %164 = vmatmul.bf16.gmra.mxu0 %v80
  %v165 = vpop.f32.mrf.mxu0
  %v166 = vadd.f32 0.0, %v165
  %v167 = vpop.f32.mrf.mxu0
  %v168 = vadd.f32 0.0, %v167
  %169 = vmatmul.bf16.gmra.mxu0 %v81
  %v170 = vpop.f32.mrf.mxu0
  %v171 = vadd.f32 0.0, %v170
  %v172 = vpop.f32.mrf.mxu0
  %v173 = vadd.f32 0.0, %v172
  %174 = vmatmul.bf16.gmra.mxu0 %v82
  %v175 = vpop.f32.mrf.mxu0
  %v176 = vadd.f32 0.0, %v175
  %v177 = vpop.f32.mrf.mxu0
  %v178 = vadd.f32 0.0, %v177
  %179 = vmatmul.bf16.gmra.mxu0 %v83
  %v180 = vpop.f32.mrf.mxu0
  %v181 = vadd.f32 0.0, %v180
  %v182 = vpop.f32.mrf.mxu0
  %v183 = vadd.f32 0.0, %v182
  %184 = vmatmul.bf16.gmra.mxu0 %v84
  %v185 = vpop.f32.mrf.mxu0
  %v186 = vadd.f32 0.0, %v185
  %v187 = vpop.f32.mrf.mxu0
  %v188 = vadd.f32 0.0, %v187
  %189 = vdwg.mxu0
  %190 = vst [vmem:[%s2] sm:$0xff] %v151
  %191 = vst [vmem:[%s2 + $0x8] sm:$0xff] %v153
  %192 = vst [vmem:[%s2 + $0x10] sm:$0xff] %v156
  %193 = vst [vmem:[%s2 + $0x18] sm:$0xff] %v158
  %194 = vst [vmem:[%s2 + $0x20] sm:$0xff] %v161
  %195 = vst [vmem:[%s2 + $0x28] sm:$0xff] %v163
  %196 = vst [vmem:[%s2 + $0x30] sm:$0xff] %v166
  %197 = vst [vmem:[%s2 + $0x38] sm:$0xff] %v168
  %198 = vst [vmem:[%s2 + $0x40] sm:$0xff] %v171
  %199 = vst [vmem:[%s2 + $0x48] sm:$0xff] %v173
  %200 = vst [vmem:[%s2 + $0x50] sm:$0xff] %v176
  %201 = vst [vmem:[%s2 + $0x58] sm:$0xff] %v178
  %202 = vst [vmem:[%s2 + $0x60] sm:$0xff] %v181
  %203 = vst [vmem:[%s2 + $0x68] sm:$0xff] %v183
  %204 = vst [vmem:[%s2 + $0x70] sm:$0xff] %v186
  %205 = vst [vmem:[%s2 + $0x78] sm:$0xff] %v188
  %v206 = vadd.f32 %v151, %v153
  %v207 = vadd.f32 %v206, %v156
  %v208 = vadd.f32 %v207, %v158
  %v209 = vadd.f32 %v208, %v161
  %v210 = vadd.f32 %v209, %v163
  %v211 = vadd.f32 %v210, %v166
  %v212 = vadd.f32 %v211, %v168
  %v213 = vadd.f32 %v212, %v171
  %v214 = vadd.f32 %v213, %v173
  %v215 = vadd.f32 %v214, %v176
  %v216 = vadd.f32 %v215, %v178
  %v217 = vadd.f32 %v216, %v181
  %v218 = vadd.f32 %v217, %v183
  %v219 = vadd.f32 %v218, %v186
  %v220 = vadd.f32 %v219, %v188
  %v221 = vrot.slane %v220, 4
  %v222 = vadd.f32 %v220, %v221
  %v223 = vrot.slane %v222, 2
  %v224 = vadd.f32 %v222, %v223
  %v225 = vrot.slane %v224, 1
  %v226 = vadd.f32 %v224, %v225
  %v227 = vmul.f32 %v151, %v151
  %v228 = vmul.f32 %v153, %v153
  %v229 = vmul.f32 %v156, %v156
  %v230 = vmul.f32 %v158, %v158
  %v231 = vmul.f32 %v161, %v161
  %v232 = vmul.f32 %v163, %v163
  %v233 = vmul.f32 %v166, %v166
  %v234 = vmul.f32 %v168, %v168
  %v235 = vmul.f32 %v171, %v171
  %v236 = vmul.f32 %v173, %v173
  %v237 = vmul.f32 %v176, %v176
  %v238 = vmul.f32 %v178, %v178
  %v239 = vmul.f32 %v181, %v181
  %v240 = vmul.f32 %v183, %v183
  %v241 = vmul.f32 %v186, %v186
  %v242 = vmul.f32 %v188, %v188
  %v243 = vadd.f32 %v227, %v228
  %v244 = vadd.f32 %v243, %v229
  %v245 = vadd.f32 %v244, %v230
  %v246 = vadd.f32 %v245, %v231
  %v247 = vadd.f32 %v246, %v232
  %v248 = vadd.f32 %v247, %v233
  %v249 = vadd.f32 %v248, %v234
  %v250 = vadd.f32 %v249, %v235
  %v251 = vadd.f32 %v250, %v236
  %v252 = vadd.f32 %v251, %v237
  %v253 = vadd.f32 %v252, %v238
  %v254 = vadd.f32 %v253, %v239
  %v255 = vadd.f32 %v254, %v240
  %v256 = vadd.f32 %v255, %v241
  %v257 = vadd.f32 %v256, %v242
  %v258 = vrot.slane %v257, 4
  %v259 = vadd.f32 %v257, %v258
  %v260 = vrot.slane %v259, 2
  %v261 = vadd.f32 %v259, %v260
  %v262 = vrot.slane %v261, 1
  %v263 = vadd.f32 %v261, %v262
  %v264 = vlaneseq
  %v265 = vshrl.u32 %v264, 7
  %vm266 = vcmp.eq.s32.totalorder %v265, 0
  %vm267 = vcmp.eq.s32.totalorder %v265, 1
  %v268 = vsel %vm267, %v263, 0.0
  %v269 = vsel %vm266, %v226, %v268
  %270 = vst [vmem:[%s3] sm:$0xff] %v269
  // Predicated region
  $region10: #{_lambda_.21} parent=0 // pred_check
    _
  $region11: #{_lambda_.21} parent=0 // pred_check_branch
    %272 = sbr.rel (0) target = $region13
  $region12: #{_lambda_.21} parent=0 // pred_region
    _
  $region13: #{_lambda_.21} parent=0 // pred_fallthru
    _
  // Predicated region
  $region14: #{_lambda_.21} parent=0 // pred_check
    _
  $region15: #{_lambda_.21} parent=0 // pred_check_branch
    %274 = sbr.rel (0) target = $region17
  $region16: #{_lambda_.21} parent=0 // pred_region
    _
  $region17: #{_lambda_.21} parent=0 // pred_fallthru
    _
  // Predicated region
  $region18: #{_lambda_.21} parent=0 // pred_check
    _
  $region19: #{_lambda_.21} parent=0 // pred_check_branch
    %276 = sbr.rel (0) target = $region21
  $region20: #{_lambda_.21} parent=0 // pred_region
    _
  $region21: #{_lambda_.21} parent=0 // pred_fallthru
    _
  // Predicated region
  $region22: #{_lambda_.21} parent=0 // pred_check
    _
  $region23: #{_lambda_.21} parent=0 // pred_check_branch
    %278 = sbr.rel (0) target = $region25
  $region24: #{_lambda_.21} parent=0 // pred_region
    _
  $region25: #{_lambda_.21} parent=0 // pred_fallthru
    _

// kernel: _lambda_.22
$region0: #{_lambda_.22}
  #allocation0 [shape = 'u32[]', space=smem, size = 0x4, offset = 0x4, fixed_abs, tag = 'smem constant byte address 0x4 - core index']
  #allocation1 [shape = 'u32[72,128]{1,0:T(1,128)}', space=vmem, size = 0x9000, scoped, tag = 'internal scratch']
  %s0 = inlined_call_operand.vmem [shape: f32[128,128], index: 0, kind: input, shape index: {}]
  %s1 = inlined_call_operand.vmem [shape: f32[1,128], index: 1, kind: input, shape index: {}]
  %s2 = inlined_call_operand.vmem [shape: f32[1,128], index: 2, kind: input, shape index: {}]
  %s3 = inlined_call_operand.vmem [shape: bf16[128,128], index: 3, kind: output, shape index: {}]
  %s4 = sld [smem:[#allocation0]]
  $region22: #{_lambda_.22} parent=0
    _
  %s6 = ssub.s32 1, %s4
  %s7 = scalar_select 0, %s6, %s4
  // Predicated region
  $region2: #{_lambda_.22} parent=0 // pred_check
    _
  $region3: #{_lambda_.22} parent=0 // pred_check_branch
    %9 = sbr.rel (0) target = $region5
  $region4: #{_lambda_.22} parent=0 // pred_region
    _
  $region5: #{_lambda_.22} parent=0 // pred_fallthru
    _
  // Predicated region
  $region6: #{_lambda_.22} parent=0 // pred_check
    _
  $region7: #{_lambda_.22} parent=0 // pred_check_branch
    %11 = sbr.rel (0) target = $region9
  $region8: #{_lambda_.22} parent=0 // pred_region
    _
  $region9: #{_lambda_.22} parent=0 // pred_fallthru
    _
  // Predicated region
  $region10: #{_lambda_.22} parent=0 // pred_check
    _
  $region11: #{_lambda_.22} parent=0 // pred_check_branch
    %13 = sbr.rel (0) target = $region13
  $region12: #{_lambda_.22} parent=0 // pred_region
    _
  $region13: #{_lambda_.22} parent=0 // pred_fallthru
    _
  %v14 = vld [vmem:[%s0] sm:$0xff]
  %v15 = vld [vmem:[%s0 + $0x8] sm:$0xff]
  %v16 = vld [vmem:[%s0 + $0x10] sm:$0xff]
  %v17 = vld [vmem:[%s0 + $0x18] sm:$0xff]
  %v18 = vld [vmem:[%s0 + $0x20] sm:$0xff]
  %v19 = vld [vmem:[%s0 + $0x28] sm:$0xff]
  %v20 = vld [vmem:[%s0 + $0x30] sm:$0xff]
  %v21 = vld [vmem:[%s0 + $0x38] sm:$0xff]
  %v22 = vld [vmem:[%s0 + $0x40] sm:$0xff]
  %v23 = vld [vmem:[%s0 + $0x48] sm:$0xff]
  %v24 = vld [vmem:[%s0 + $0x50] sm:$0xff]
  %v25 = vld [vmem:[%s0 + $0x58] sm:$0xff]
  %v26 = vld [vmem:[%s0 + $0x60] sm:$0xff]
  %v27 = vld [vmem:[%s0 + $0x68] sm:$0xff]
  %v28 = vld [vmem:[%s0 + $0x70] sm:$0xff]
  %v29 = vld [vmem:[%s0 + $0x78] sm:$0xff]
  %v30 = vld [vmem:[%s1] sm:$0x1]
  %v32 = vperm.slane %v30, 0
  %v34 = vmul.f32 %v14, %v32
  %v35 = vmul.f32 %v15, %v32
  %v36 = vmul.f32 %v16, %v32
  %v37 = vmul.f32 %v17, %v32
  %v38 = vmul.f32 %v18, %v32
  %v39 = vmul.f32 %v19, %v32
  %v40 = vmul.f32 %v20, %v32
  %v41 = vmul.f32 %v21, %v32
  %v42 = vmul.f32 %v22, %v32
  %v43 = vmul.f32 %v23, %v32
  %v44 = vmul.f32 %v24, %v32
  %v45 = vmul.f32 %v25, %v32
  %v46 = vmul.f32 %v26, %v32
  %v47 = vmul.f32 %v27, %v32
  %v48 = vmul.f32 %v28, %v32
  %v49 = vmul.f32 %v29, %v32
  %v50 = vld [vmem:[%s2] sm:$0x1]
  %v52 = vperm.slane %v50, 0
  %v54 = vadd.f32 %v34, %v52
  %v55 = vadd.f32 %v35, %v52
  %v56 = vadd.f32 %v36, %v52
  %v57 = vadd.f32 %v37, %v52
  %v58 = vadd.f32 %v38, %v52
  %v59 = vadd.f32 %v39, %v52
  %v60 = vadd.f32 %v40, %v52
  %v61 = vadd.f32 %v41, %v52
  %v62 = vadd.f32 %v42, %v52
  %v63 = vadd.f32 %v43, %v52
  %v64 = vadd.f32 %v44, %v52
  %v65 = vadd.f32 %v45, %v52
  %v66 = vadd.f32 %v46, %v52
  %v67 = vadd.f32 %v47, %v52
  %v68 = vadd.f32 %v48, %v52
  %v69 = vadd.f32 %v49, %v52
  %v70 = vmax.f32 %v54, 0.0
  %v71 = vmax.f32 %v55, 0.0
  %v72 = vmax.f32 %v56, 0.0
  %v73 = vmax.f32 %v57, 0.0
  %v74 = vmax.f32 %v58, 0.0
  %v75 = vmax.f32 %v59, 0.0
  %v76 = vmax.f32 %v60, 0.0
  %v77 = vmax.f32 %v61, 0.0
  %v78 = vmax.f32 %v62, 0.0
  %v79 = vmax.f32 %v63, 0.0
  %v80 = vmax.f32 %v64, 0.0
  %v81 = vmax.f32 %v65, 0.0
  %v82 = vmax.f32 %v66, 0.0
  %v83 = vmax.f32 %v67, 0.0
  %v84 = vmax.f32 %v68, 0.0
  %v85 = vmax.f32 %v69, 0.0
  %v86 = vpack.c.bf16 %v70, %v70
  %v87 = vpack.c.bf16 %v71, %v71
  %v88 = vpack.c.bf16 %v72, %v72
  %v89 = vpack.c.bf16 %v73, %v73
  %v90 = vpack.c.bf16 %v74, %v74
  %v91 = vpack.c.bf16 %v75, %v75
  %v92 = vpack.c.bf16 %v76, %v76
  %v93 = vpack.c.bf16 %v77, %v77
  %v94 = vpack.c.bf16 %v78, %v78
  %v95 = vpack.c.bf16 %v79, %v79
  %v96 = vpack.c.bf16 %v80, %v80
  %v97 = vpack.c.bf16 %v81, %v81
  %v98 = vpack.c.bf16 %v82, %v82
  %v99 = vpack.c.bf16 %v83, %v83
  %v100 = vpack.c.bf16 %v84, %v84
  %v101 = vpack.c.bf16 %v85, %v85
  %102 = vst [vmem:[%s3] sm:$0xf] %v86
  %103 = vst [vmem:[%s3 + $0x4] sm:$0xf] %v87
  %104 = vst [vmem:[%s3 + $0x8] sm:$0xf] %v88
  %105 = vst [vmem:[%s3 + $0xc] sm:$0xf] %v89
  %106 = vst [vmem:[%s3 + $0x10] sm:$0xf] %v90
  %107 = vst [vmem:[%s3 + $0x14] sm:$0xf] %v91
  %108 = vst [vmem:[%s3 + $0x18] sm:$0xf] %v92
  %109 = vst [vmem:[%s3 + $0x1c] sm:$0xf] %v93
  %110 = vst [vmem:[%s3 + $0x20] sm:$0xf] %v94
  %111 = vst [vmem:[%s3 + $0x24] sm:$0xf] %v95
  %112 = vst [vmem:[%s3 + $0x28] sm:$0xf] %v96
  %113 = vst [vmem:[%s3 + $0x2c] sm:$0xf] %v97
  %114 = vst [vmem:[%s3 + $0x30] sm:$0xf] %v98
  %115 = vst [vmem:[%s3 + $0x34] sm:$0xf] %v99
  %116 = vst [vmem:[%s3 + $0x38] sm:$0xf] %v100
  %117 = vst [vmem:[%s3 + $0x3c] sm:$0xf] %v101
  // Predicated region
  $region14: #{_lambda_.22} parent=0 // pred_check
    _
  $region15: #{_lambda_.22} parent=0 // pred_check_branch
    %119 = sbr.rel (0) target = $region17
  $region16: #{_lambda_.22} parent=0 // pred_region
    _
  $region17: #{_lambda_.22} parent=0 // pred_fallthru
    _
  // Predicated region
  $region18: #{_lambda_.22} parent=0 // pred_check
    _
  $region19: #{_lambda_.22} parent=0 // pred_check_branch
    %121 = sbr.rel (0) target = $region21
  $region20: #{_lambda_.22} parent=0 // pred_region
    _
  $region21: #{_lambda_.22} parent=0 // pred_fallthru
    _

// kernel: _lambda_.24
$region0: #{_lambda_.24}
  #allocation0 [shape = 'u32[]', space=smem, size = 0x4, offset = 0x4, fixed_abs, tag = 'smem constant byte address 0x4 - core index']
  #allocation1 [shape = 'u32[72,128]{1,0:T(1,128)}', space=vmem, size = 0x9000, scoped, tag = 'internal scratch']
  %s0 = inlined_call_operand.vmem [shape: f32[32,128], index: 0, kind: input, shape index: {}]
  %s1 = inlined_call_operand.vmem [shape: f32[1,128], index: 1, kind: input, shape index: {}]
  %s2 = inlined_call_operand.vmem [shape: f32[1,128], index: 2, kind: input, shape index: {}]
  %s3 = inlined_call_operand.vmem [shape: bf16[32,128], index: 3, kind: output, shape index: {}]
  %s4 = sld [smem:[#allocation0]]
  $region22: #{_lambda_.24} parent=0
    _
  %s6 = ssub.s32 1, %s4
  %s7 = scalar_select 0, %s6, %s4
  // Predicated region
  $region2: #{_lambda_.24} parent=0 // pred_check
    _
  $region3: #{_lambda_.24} parent=0 // pred_check_branch
    %9 = sbr.rel (0) target = $region5
  $region4: #{_lambda_.24} parent=0 // pred_region
    _
  $region5: #{_lambda_.24} parent=0 // pred_fallthru
    _
  // Predicated region
  $region6: #{_lambda_.24} parent=0 // pred_check
    _
  $region7: #{_lambda_.24} parent=0 // pred_check_branch
    %11 = sbr.rel (0) target = $region9
  $region8: #{_lambda_.24} parent=0 // pred_region
    _
  $region9: #{_lambda_.24} parent=0 // pred_fallthru
    _
  // Predicated region
  $region10: #{_lambda_.24} parent=0 // pred_check
    _
  $region11: #{_lambda_.24} parent=0 // pred_check_branch
    %13 = sbr.rel (0) target = $region13
  $region12: #{_lambda_.24} parent=0 // pred_region
    _
  $region13: #{_lambda_.24} parent=0 // pred_fallthru
    _
  %v14 = vld [vmem:[%s0] sm:$0xff]
  %v15 = vld [vmem:[%s0 + $0x8] sm:$0xff]
  %v16 = vld [vmem:[%s0 + $0x10] sm:$0xff]
  %v17 = vld [vmem:[%s0 + $0x18] sm:$0xff]
  %v18 = vld [vmem:[%s1] sm:$0x1]
  %v20 = vperm.slane %v18, 0
  %v22 = vmul.f32 %v14, %v20
  %v23 = vmul.f32 %v15, %v20
  %v24 = vmul.f32 %v16, %v20
  %v25 = vmul.f32 %v17, %v20
  %v26 = vld [vmem:[%s2] sm:$0x1]
  %v28 = vperm.slane %v26, 0
  %v30 = vadd.f32 %v22, %v28
  %v31 = vadd.f32 %v23, %v28
  %v32 = vadd.f32 %v24, %v28
  %v33 = vadd.f32 %v25, %v28
  %v34 = vmax.f32 %v30, 0.0
  %v35 = vmax.f32 %v31, 0.0
  %v36 = vmax.f32 %v32, 0.0
  %v37 = vmax.f32 %v33, 0.0
  %v38 = vpack.c.bf16 %v34, %v34
  %v39 = vpack.c.bf16 %v35, %v35
  %v40 = vpack.c.bf16 %v36, %v36
  %v41 = vpack.c.bf16 %v37, %v37
  %42 = vst [vmem:[%s3] sm:$0xf] %v38
  %43 = vst [vmem:[%s3 + $0x4] sm:$0xf] %v39
  %44 = vst [vmem:[%s3 + $0x8] sm:$0xf] %v40
  %45 = vst [vmem:[%s3 + $0xc] sm:$0xf] %v41
  // Predicated region
  $region14: #{_lambda_.24} parent=0 // pred_check
    _
  $region15: #{_lambda_.24} parent=0 // pred_check_branch
    %47 = sbr.rel (0) target = $region17
  $region16: #{_lambda_.24} parent=0 // pred_region
    _
  $region17: #{_lambda_.24} parent=0 // pred_fallthru
    _
  // Predicated region
  $region18: #{_lambda_.24} parent=0 // pred_check
    _
  $region19: #{_lambda_.24} parent=0 // pred_check_branch
    %49 = sbr.rel (0) target = $region21
  $region20: #{_lambda_.24} parent=0 // pred_region
    _
  $region21: #{_lambda_.24} parent=0 // pred_fallthru
    _

// kernel: _lambda_.23
$region0: #{_lambda_.23}
  #allocation0 [shape = 'u32[]', space=smem, size = 0x4, offset = 0x4, fixed_abs, tag = 'smem constant byte address 0x4 - core index']
  #allocation1 [shape = 'u32[72,128]{1,0:T(1,128)}', space=vmem, size = 0x9000, scoped, tag = 'internal scratch']
  %s0 = inlined_call_operand.vmem [shape: bf16[32,256], index: 0, kind: input, shape index: {}]
  %s1 = inlined_call_operand.vmem [shape: bf16[256,128], index: 1, kind: input, shape index: {}]
  %s2 = inlined_call_operand.vmem [shape: f32[32,128], index: 2, kind: output, shape index: {0}]
  %s3 = inlined_call_operand.vmem [shape: f32[8,128], index: 3, kind: output, shape index: {1}]
  %4 = xla_tuple %s2, %s3
  %s5 = sld [smem:[#allocation0]]
  $region26: #{_lambda_.23} parent=0
    _
  %s7 = ssub.s32 1, %s5
  %s8 = scalar_select 0, %s7, %s5
  // Predicated region
  $region2: #{_lambda_.23} parent=0 // pred_check
    _
  $region3: #{_lambda_.23} parent=0 // pred_check_branch
    %10 = sbr.rel (0) target = $region5
  $region4: #{_lambda_.23} parent=0 // pred_region
    _
  $region5: #{_lambda_.23} parent=0 // pred_fallthru
    _
  // Predicated region
  $region6: #{_lambda_.23} parent=0 // pred_check
    _
  $region7: #{_lambda_.23} parent=0 // pred_check_branch
    %12 = sbr.rel (0) target = $region9
  $region8: #{_lambda_.23} parent=0 // pred_region
    _
  $region9: #{_lambda_.23} parent=0 // pred_fallthru
    _
  %v13 = vld [vmem:[%s0] sm:$0xff]
  %v14 = vld [vmem:[%s0 + $0x8] sm:$0xff]
  %v15 = vld [vmem:[%s0 + $0x10] sm:$0xff]
  %v16 = vld [vmem:[%s0 + $0x18] sm:$0xff]
  %v17 = vld [vmem:[%s1] sm:$0xf]
  %v18 = vld [vmem:[%s1 + $0x4] sm:$0xf]
  %v19 = vld [vmem:[%s1 + $0x8] sm:$0xf]
  %v20 = vld [vmem:[%s1 + $0xc] sm:$0xf]
  %v21 = vld [vmem:[%s1 + $0x10] sm:$0xf]
  %v22 = vld [vmem:[%s1 + $0x14] sm:$0xf]
  %v23 = vld [vmem:[%s1 + $0x18] sm:$0xf]
  %v24 = vld [vmem:[%s1 + $0x1c] sm:$0xf]
  %v25 = vld [vmem:[%s1 + $0x20] sm:$0xf]
  %v26 = vld [vmem:[%s1 + $0x24] sm:$0xf]
  %v27 = vld [vmem:[%s1 + $0x28] sm:$0xf]
  %v28 = vld [vmem:[%s1 + $0x2c] sm:$0xf]
  %v29 = vld [vmem:[%s1 + $0x30] sm:$0xf]
  %v30 = vld [vmem:[%s1 + $0x34] sm:$0xf]
  %v31 = vld [vmem:[%s1 + $0x38] sm:$0xf]
  %v32 = vld [vmem:[%s1 + $0x3c] sm:$0xf]
  %v33 = vld [vmem:[%s1 + $0x40] sm:$0xf]
  %v34 = vld [vmem:[%s1 + $0x44] sm:$0xf]
  %v35 = vld [vmem:[%s1 + $0x48] sm:$0xf]
  %v36 = vld [vmem:[%s1 + $0x4c] sm:$0xf]
  %v37 = vld [vmem:[%s1 + $0x50] sm:$0xf]
  %v38 = vld [vmem:[%s1 + $0x54] sm:$0xf]
  %v39 = vld [vmem:[%s1 + $0x58] sm:$0xf]
  %v40 = vld [vmem:[%s1 + $0x5c] sm:$0xf]
  %v41 = vld [vmem:[%s1 + $0x60] sm:$0xf]
  %v42 = vld [vmem:[%s1 + $0x64] sm:$0xf]
  %v43 = vld [vmem:[%s1 + $0x68] sm:$0xf]
  %v44 = vld [vmem:[%s1 + $0x6c] sm:$0xf]
  %v45 = vld [vmem:[%s1 + $0x70] sm:$0xf]
  %v46 = vld [vmem:[%s1 + $0x74] sm:$0xf]
  %v47 = vld [vmem:[%s1 + $0x78] sm:$0xf]
  %v48 = vld [vmem:[%s1 + $0x7c] sm:$0xf]
  %v53 = vunpack.c.l.b16 %v13
  %v54 = vunpack.c.h.b16 %v13
  %v55 = vunpack.c.l.b16 %v14
  %v56 = vunpack.c.h.b16 %v14
  %v57 = vunpack.c.l.b16 %v15
  %v58 = vunpack.c.h.b16 %v15
  %v59 = vunpack.c.l.b16 %v16
  %v60 = vunpack.c.h.b16 %v16
  %v61 = vpack.c.b16 %v55, %v53
  %v62 = vpack.c.b16 %v56, %v54
  %v63 = vpack.c.b16 %v59, %v57
  %v64 = vpack.c.b16 %v60, %v58
  %v101 = vunpack.c.l.b16 %v17
  %v102 = vunpack.c.l.b16 %v18
  %v103 = vunpack.c.l.b16 %v19
  %v104 = vunpack.c.l.b16 %v20
  %v105 = vunpack.c.l.b16 %v21
  %v106 = vunpack.c.l.b16 %v22
  %v107 = vunpack.c.l.b16 %v23
  %v108 = vunpack.c.l.b16 %v24
  %v109 = vunpack.c.l.b16 %v25
  %v110 = vunpack.c.l.b16 %v26
  %v111 = vunpack.c.l.b16 %v27
  %v112 = vunpack.c.l.b16 %v28
  %v113 = vunpack.c.l.b16 %v29
  %v114 = vunpack.c.l.b16 %v30
  %v115 = vunpack.c.l.b16 %v31
  %v116 = vunpack.c.l.b16 %v32
  %v117 = vunpack.c.l.b16 %v33
  %v118 = vunpack.c.l.b16 %v34
  %v119 = vunpack.c.l.b16 %v35
  %v120 = vunpack.c.l.b16 %v36
  %v121 = vunpack.c.l.b16 %v37
  %v122 = vunpack.c.l.b16 %v38
  %v123 = vunpack.c.l.b16 %v39
  %v124 = vunpack.c.l.b16 %v40
  %v125 = vunpack.c.l.b16 %v41
  %v126 = vunpack.c.l.b16 %v42
  %v127 = vunpack.c.l.b16 %v43
  %v128 = vunpack.c.l.b16 %v44
  %v129 = vunpack.c.l.b16 %v45
  %v130 = vunpack.c.l.b16 %v46
  %v131 = vunpack.c.l.b16 %v47
  %v132 = vunpack.c.l.b16 %v48
  %v133 = vpack.c.b16 %v102, %v101
  %v134 = vpack.c.b16 %v104, %v103
  %v135 = vpack.c.b16 %v106, %v105
  %v136 = vpack.c.b16 %v108, %v107
  %v137 = vpack.c.b16 %v110, %v109
  %v138 = vpack.c.b16 %v112, %v111
  %v139 = vpack.c.b16 %v114, %v113
  %v140 = vpack.c.b16 %v116, %v115
  %v141 = vpack.c.b16 %v118, %v117
  %v142 = vpack.c.b16 %v120, %v119
  %v143 = vpack.c.b16 %v122, %v121
  %v144 = vpack.c.b16 %v124, %v123
  %v145 = vpack.c.b16 %v126, %v125
  %v146 = vpack.c.b16 %v128, %v127
  %v147 = vpack.c.b16 %v130, %v129
  %v148 = vpack.c.b16 %v132, %v131
  %165 = vmatpush.bf16.msra.mxu0 %v140
  %166 = vmatpush.bf16.msra.mxu0 %v139
  %167 = vmatpush.bf16.msra.mxu0 %v138
  %168 = vmatpush.bf16.msra.mxu0 %v137
  %169 = vmatpush.bf16.msra.mxu0 %v136
  %170 = vmatpush.bf16.msra.mxu0 %v135
  %171 = vmatpush.bf16.msra.mxu0 %v134
  %172 = vmatpush.bf16.msra.mxu0 %v133
  %173 = vmatmul.bf16.gmra.mxu0 %v61
  %v174 = vpop.f32.mrf.mxu0
  %v175 = vadd.f32 0.0, %v174
  %v176 = vpop.f32.mrf.mxu0
  %v177 = vadd.f32 0.0, %v176
  %178 = vmatmul.bf16.gmra.mxu0 %v63
  %v179 = vpop.f32.mrf.mxu0
  %v180 = vadd.f32 0.0, %v179
  %v181 = vpop.f32.mrf.mxu0
  %v182 = vadd.f32 0.0, %v181
  %183 = vdwg.mxu0
  %184 = vmatpush.bf16.msra.mxu0 %v148
  %185 = vmatpush.bf16.msra.mxu0 %v147
  %186 = vmatpush.bf16.msra.mxu0 %v146
  %187 = vmatpush.bf16.msra.mxu0 %v145
  %188 = vmatpush.bf16.msra.mxu0 %v144
  %189 = vmatpush.bf16.msra.mxu0 %v143
  %190 = vmatpush.bf16.msra.mxu0 %v142
  %191 = vmatpush.bf16.msra.mxu0 %v141
  %192 = vmatmul.bf16.gmra.mxu0 %v62
  %v193 = vpop.f32.mrf.mxu0
  %v194 = vadd.f32 %v175, %v193
  %v195 = vpop.f32.mrf.mxu0
  %v196 = vadd.f32 %v177, %v195
  %197 = vmatmul.bf16.gmra.mxu0 %v64
  %v198 = vpop.f32.mrf.mxu0
  %v199 = vadd.f32 %v180, %v198
  %v200 = vpop.f32.mrf.mxu0
  %v201 = vadd.f32 %v182, %v200
  %202 = vdwg.mxu0
  %203 = vst [vmem:[%s2] sm:$0xff] %v194
  %204 = vst [vmem:[%s2 + $0x8] sm:$0xff] %v196
  %205 = vst [vmem:[%s2 + $0x10] sm:$0xff] %v199
  %206 = vst [vmem:[%s2 + $0x18] sm:$0xff] %v201
  %v207 = vadd.f32 %v194, %v196
  %v208 = vadd.f32 %v207, %v199
  %v209 = vadd.f32 %v208, %v201
  %v210 = vrot.slane %v209, 4
  %v211 = vadd.f32 %v209, %v210
  %v212 = vrot.slane %v211, 2
  %v213 = vadd.f32 %v211, %v212
  %v214 = vrot.slane %v213, 1
  %v215 = vadd.f32 %v213, %v214
  %v216 = vmul.f32 %v194, %v194
  %v217 = vmul.f32 %v196, %v196
  %v218 = vmul.f32 %v199, %v199
  %v219 = vmul.f32 %v201, %v201
  %v220 = vadd.f32 %v216, %v217
  %v221 = vadd.f32 %v220, %v218
  %v222 = vadd.f32 %v221, %v219
  %v223 = vrot.slane %v222, 4
  %v224 = vadd.f32 %v222, %v223
  %v225 = vrot.slane %v224, 2
  %v226 = vadd.f32 %v224, %v225
  %v227 = vrot.slane %v226, 1
  %v228 = vadd.f32 %v226, %v227
  %v229 = vlaneseq
  %v230 = vshrl.u32 %v229, 7
  %vm231 = vcmp.eq.s32.totalorder %v230, 0
  %vm232 = vcmp.eq.s32.totalorder %v230, 1
  %v233 = vsel %vm232, %v228, 0.0
  %v234 = vsel %vm231, %v215, %v233
  %235 = vst [vmem:[%s3] sm:$0xff] %v234
  // Predicated region
  $region10: #{_lambda_.23} parent=0 // pred_check
    _
  $region11: #{_lambda_.23} parent=0 // pred_check_branch
    %237 = sbr.rel (0) target = $region13
  $region12: #{_lambda_.23} parent=0 // pred_region
    _
  $region13: #{_lambda_.23} parent=0 // pred_fallthru
    _
  // Predicated region
  $region14: #{_lambda_.23} parent=0 // pred_check
    _
  $region15: #{_lambda_.23} parent=0 // pred_check_branch
    %239 = sbr.rel (0) target = $region17
  $region16: #{_lambda_.23} parent=0 // pred_region
    _
  $region17: #{_lambda_.23} parent=0 // pred_fallthru
    _
  // Predicated region
  $region18: #{_lambda_.23} parent=0 // pred_check
    _
  $region19: #{_lambda_.23} parent=0 // pred_check_branch
    %241 = sbr.rel (0) target = $region21
  $region20: #{_lambda_.23} parent=0 // pred_region
    _
  $region21: #{_lambda_.23} parent=0 // pred_fallthru
    _
  // Predicated region
  $region22: #{_lambda_.23} parent=0 // pred_check
    _
  $region23: #{_lambda_.23} parent=0 // pred_check_branch
    %243 = sbr.rel (0) target = $region25
  $region24: #{_lambda_.23} parent=0 // pred_region
    _
  $region25: #{_lambda_.23} parent=0 // pred_fallthru
    _

// kernel: _lambda_.28
$region0: #{_lambda_.28}
  #allocation0 [shape = 'u32[]', space=smem, size = 0x4, offset = 0x4, fixed_abs, tag = 'smem constant byte address 0x4 - core index']
  #allocation1 [shape = 'u32[72,128]{1,0:T(1,128)}', space=vmem, size = 0x9000, scoped, tag = 'internal scratch']
  %s0 = inlined_call_operand.vmem [shape: f32[32,128], index: 0, kind: input, shape index: {}]
  %s1 = inlined_call_operand.vmem [shape: f32[1,128], index: 1, kind: input, shape index: {}]
  %s2 = inlined_call_operand.vmem [shape: f32[1,128], index: 2, kind: input, shape index: {}]
  %s3 = inlined_call_operand.vmem [shape: bf16[32,128], index: 3, kind: input, shape index: {}]
  %s4 = inlined_call_operand.vmem [shape: bf16[32,128], index: 4, kind: output, shape index: {}]
  %s5 = sld [smem:[#allocation0]]
  $region26: #{_lambda_.28} parent=0
    _
  %s7 = ssub.s32 1, %s5
  %s8 = scalar_select 0, %s7, %s5
  // Predicated region
  $region2: #{_lambda_.28} parent=0 // pred_check
    _
  $region3: #{_lambda_.28} parent=0 // pred_check_branch
    %10 = sbr.rel (0) target = $region5
  $region4: #{_lambda_.28} parent=0 // pred_region
    _
  $region5: #{_lambda_.28} parent=0 // pred_fallthru
    _
  // Predicated region
  $region6: #{_lambda_.28} parent=0 // pred_check
    _
  $region7: #{_lambda_.28} parent=0 // pred_check_branch
    %12 = sbr.rel (0) target = $region9
  $region8: #{_lambda_.28} parent=0 // pred_region
    _
  $region9: #{_lambda_.28} parent=0 // pred_fallthru
    _
  // Predicated region
  $region10: #{_lambda_.28} parent=0 // pred_check
    _
  $region11: #{_lambda_.28} parent=0 // pred_check_branch
    %14 = sbr.rel (0) target = $region13
  $region12: #{_lambda_.28} parent=0 // pred_region
    _
  $region13: #{_lambda_.28} parent=0 // pred_fallthru
    _
  // Predicated region
  $region14: #{_lambda_.28} parent=0 // pred_check
    _
  $region15: #{_lambda_.28} parent=0 // pred_check_branch
    %16 = sbr.rel (0) target = $region17
  $region16: #{_lambda_.28} parent=0 // pred_region
    _
  $region17: #{_lambda_.28} parent=0 // pred_fallthru
    _
  %v17 = vld [vmem:[%s0] sm:$0xff]
  %v18 = vld [vmem:[%s0 + $0x8] sm:$0xff]
  %v19 = vld [vmem:[%s0 + $0x10] sm:$0xff]
  %v20 = vld [vmem:[%s0 + $0x18] sm:$0xff]
  %v21 = vld [vmem:[%s1] sm:$0x1]
  %v23 = vperm.slane %v21, 0
  %v25 = vmul.f32 %v17, %v23
  %v26 = vmul.f32 %v18, %v23
  %v27 = vmul.f32 %v19, %v23
  %v28 = vmul.f32 %v20, %v23
  %v29 = vld [vmem:[%s2] sm:$0x1]
  %v31 = vperm.slane %v29, 0
  %v33 = vadd.f32 %v25, %v31
  %v34 = vadd.f32 %v26, %v31
  %v35 = vadd.f32 %v27, %v31
  %v36 = vadd.f32 %v28, %v31
  %v37 = vld [vmem:[%s3] sm:$0xf]
  %v38 = vld [vmem:[%s3 + $0x4] sm:$0xf]
  %v39 = vld [vmem:[%s3 + $0x8] sm:$0xf]
  %v40 = vld [vmem:[%s3 + $0xc] sm:$0xf]
  %v41 = vunpack.c.l.bf16 %v37
  %v42 = vunpack.c.l.bf16 %v38
  %v43 = vunpack.c.l.bf16 %v39
  %v44 = vunpack.c.l.bf16 %v40
  %v45 = vadd.f32 %v33, %v41
  %v46 = vadd.f32 %v34, %v42
  %v47 = vadd.f32 %v35, %v43
  %v48 = vadd.f32 %v36, %v44
  %v49 = vpack.c.bf16 %v45, %v45
  %v50 = vpack.c.bf16 %v46, %v46
  %v51 = vpack.c.bf16 %v47, %v47
  %v52 = vpack.c.bf16 %v48, %v48
  %53 = vst [vmem:[%s4] sm:$0xf] %v49
  %54 = vst [vmem:[%s4 + $0x4] sm:$0xf] %v50
  %55 = vst [vmem:[%s4 + $0x8] sm:$0xf] %v51
  %56 = vst [vmem:[%s4 + $0xc] sm:$0xf] %v52
  // Predicated region
  $region18: #{_lambda_.28} parent=0 // pred_check
    _
  $region19: #{_lambda_.28} parent=0 // pred_check_branch
    %58 = sbr.rel (0) target = $region21
  $region20: #{_lambda_.28} parent=0 // pred_region
    _
  $region21: #{_lambda_.28} parent=0 // pred_fallthru
    _
  // Predicated region
  $region22: #{_lambda_.28} parent=0 // pred_check
    _
  $region23: #{_lambda_.28} parent=0 // pred_check_branch
    %60 = sbr.rel (0) target = $region25
  $region24: #{_lambda_.28} parent=0 // pred_region
    _
  $region25: #{_lambda_.28} parent=0 // pred_fallthru
    _

// kernel: tile.28
$region0: #{tile.28}
  #allocation0 [shape = 's32[1]{0}', space=sflag, size = 0x4, scoped, tag = 'scoped memory for tile.28']
  %s0 = inlined_call_operand.vmem [shape: f32[16], index: 0, kind: input, shape index: {}]
  %s1 = inlined_call_operand.vmem [shape: f32[4,16], index: 1, kind: output, shape index: {}]
  // Predicated region
  $region2: #{tile.28} parent=0 // pred_check
    _
  $region3: #{tile.28} parent=0 // pred_check_branch
    %3 = sbr.rel (0) target = $region5
  $region4: #{tile.28} parent=0 // pred_region
    _
  $region5: #{tile.28} parent=0 // pred_fallthru
    _
  %v4 = vld [vmem:[%s0] ss:$0 sm:$0xff]
  %5 = vst [vmem:[%s1] sm:$0xf] %v4

// kernel: tile.29
$region0: #{tile.29}
  %s0 = inlined_call_operand.vmem [shape: f32[4,16], index: 0, kind: input, shape index: {}]
  %s1 = inlined_call_operand.vmem [shape: f32[64], index: 1, kind: output, shape index: {}]
  $region1: #{tile.29} parent=0
    #allocation0 [shape = 'u8[4096]{0}', space=vmem, size = 0x1000, scoped, tag = 'scoped mem for output reshape']
    #allocation1 [shape = 'u8[4096]{0}', space=vmem, size = 0x1000, scoped, tag = 'scoped mem for input reshape']
    %s3 = ssub.s32 16, 1
    %v4 = vld [vmem:[%s0] sm:%s3]
    %5 = vst [vmem:[#allocation1] sm:%s3] %v4
    %v6 = vld [vmem:[#allocation1] sm:$0x1]
    %vm7 = vcmask 130048
    %8 = vst.msk [vmem:[#allocation0] sm:$0x1] %vm7, %v6
    %s9 = scalar_lea.vmem [#allocation1], 3
    %v10 = vld [vmem:[%s9] sm:$0x1]
    %11 = vrot.lane.b32.xlu0 %v10, 48
    %v12 = vpop.permute.xlu0 %11
    %vm13 = vcmask 523648
    %14 = vst.msk [vmem:[#allocation0] sm:$0x1] %vm13, %v12
    %s15 = scalar_lea.vmem [#allocation1], 2
    %v16 = vld [vmem:[%s15] sm:$0x1]
    %17 = vrot.lane.b32.xlu0 %v16, 32
    %v18 = vpop.permute.xlu0 %17
    %vm19 = vcmask 392448
    %20 = vst.msk [vmem:[#allocation0] sm:$0x1] %vm19, %v18
    %s21 = scalar_lea.vmem [#allocation1], 1
    %v22 = vld [vmem:[%s21] sm:$0x1]
    %23 = vrot.lane.b32.xlu0 %v22, 16
    %v24 = vpop.permute.xlu0 %23
    %vm25 = vcmask 261248
    %26 = vst.msk [vmem:[#allocation0] sm:$0x1] %vm25, %v24
    %s28 = ssub.s32 2, 1
    %v29 = vld [vmem:[#allocation0] sm:%s28]
    %s31 = ssub.s32 2, 1
    %32 = vst [vmem:[%s1] sm:%s31] %v29

// kernel: _lambda_.25
$region0: #{_lambda_.25}
  #allocation0 [shape = 'u32[]', space=smem, size = 0x4, offset = 0x4, fixed_abs, tag = 'smem constant byte address 0x4 - core index']
  #allocation1 [shape = 'u32[72,128]{1,0:T(1,128)}', space=vmem, size = 0x9000, scoped, tag = 'internal scratch']
  %s0 = inlined_call_operand.vmem [shape: bf16[32,384], index: 0, kind: input, shape index: {}]
  %s1 = inlined_call_operand.vmem [shape: bf16[384,128], index: 1, kind: input, shape index: {}]
  %s2 = inlined_call_operand.vmem [shape: f32[32,128], index: 2, kind: output, shape index: {0}]
  %s3 = inlined_call_operand.vmem [shape: f32[8,128], index: 3, kind: output, shape index: {1}]
  %4 = xla_tuple %s2, %s3
  %s5 = sld [smem:[#allocation0]]
  $region26: #{_lambda_.25} parent=0
    _
  %s7 = ssub.s32 1, %s5
  %s8 = scalar_select 0, %s7, %s5
  // Predicated region
  $region2: #{_lambda_.25} parent=0 // pred_check
    _
  $region3: #{_lambda_.25} parent=0 // pred_check_branch
    %10 = sbr.rel (0) target = $region5
  $region4: #{_lambda_.25} parent=0 // pred_region
    _
  $region5: #{_lambda_.25} parent=0 // pred_fallthru
    _
  // Predicated region
  $region6: #{_lambda_.25} parent=0 // pred_check
    _
  $region7: #{_lambda_.25} parent=0 // pred_check_branch
    %12 = sbr.rel (0) target = $region9
  $region8: #{_lambda_.25} parent=0 // pred_region
    _
  $region9: #{_lambda_.25} parent=0 // pred_fallthru
    _
  %v13 = vld [vmem:[%s0] sm:$0xff]
  %v14 = vld [vmem:[%s0 + $0x8] sm:$0xf]
  %v15 = vld [vmem:[%s0 + $0xc] sm:$0xff]
  %v16 = vld [vmem:[%s0 + $0x14] sm:$0xf]
  %v17 = vld [vmem:[%s0 + $0x18] sm:$0xff]
  %v18 = vld [vmem:[%s0 + $0x20] sm:$0xf]
  %v19 = vld [vmem:[%s0 + $0x24] sm:$0xff]
  %v20 = vld [vmem:[%s0 + $0x2c] sm:$0xf]
  %v21 = vld [vmem:[%s1] sm:$0xf]
  %v22 = vld [vmem:[%s1 + $0x4] sm:$0xf]
  %v23 = vld [vmem:[%s1 + $0x8] sm:$0xf]
  %v24 = vld [vmem:[%s1 + $0xc] sm:$0xf]
  %v25 = vld [vmem:[%s1 + $0x10] sm:$0xf]
  %v26 = vld [vmem:[%s1 + $0x14] sm:$0xf]
  %v27 = vld [vmem:[%s1 + $0x18] sm:$0xf]
  %v28 = vld [vmem:[%s1 + $0x1c] sm:$0xf]
  %v29 = vld [vmem:[%s1 + $0x20] sm:$0xf]
  %v30 = vld [vmem:[%s1 + $0x24] sm:$0xf]
  %v31 = vld [vmem:[%s1 + $0x28] sm:$0xf]
  %v32 = vld [vmem:[%s1 + $0x2c] sm:$0xf]
  %v33 = vld [vmem:[%s1 + $0x30] sm:$0xf]
  %v34 = vld [vmem:[%s1 + $0x34] sm:$0xf]
  %v35 = vld [vmem:[%s1 + $0x38] sm:$0xf]
  %v36 = vld [vmem:[%s1 + $0x3c] sm:$0xf]
  %v37 = vld [vmem:[%s1 + $0x40] sm:$0xf]
  %v38 = vld [vmem:[%s1 + $0x44] sm:$0xf]
  %v39 = vld [vmem:[%s1 + $0x48] sm:$0xf]
  %v40 = vld [vmem:[%s1 + $0x4c] sm:$0xf]
  %v41 = vld [vmem:[%s1 + $0x50] sm:$0xf]
  %v42 = vld [vmem:[%s1 + $0x54] sm:$0xf]
  %v43 = vld [vmem:[%s1 + $0x58] sm:$0xf]
  %v44 = vld [vmem:[%s1 + $0x5c] sm:$0xf]
  %v45 = vld [vmem:[%s1 + $0x60] sm:$0xf]
  %v46 = vld [vmem:[%s1 + $0x64] sm:$0xf]
  %v47 = vld [vmem:[%s1 + $0x68] sm:$0xf]
  %v48 = vld [vmem:[%s1 + $0x6c] sm:$0xf]
  %v49 = vld [vmem:[%s1 + $0x70] sm:$0xf]
  %v50 = vld [vmem:[%s1 + $0x74] sm:$0xf]
  %v51 = vld [vmem:[%s1 + $0x78] sm:$0xf]
  %v52 = vld [vmem:[%s1 + $0x7c] sm:$0xf]
  %v53 = vld [vmem:[%s1 + $0x80] sm:$0xf]
  %v54 = vld [vmem:[%s1 + $0x84] sm:$0xf]
  %v55 = vld [vmem:[%s1 + $0x88] sm:$0xf]
  %v56 = vld [vmem:[%s1 + $0x8c] sm:$0xf]
  %v57 = vld [vmem:[%s1 + $0x90] sm:$0xf]
  %v58 = vld [vmem:[%s1 + $0x94] sm:$0xf]
  %v59 = vld [vmem:[%s1 + $0x98] sm:$0xf]
  %v60 = vld [vmem:[%s1 + $0x9c] sm:$0xf]
  %v61 = vld [vmem:[%s1 + $0xa0] sm:$0xf]
  %v62 = vld [vmem:[%s1 + $0xa4] sm:$0xf]
  %v63 = vld [vmem:[%s1 + $0xa8] sm:$0xf]
  %v64 = vld [vmem:[%s1 + $0xac] sm:$0xf]
  %v65 = vld [vmem:[%s1 + $0xb0] sm:$0xf]
  %v66 = vld [vmem:[%s1 + $0xb4] sm:$0xf]
  %v67 = vld [vmem:[%s1 + $0xb8] sm:$0xf]
  %v68 = vld [vmem:[%s1 + $0xbc] sm:$0xf]
  %v77 = vunpack.c.l.b16 %v13
  %v78 = vunpack.c.h.b16 %v13
  %v79 = vunpack.c.l.b16 %v14
  %v80 = vunpack.c.l.b16 %v15
  %v81 = vunpack.c.h.b16 %v15
  %v82 = vunpack.c.l.b16 %v16
  %v83 = vunpack.c.l.b16 %v17
  %v84 = vunpack.c.h.b16 %v17
  %v85 = vunpack.c.l.b16 %v18
  %v86 = vunpack.c.l.b16 %v19
  %v87 = vunpack.c.h.b16 %v19
  %v88 = vunpack.c.l.b16 %v20
  %v89 = vpack.c.b16 %v80, %v77
  %v90 = vpack.c.b16 %v81, %v78
  %v91 = vpack.c.b16 %v82, %v79
  %v92 = vpack.c.b16 %v86, %v83
  %v93 = vpack.c.b16 %v87, %v84
  %v94 = vpack.c.b16 %v88, %v85
  %v149 = vunpack.c.l.b16 %v21
  %v150 = vunpack.c.l.b16 %v22
  %v151 = vunpack.c.l.b16 %v23
  %v152 = vunpack.c.l.b16 %v24
  %v153 = vunpack.c.l.b16 %v25
  %v154 = vunpack.c.l.b16 %v26
  %v155 = vunpack.c.l.b16 %v27
  %v156 = vunpack.c.l.b16 %v28
  %v157 = vunpack.c.l.b16 %v29
  %v158 = vunpack.c.l.b16 %v30
  %v159 = vunpack.c.l.b16 %v31
  %v160 = vunpack.c.l.b16 %v32
  %v161 = vunpack.c.l.b16 %v33
  %v162 = vunpack.c.l.b16 %v34
  %v163 = vunpack.c.l.b16 %v35
  %v164 = vunpack.c.l.b16 %v36
  %v165 = vunpack.c.l.b16 %v37
  %v166 = vunpack.c.l.b16 %v38
  %v167 = vunpack.c.l.b16 %v39
  %v168 = vunpack.c.l.b16 %v40
  %v169 = vunpack.c.l.b16 %v41
  %v170 = vunpack.c.l.b16 %v42
  %v171 = vunpack.c.l.b16 %v43
  %v172 = vunpack.c.l.b16 %v44
  %v173 = vunpack.c.l.b16 %v45
  %v174 = vunpack.c.l.b16 %v46
  %v175 = vunpack.c.l.b16 %v47
  %v176 = vunpack.c.l.b16 %v48
  %v177 = vunpack.c.l.b16 %v49
  %v178 = vunpack.c.l.b16 %v50
  %v179 = vunpack.c.l.b16 %v51
  %v180 = vunpack.c.l.b16 %v52
  %v181 = vunpack.c.l.b16 %v53
  %v182 = vunpack.c.l.b16 %v54
  %v183 = vunpack.c.l.b16 %v55
  %v184 = vunpack.c.l.b16 %v56
  %v185 = vunpack.c.l.b16 %v57
  %v186 = vunpack.c.l.b16 %v58
  %v187 = vunpack.c.l.b16 %v59
  %v188 = vunpack.c.l.b16 %v60
  %v189 = vunpack.c.l.b16 %v61
  %v190 = vunpack.c.l.b16 %v62
  %v191 = vunpack.c.l.b16 %v63
  %v192 = vunpack.c.l.b16 %v64
  %v193 = vunpack.c.l.b16 %v65
  %v194 = vunpack.c.l.b16 %v66
  %v195 = vunpack.c.l.b16 %v67
  %v196 = vunpack.c.l.b16 %v68
  %v197 = vpack.c.b16 %v150, %v149
  %v198 = vpack.c.b16 %v152, %v151
  %v199 = vpack.c.b16 %v154, %v153
  %v200 = vpack.c.b16 %v156, %v155
  %v201 = vpack.c.b16 %v158, %v157
  %v202 = vpack.c.b16 %v160, %v159
  %v203 = vpack.c.b16 %v162, %v161
  %v204 = vpack.c.b16 %v164, %v163
  %v205 = vpack.c.b16 %v166, %v165
  %v206 = vpack.c.b16 %v168, %v167
  %v207 = vpack.c.b16 %v170, %v169
  %v208 = vpack.c.b16 %v172, %v171
  %v209 = vpack.c.b16 %v174, %v173
  %v210 = vpack.c.b16 %v176, %v175
  %v211 = vpack.c.b16 %v178, %v177
  %v212 = vpack.c.b16 %v180, %v179
  %v213 = vpack.c.b16 %v182, %v181
  %v214 = vpack.c.b16 %v184, %v183
  %v215 = vpack.c.b16 %v186, %v185
  %v216 = vpack.c.b16 %v188, %v187
  %v217 = vpack.c.b16 %v190, %v189
  %v218 = vpack.c.b16 %v192, %v191
  %v219 = vpack.c.b16 %v194, %v193
  %v220 = vpack.c.b16 %v196, %v195
  %245 = vmatpush.bf16.msra.mxu0 %v204
  %246 = vmatpush.bf16.msra.mxu0 %v203
  %247 = vmatpush.bf16.msra.mxu0 %v202
  %248 = vmatpush.bf16.msra.mxu0 %v201
  %249 = vmatpush.bf16.msra.mxu0 %v200
  %250 = vmatpush.bf16.msra.mxu0 %v199
  %251 = vmatpush.bf16.msra.mxu0 %v198
  %252 = vmatpush.bf16.msra.mxu0 %v197
  %253 = vmatmul.bf16.gmra.mxu0 %v89
  %v254 = vpop.f32.mrf.mxu0
  %v255 = vadd.f32 0.0, %v254
  %v256 = vpop.f32.mrf.mxu0
  %v257 = vadd.f32 0.0, %v256
  %258 = vmatmul.bf16.gmra.mxu0 %v92
  %v259 = vpop.f32.mrf.mxu0
  %v260 = vadd.f32 0.0, %v259
  %v261 = vpop.f32.mrf.mxu0
  %v262 = vadd.f32 0.0, %v261
  %263 = vdwg.mxu0
  %264 = vmatpush.bf16.msra.mxu0 %v212
  %265 = vmatpush.bf16.msra.mxu0 %v211
  %266 = vmatpush.bf16.msra.mxu0 %v210
  %267 = vmatpush.bf16.msra.mxu0 %v209
  %268 = vmatpush.bf16.msra.mxu0 %v208
  %269 = vmatpush.bf16.msra.mxu0 %v207
  %270 = vmatpush.bf16.msra.mxu0 %v206
  %271 = vmatpush.bf16.msra.mxu0 %v205
  %272 = vmatmul.bf16.gmra.mxu0 %v90
  %v273 = vpop.f32.mrf.mxu0
  %v274 = vadd.f32 %v255, %v273
  %v275 = vpop.f32.mrf.mxu0
  %v276 = vadd.f32 %v257, %v275
  %277 = vmatmul.bf16.gmra.mxu0 %v93
  %v278 = vpop.f32.mrf.mxu0
  %v279 = vadd.f32 %v260, %v278
  %v280 = vpop.f32.mrf.mxu0
  %v281 = vadd.f32 %v262, %v280
  %282 = vdwg.mxu0
  %283 = vmatpush.bf16.msra.mxu0 %v220
  %284 = vmatpush.bf16.msra.mxu0 %v219
  %285 = vmatpush.bf16.msra.mxu0 %v218
  %286 = vmatpush.bf16.msra.mxu0 %v217
  %287 = vmatpush.bf16.msra.mxu0 %v216
  %288 = vmatpush.bf16.msra.mxu0 %v215
  %289 = vmatpush.bf16.msra.mxu0 %v214
  %290 = vmatpush.bf16.msra.mxu0 %v213
  %291 = vmatmul.bf16.gmra.mxu0 %v91
  %v292 = vpop.f32.mrf.mxu0
  %v293 = vadd.f32 %v274, %v292
  %v294 = vpop.f32.mrf.mxu0
  %v295 = vadd.f32 %v276, %v294
  %296 = vmatmul.bf16.gmra.mxu0 %v94
  %v297 = vpop.f32.mrf.mxu0
  %v298 = vadd.f32 %v279, %v297
  %v299 = vpop.f32.mrf.mxu0
  %v300 = vadd.f32 %v281, %v299
  %301 = vdwg.mxu0
  %302 = vst [vmem:[%s2] sm:$0xff] %v293
  %303 = vst [vmem:[%s2 + $0x8] sm:$0xff] %v295
  %304 = vst [vmem:[%s2 + $0x10] sm:$0xff] %v298
  %305 = vst [vmem:[%s2 + $0x18] sm:$0xff] %v300
  %v306 = vadd.f32 %v293, %v295
  %v307 = vadd.f32 %v306, %v298
  %v308 = vadd.f32 %v307, %v300
  %v309 = vrot.slane %v308, 4
  %v310 = vadd.f32 %v308, %v309
  %v311 = vrot.slane %v310, 2
  %v312 = vadd.f32 %v310, %v311
  %v313 = vrot.slane %v312, 1
  %v314 = vadd.f32 %v312, %v313
  %v315 = vmul.f32 %v293, %v293
  %v316 = vmul.f32 %v295, %v295
  %v317 = vmul.f32 %v298, %v298
  %v318 = vmul.f32 %v300, %v300
  %v319 = vadd.f32 %v315, %v316
  %v320 = vadd.f32 %v319, %v317
  %v321 = vadd.f32 %v320, %v318
  %v322 = vrot.slane %v321, 4
  %v323 = vadd.f32 %v321, %v322
  %v324 = vrot.slane %v323, 2
  %v325 = vadd.f32 %v323, %v324
  %v326 = vrot.slane %v325, 1
  %v327 = vadd.f32 %v325, %v326
  %v328 = vlaneseq
  %v329 = vshrl.u32 %v328, 7
  %vm330 = vcmp.eq.s32.totalorder %v329, 0
  %vm331 = vcmp.eq.s32.totalorder %v329, 1
  %v332 = vsel %vm331, %v327, 0.0
  %v333 = vsel %vm330, %v314, %v332
  %334 = vst [vmem:[%s3] sm:$0xff] %v333
  // Predicated region
  $region10: #{_lambda_.25} parent=0 // pred_check
    _
  $region11: #{_lambda_.25} parent=0 // pred_check_branch
    %336 = sbr.rel (0) target = $region13
  $region12: #{_lambda_.25} parent=0 // pred_region
    _
  $region13: #{_lambda_.25} parent=0 // pred_fallthru
    _
  // Predicated region
  $region14: #{_lambda_.25} parent=0 // pred_check
    _
  $region15: #{_lambda_.25} parent=0 // pred_check_branch
    %338 = sbr.rel (0) target = $region17
  $region16: #{_lambda_.25} parent=0 // pred_region
    _
  $region17: #{_lambda_.25} parent=0 // pred_fallthru
    _
  // Predicated region
  $region18: #{_lambda_.25} parent=0 // pred_check
    _
  $region19: #{_lambda_.25} parent=0 // pred_check_branch
    %340 = sbr.rel (0) target = $region21
  $region20: #{_lambda_.25} parent=0 // pred_region
    _
  $region21: #{_lambda_.25} parent=0 // pred_fallthru
    _
  // Predicated region
  $region22: #{_lambda_.25} parent=0 // pred_check
    _
  $region23: #{_lambda_.25} parent=0 // pred_check_branch
    %342 = sbr.rel (0) target = $region25
  $region24: #{_lambda_.25} parent=0 // pred_region
    _
  $region25: #{_lambda_.25} parent=0 // pred_fallthru
    _

// kernel: tile.38
$region0: #{tile.38}
  #allocation0 [shape = 's32[1]{0}', space=sflag, size = 0x4, scoped, tag = 'scoped memory for tile.38']
  %s0 = inlined_call_operand.vmem [shape: f32[8], index: 0, kind: input, shape index: {}]
  %s1 = inlined_call_operand.vmem [shape: f32[4,8], index: 1, kind: output, shape index: {}]
  // Predicated region
  $region2: #{tile.38} parent=0 // pred_check
    _
  $region3: #{tile.38} parent=0 // pred_check_branch
    %3 = sbr.rel (0) target = $region5
  $region4: #{tile.38} parent=0 // pred_region
    _
  $region5: #{tile.38} parent=0 // pred_fallthru
    _
  %v4 = vld [vmem:[%s0] ss:$0 sm:$0xff]
  %5 = vst [vmem:[%s1] sm:$0xf] %v4

// kernel: tile.39
$region0: #{tile.39}
  %s0 = inlined_call_operand.vmem [shape: f32[4,8], index: 0, kind: input, shape index: {}]
  %s1 = inlined_call_operand.vmem [shape: f32[32], index: 1, kind: output, shape index: {}]
  $region1: #{tile.39} parent=0
    #allocation0 [shape = 'u8[4096]{0}', space=vmem, size = 0x1000, scoped, tag = 'scoped mem for output reshape']
    #allocation1 [shape = 'u8[4096]{0}', space=vmem, size = 0x1000, scoped, tag = 'scoped mem for input reshape']
    %s3 = ssub.s32 16, 1
    %v4 = vld [vmem:[%s0] sm:%s3]
    %5 = vst [vmem:[#allocation1] sm:%s3] %v4
    %v6 = vld [vmem:[#allocation1] sm:$0x1]
    %vm7 = vcmask 64512
    %8 = vst.msk [vmem:[#allocation0] sm:$0x1] %vm7, %v6
    %s9 = scalar_lea.vmem [#allocation1], 3
    %v10 = vld [vmem:[%s9] sm:$0x1]
    %11 = vrot.lane.b32.xlu0 %v10, 24
    %v12 = vpop.permute.xlu0 %11
    %vm13 = vcmask 261312
    %14 = vst.msk [vmem:[#allocation0] sm:$0x1] %vm13, %v12
    %s15 = scalar_lea.vmem [#allocation1], 2
    %v16 = vld [vmem:[%s15] sm:$0x1]
    %17 = vrot.lane.b32.xlu0 %v16, 16
    %v18 = vpop.permute.xlu0 %17
    %vm19 = vcmask 195712
    %20 = vst.msk [vmem:[#allocation0] sm:$0x1] %vm19, %v18
    %s21 = scalar_lea.vmem [#allocation1], 1
    %v22 = vld [vmem:[%s21] sm:$0x1]
    %23 = vrot.lane.b32.xlu0 %v22, 8
    %v24 = vpop.permute.xlu0 %23
    %vm25 = vcmask 130112
    %26 = vst.msk [vmem:[#allocation0] sm:$0x1] %vm25, %v24
    %s28 = ssub.s32 2, 1
    %v29 = vld [vmem:[#allocation0] sm:%s28]
    %s31 = ssub.s32 2, 1
    %32 = vst [vmem:[%s1] sm:%s31] %v29

// kernel: _lambda_.33
$region0: #{_lambda_.33}
  #allocation0 [shape = 'u32[]', space=smem, size = 0x4, offset = 0x4, fixed_abs, tag = 'smem constant byte address 0x4 - core index']
  #allocation1 [shape = 'u32[72,128]{1,0:T(1,128)}', space=vmem, size = 0x9000, scoped, tag = 'internal scratch']
  %s0 = inlined_call_operand.vmem [shape: bf16[32,128], index: 0, kind: input, shape index: {}]
  %s1 = inlined_call_operand.vmem [shape: bf16[128,128], index: 1, kind: input, shape index: {}]
  %s2 = inlined_call_operand.vmem [shape: f32[32,128], index: 2, kind: output, shape index: {0}]
  %s3 = inlined_call_operand.vmem [shape: f32[8,128], index: 3, kind: output, shape index: {1}]
  %4 = xla_tuple %s2, %s3
  %s5 = sld [smem:[#allocation0]]
  $region26: #{_lambda_.33} parent=0
    _
  %s7 = ssub.s32 1, %s5
  %s8 = scalar_select 0, %s7, %s5
  // Predicated region
  $region2: #{_lambda_.33} parent=0 // pred_check
    _
  $region3: #{_lambda_.33} parent=0 // pred_check_branch
    %10 = sbr.rel (0) target = $region5
  $region4: #{_lambda_.33} parent=0 // pred_region
    _
  $region5: #{_lambda_.33} parent=0 // pred_fallthru
    _
  // Predicated region
  $region6: #{_lambda_.33} parent=0 // pred_check
    _
  $region7: #{_lambda_.33} parent=0 // pred_check_branch
    %12 = sbr.rel (0) target = $region9
  $region8: #{_lambda_.33} parent=0 // pred_region
    _
  $region9: #{_lambda_.33} parent=0 // pred_fallthru
    _
  %v13 = vld [vmem:[%s0] sm:$0xf]
  %v14 = vld [vmem:[%s0 + $0x4] sm:$0xf]
  %v15 = vld [vmem:[%s0 + $0x8] sm:$0xf]
  %v16 = vld [vmem:[%s0 + $0xc] sm:$0xf]
  %v17 = vld [vmem:[%s1] sm:$0xf]
  %v18 = vld [vmem:[%s1 + $0x4] sm:$0xf]
  %v19 = vld [vmem:[%s1 + $0x8] sm:$0xf]
  %v20 = vld [vmem:[%s1 + $0xc] sm:$0xf]
  %v21 = vld [vmem:[%s1 + $0x10] sm:$0xf]
  %v22 = vld [vmem:[%s1 + $0x14] sm:$0xf]
  %v23 = vld [vmem:[%s1 + $0x18] sm:$0xf]
  %v24 = vld [vmem:[%s1 + $0x1c] sm:$0xf]
  %v25 = vld [vmem:[%s1 + $0x20] sm:$0xf]
  %v26 = vld [vmem:[%s1 + $0x24] sm:$0xf]
  %v27 = vld [vmem:[%s1 + $0x28] sm:$0xf]
  %v28 = vld [vmem:[%s1 + $0x2c] sm:$0xf]
  %v29 = vld [vmem:[%s1 + $0x30] sm:$0xf]
  %v30 = vld [vmem:[%s1 + $0x34] sm:$0xf]
  %v31 = vld [vmem:[%s1 + $0x38] sm:$0xf]
  %v32 = vld [vmem:[%s1 + $0x3c] sm:$0xf]
  %v37 = vunpack.c.l.b16 %v13
  %v38 = vunpack.c.l.b16 %v14
  %v39 = vunpack.c.l.b16 %v15
  %v40 = vunpack.c.l.b16 %v16
  %v41 = vpack.c.b16 %v38, %v37
  %v42 = vpack.c.b16 %v40, %v39
  %v61 = vunpack.c.l.b16 %v17
  %v62 = vunpack.c.l.b16 %v18
  %v63 = vunpack.c.l.b16 %v19
  %v64 = vunpack.c.l.b16 %v20
  %v65 = vunpack.c.l.b16 %v21
  %v66 = vunpack.c.l.b16 %v22
  %v67 = vunpack.c.l.b16 %v23
  %v68 = vunpack.c.l.b16 %v24
  %v69 = vunpack.c.l.b16 %v25
  %v70 = vunpack.c.l.b16 %v26
  %v71 = vunpack.c.l.b16 %v27
  %v72 = vunpack.c.l.b16 %v28
  %v73 = vunpack.c.l.b16 %v29
  %v74 = vunpack.c.l.b16 %v30
  %v75 = vunpack.c.l.b16 %v31
  %v76 = vunpack.c.l.b16 %v32
  %v77 = vpack.c.b16 %v62, %v61
  %v78 = vpack.c.b16 %v64, %v63
  %v79 = vpack.c.b16 %v66, %v65
  %v80 = vpack.c.b16 %v68, %v67
  %v81 = vpack.c.b16 %v70, %v69
  %v82 = vpack.c.b16 %v72, %v71
  %v83 = vpack.c.b16 %v74, %v73
  %v84 = vpack.c.b16 %v76, %v75
  %93 = vmatpush.bf16.msra.mxu0 %v84
  %94 = vmatpush.bf16.msra.mxu0 %v83
  %95 = vmatpush.bf16.msra.mxu0 %v82
  %96 = vmatpush.bf16.msra.mxu0 %v81
  %97 = vmatpush.bf16.msra.mxu0 %v80
  %98 = vmatpush.bf16.msra.mxu0 %v79
  %99 = vmatpush.bf16.msra.mxu0 %v78
  %100 = vmatpush.bf16.msra.mxu0 %v77
  %101 = vmatmul.bf16.gmra.mxu0 %v41
  %v102 = vpop.f32.mrf.mxu0
  %v103 = vadd.f32 0.0, %v102
  %v104 = vpop.f32.mrf.mxu0
  %v105 = vadd.f32 0.0, %v104
  %106 = vmatmul.bf16.gmra.mxu0 %v42
  %v107 = vpop.f32.mrf.mxu0
  %v108 = vadd.f32 0.0, %v107
  %v109 = vpop.f32.mrf.mxu0
  %v110 = vadd.f32 0.0, %v109
  %111 = vdwg.mxu0
  %112 = vst [vmem:[%s2] sm:$0xff] %v103
  %113 = vst [vmem:[%s2 + $0x8] sm:$0xff] %v105
  %114 = vst [vmem:[%s2 + $0x10] sm:$0xff] %v108
  %115 = vst [vmem:[%s2 + $0x18] sm:$0xff] %v110
  %v116 = vadd.f32 %v103, %v105
  %v117 = vadd.f32 %v116, %v108
  %v118 = vadd.f32 %v117, %v110
  %v119 = vrot.slane %v118, 4
  %v120 = vadd.f32 %v118, %v119
  %v121 = vrot.slane %v120, 2
  %v122 = vadd.f32 %v120, %v121
  %v123 = vrot.slane %v122, 1
  %v124 = vadd.f32 %v122, %v123
  %v125 = vmul.f32 %v103, %v103
  %v126 = vmul.f32 %v105, %v105
  %v127 = vmul.f32 %v108, %v108
  %v128 = vmul.f32 %v110, %v110
  %v129 = vadd.f32 %v125, %v126
  %v130 = vadd.f32 %v129, %v127
  %v131 = vadd.f32 %v130, %v128
  %v132 = vrot.slane %v131, 4
  %v133 = vadd.f32 %v131, %v132
  %v134 = vrot.slane %v133, 2
  %v135 = vadd.f32 %v133, %v134
  %v136 = vrot.slane %v135, 1
  %v137 = vadd.f32 %v135, %v136
  %v138 = vlaneseq
  %v139 = vshrl.u32 %v138, 7
  %vm140 = vcmp.eq.s32.totalorder %v139, 0
  %vm141 = vcmp.eq.s32.totalorder %v139, 1
  %v142 = vsel %vm141, %v137, 0.0
  %v143 = vsel %vm140, %v124, %v142
  %144 = vst [vmem:[%s3] sm:$0xff] %v143
  // Predicated region
  $region10: #{_lambda_.33} parent=0 // pred_check
    _
  $region11: #{_lambda_.33} parent=0 // pred_check_branch
    %146 = sbr.rel (0) target = $region13
  $region12: #{_lambda_.33} parent=0 // pred_region
    _
  $region13: #{_lambda_.33} parent=0 // pred_fallthru
    _
  // Predicated region
  $region14: #{_lambda_.33} parent=0 // pred_check
    _
  $region15: #{_lambda_.33} parent=0 // pred_check_branch
    %148 = sbr.rel (0) target = $region17
  $region16: #{_lambda_.33} parent=0 // pred_region
    _
  $region17: #{_lambda_.33} parent=0 // pred_fallthru
    _
  // Predicated region
  $region18: #{_lambda_.33} parent=0 // pred_check
    _
  $region19: #{_lambda_.33} parent=0 // pred_check_branch
    %150 = sbr.rel (0) target = $region21
  $region20: #{_lambda_.33} parent=0 // pred_region
    _
  $region21: #{_lambda_.33} parent=0 // pred_fallthru
    _
  // Predicated region
  $region22: #{_lambda_.33} parent=0 // pred_check
    _
  $region23: #{_lambda_.33} parent=0 // pred_check_branch
    %152 = sbr.rel (0) target = $region25
  $region24: #{_lambda_.33} parent=0 // pred_region
    _
  $region25: #{_lambda_.33} parent=0 // pred_fallthru
    _

// kernel: _lambda_.37
$region0: #{_lambda_.37}
  #allocation0 [shape = 'u32[]', space=smem, size = 0x4, offset = 0x4, fixed_abs, tag = 'smem constant byte address 0x4 - core index']
  #allocation1 [shape = 'u32[72,128]{1,0:T(1,128)}', space=vmem, size = 0x9000, scoped, tag = 'internal scratch']
  %s0 = inlined_call_operand.vmem [shape: bf16[512,512], index: 0, kind: input, shape index: {}]
  %s1 = inlined_call_operand.vmem [shape: bf16[512,128], index: 1, kind: input, shape index: {}]
  %s2 = inlined_call_operand.vmem [shape: f32[1,128], index: 2, kind: input, shape index: {}]
  %s3 = inlined_call_operand.vmem [shape: f32[512,128], index: 3, kind: output, shape index: {}]
  %s4 = sld [smem:[#allocation0]]
  $region22: #{_lambda_.37} parent=0
    _
  %s6 = ssub.s32 1, %s4
  %s7 = scalar_select 0, %s6, %s4
  // Predicated region
  $region2: #{_lambda_.37} parent=0 // pred_check
    _
  $region3: #{_lambda_.37} parent=0 // pred_check_branch
    %9 = sbr.rel (0) target = $region5
  $region4: #{_lambda_.37} parent=0 // pred_region
    _
  $region5: #{_lambda_.37} parent=0 // pred_fallthru
    _
  // Predicated region
  $region6: #{_lambda_.37} parent=0 // pred_check
    _
  $region7: #{_lambda_.37} parent=0 // pred_check_branch
    %11 = sbr.rel (0) target = $region9
  $region8: #{_lambda_.37} parent=0 // pred_region
    _
  $region9: #{_lambda_.37} parent=0 // pred_fallthru
    _
  // Predicated region
  $region10: #{_lambda_.37} parent=0 // pred_check
    _
  $region11: #{_lambda_.37} parent=0 // pred_check_branch
    %13 = sbr.rel (0) target = $region13
  $region12: #{_lambda_.37} parent=0 // pred_region
    _
  $region13: #{_lambda_.37} parent=0 // pred_fallthru
    _
  %v14 = vld [vmem:[%s0] sm:$0xff]
  %v15 = vld [vmem:[%s0 + $0x8] sm:$0xff]
  %v16 = vld [vmem:[%s0 + $0x10] sm:$0xff]
  %v17 = vld [vmem:[%s0 + $0x18] sm:$0xff]
  %v18 = vld [vmem:[%s0 + $0x20] sm:$0xff]
  %v19 = vld [vmem:[%s0 + $0x28] sm:$0xff]
  %v20 = vld [vmem:[%s0 + $0x30] sm:$0xff]
  %v21 = vld [vmem:[%s0 + $0x38] sm:$0xff]
  %v22 = vld [vmem:[%s0 + $0x40] sm:$0xff]
  %v23 = vld [vmem:[%s0 + $0x48] sm:$0xff]
  %v24 = vld [vmem:[%s0 + $0x50] sm:$0xff]
  %v25 = vld [vmem:[%s0 + $0x58] sm:$0xff]
  %v26 = vld [vmem:[%s0 + $0x60] sm:$0xff]
  %v27 = vld [vmem:[%s0 + $0x68] sm:$0xff]
  %v28 = vld [vmem:[%s0 + $0x70] sm:$0xff]
  %v29 = vld [vmem:[%s0 + $0x78] sm:$0xff]
  %v30 = vld [vmem:[%s0 + $0x80] sm:$0xff]
  %v31 = vld [vmem:[%s0 + $0x88] sm:$0xff]
  %v32 = vld [vmem:[%s0 + $0x90] sm:$0xff]
  %v33 = vld [vmem:[%s0 + $0x98] sm:$0xff]
  %v34 = vld [vmem:[%s0 + $0xa0] sm:$0xff]
  %v35 = vld [vmem:[%s0 + $0xa8] sm:$0xff]
  %v36 = vld [vmem:[%s0 + $0xb0] sm:$0xff]
  %v37 = vld [vmem:[%s0 + $0xb8] sm:$0xff]
  %v38 = vld [vmem:[%s0 + $0xc0] sm:$0xff]
  %v39 = vld [vmem:[%s0 + $0xc8] sm:$0xff]
  %v40 = vld [vmem:[%s0 + $0xd0] sm:$0xff]
  %v41 = vld [vmem:[%s0 + $0xd8] sm:$0xff]
  %v42 = vld [vmem:[%s0 + $0xe0] sm:$0xff]
  %v43 = vld [vmem:[%s0 + $0xe8] sm:$0xff]
  %v44 = vld [vmem:[%s0 + $0xf0] sm:$0xff]
  %v45 = vld [vmem:[%s0 + $0xf8] sm:$0xff]
  %v46 = vld [vmem:[%s0 + $0x100] sm:$0xff]
  %v47 = vld [vmem:[%s0 + $0x108] sm:$0xff]
  %v48 = vld [vmem:[%s0 + $0x110] sm:$0xff]
  %v49 = vld [vmem:[%s0 + $0x118] sm:$0xff]
  %v50 = vld [vmem:[%s0 + $0x120] sm:$0xff]
  %v51 = vld [vmem:[%s0 + $0x128] sm:$0xff]
  %v52 = vld [vmem:[%s0 + $0x130] sm:$0xff]
  %v53 = vld [vmem:[%s0 + $0x138] sm:$0xff]
  %v54 = vld [vmem:[%s0 + $0x140] sm:$0xff]
  %v55 = vld [vmem:[%s0 + $0x148] sm:$0xff]
  %v56 = vld [vmem:[%s0 + $0x150] sm:$0xff]
  %v57 = vld [vmem:[%s0 + $0x158] sm:$0xff]
  %v58 = vld [vmem:[%s0 + $0x160] sm:$0xff]
  %v59 = vld [vmem:[%s0 + $0x168] sm:$0xff]
  %v60 = vld [vmem:[%s0 + $0x170] sm:$0xff]
  %v61 = vld [vmem:[%s0 + $0x178] sm:$0xff]
  %v62 = vld [vmem:[%s0 + $0x180] sm:$0xff]
  %v63 = vld [vmem:[%s0 + $0x188] sm:$0xff]
  %v64 = vld [vmem:[%s0 + $0x190] sm:$0xff]
  %v65 = vld [vmem:[%s0 + $0x198] sm:$0xff]
  %v66 = vld [vmem:[%s0 + $0x1a0] sm:$0xff]
  %v67 = vld [vmem:[%s0 + $0x1a8] sm:$0xff]
  %v68 = vld [vmem:[%s0 + $0x1b0] sm:$0xff]
  %v69 = vld [vmem:[%s0 + $0x1b8] sm:$0xff]
  %v70 = vld [vmem:[%s0 + $0x1c0] sm:$0xff]
  %v71 = vld [vmem:[%s0 + $0x1c8] sm:$0xff]
  %v72 = vld [vmem:[%s0 + $0x1d0] sm:$0xff]
  %v73 = vld [vmem:[%s0 + $0x1d8] sm:$0xff]
  %v74 = vld [vmem:[%s0 + $0x1e0] sm:$0xff]
  %v75 = vld [vmem:[%s0 + $0x1e8] sm:$0xff]
  %v76 = vld [vmem:[%s0 + $0x1f0] sm:$0xff]
  %v77 = vld [vmem:[%s0 + $0x1f8] sm:$0xff]
  %v78 = vld [vmem:[%s0 + $0x200] sm:$0xff]
  %v79 = vld [vmem:[%s0 + $0x208] sm:$0xff]
  %v80 = vld [vmem:[%s0 + $0x210] sm:$0xff]
  %v81 = vld [vmem:[%s0 + $0x218] sm:$0xff]
  %v82 = vld [vmem:[%s0 + $0x220] sm:$0xff]
  %v83 = vld [vmem:[%s0 + $0x228] sm:$0xff]
  %v84 = vld [vmem:[%s0 + $0x230] sm:$0xff]
  %v85 = vld [vmem:[%s0 + $0x238] sm:$0xff]
  %v86 = vld [vmem:[%s0 + $0x240] sm:$0xff]
  %v87 = vld [vmem:[%s0 + $0x248] sm:$0xff]
  %v88 = vld [vmem:[%s0 + $0x250] sm:$0xff]
  %v89 = vld [vmem:[%s0 + $0x258] sm:$0xff]
  %v90 = vld [vmem:[%s0 + $0x260] sm:$0xff]
  %v91 = vld [vmem:[%s0 + $0x268] sm:$0xff]
  %v92 = vld [vmem:[%s0 + $0x270] sm:$0xff]
  %v93 = vld [vmem:[%s0 + $0x278] sm:$0xff]
  %v94 = vld [vmem:[%s0 + $0x280] sm:$0xff]
  %v95 = vld [vmem:[%s0 + $0x288] sm:$0xff]
  %v96 = vld [vmem:[%s0 + $0x290] sm:$0xff]
  %v97 = vld [vmem:[%s0 + $0x298] sm:$0xff]
  %v98 = vld [vmem:[%s0 + $0x2a0] sm:$0xff]
  %v99 = vld [vmem:[%s0 + $0x2a8] sm:$0xff]
  %v100 = vld [vmem:[%s0 + $0x2b0] sm:$0xff]
  %v101 = vld [vmem:[%s0 + $0x2b8] sm:$0xff]
  %v102 = vld [vmem:[%s0 + $0x2c0] sm:$0xff]
  %v103 = vld [vmem:[%s0 + $0x2c8] sm:$0xff]
  %v104 = vld [vmem:[%s0 + $0x2d0] sm:$0xff]
  %v105 = vld [vmem:[%s0 + $0x2d8] sm:$0xff]
  %v106 = vld [vmem:[%s0 + $0x2e0] sm:$0xff]
  %v107 = vld [vmem:[%s0 + $0x2e8] sm:$0xff]
  %v108 = vld [vmem:[%s0 + $0x2f0] sm:$0xff]
  %v109 = vld [vmem:[%s0 + $0x2f8] sm:$0xff]
  %v110 = vld [vmem:[%s0 + $0x300] sm:$0xff]
  %v111 = vld [vmem:[%s0 + $0x308] sm:$0xff]
  %v112 = vld [vmem:[%s0 + $0x310] sm:$0xff]
  %v113 = vld [vmem:[%s0 + $0x318] sm:$0xff]
  %v114 = vld [vmem:[%s0 + $0x320] sm:$0xff]
  %v115 = vld [vmem:[%s0 + $0x328] sm:$0xff]
  %v116 = vld [vmem:[%s0 + $0x330] sm:$0xff]
  %v117 = vld [vmem:[%s0 + $0x338] sm:$0xff]
  %v118 = vld [vmem:[%s0 + $0x340] sm:$0xff]
  %v119 = vld [vmem:[%s0 + $0x348] sm:$0xff]
  %v120 = vld [vmem:[%s0 + $0x350] sm:$0xff]
  %v121 = vld [vmem:[%s0 + $0x358] sm:$0xff]
  %v122 = vld [vmem:[%s0 + $0x360] sm:$0xff]
  %v123 = vld [vmem:[%s0 + $0x368] sm:$0xff]
  %v124 = vld [vmem:[%s0 + $0x370] sm:$0xff]
  %v125 = vld [vmem:[%s0 + $0x378] sm:$0xff]
  %v126 = vld [vmem:[%s0 + $0x380] sm:$0xff]
  %v127 = vld [vmem:[%s0 + $0x388] sm:$0xff]
  %v128 = vld [vmem:[%s0 + $0x390] sm:$0xff]
  %v129 = vld [vmem:[%s0 + $0x398] sm:$0xff]
  %v130 = vld [vmem:[%s0 + $0x3a0] sm:$0xff]
  %v131 = vld [vmem:[%s0 + $0x3a8] sm:$0xff]
  %v132 = vld [vmem:[%s0 + $0x3b0] sm:$0xff]
  %v133 = vld [vmem:[%s0 + $0x3b8] sm:$0xff]
  %v134 = vld [vmem:[%s0 + $0x3c0] sm:$0xff]
  %v135 = vld [vmem:[%s0 + $0x3c8] sm:$0xff]
  %v136 = vld [vmem:[%s0 + $0x3d0] sm:$0xff]
  %v137 = vld [vmem:[%s0 + $0x3d8] sm:$0xff]
  %v138 = vld [vmem:[%s0 + $0x3e0] sm:$0xff]
  %v139 = vld [vmem:[%s0 + $0x3e8] sm:$0xff]
  %v140 = vld [vmem:[%s0 + $0x3f0] sm:$0xff]
  %v141 = vld [vmem:[%s0 + $0x3f8] sm:$0xff]
  %v142 = vld [vmem:[%s1] sm:$0xf]
  %v143 = vld [vmem:[%s1 + $0x4] sm:$0xf]
  %v144 = vld [vmem:[%s1 + $0x8] sm:$0xf]
  %v145 = vld [vmem:[%s1 + $0xc] sm:$0xf]
  %v146 = vld [vmem:[%s1 + $0x10] sm:$0xf]
  %v147 = vld [vmem:[%s1 + $0x14] sm:$0xf]
  %v148 = vld [vmem:[%s1 + $0x18] sm:$0xf]
  %v149 = vld [vmem:[%s1 + $0x1c] sm:$0xf]
  %v150 = vld [vmem:[%s1 + $0x20] sm:$0xf]
  %v151 = vld [vmem:[%s1 + $0x24] sm:$0xf]
  %v152 = vld [vmem:[%s1 + $0x28] sm:$0xf]
  %v153 = vld [vmem:[%s1 + $0x2c] sm:$0xf]
  %v154 = vld [vmem:[%s1 + $0x30] sm:$0xf]
  %v155 = vld [vmem:[%s1 + $0x34] sm:$0xf]
  %v156 = vld [vmem:[%s1 + $0x38] sm:$0xf]
  %v157 = vld [vmem:[%s1 + $0x3c] sm:$0xf]
  %v158 = vld [vmem:[%s1 + $0x40] sm:$0xf]
  %v159 = vld [vmem:[%s1 + $0x44] sm:$0xf]
  %v160 = vld [vmem:[%s1 + $0x48] sm:$0xf]
  %v161 = vld [vmem:[%s1 + $0x4c] sm:$0xf]
  %v162 = vld [vmem:[%s1 + $0x50] sm:$0xf]
  %v163 = vld [vmem:[%s1 + $0x54] sm:$0xf]
  %v164 = vld [vmem:[%s1 + $0x58] sm:$0xf]
  %v165 = vld [vmem:[%s1 + $0x5c] sm:$0xf]
  %v166 = vld [vmem:[%s1 + $0x60] sm:$0xf]
  %v167 = vld [vmem:[%s1 + $0x64] sm:$0xf]
  %v168 = vld [vmem:[%s1 + $0x68] sm:$0xf]
  %v169 = vld [vmem:[%s1 + $0x6c] sm:$0xf]
  %v170 = vld [vmem:[%s1 + $0x70] sm:$0xf]
  %v171 = vld [vmem:[%s1 + $0x74] sm:$0xf]
  %v172 = vld [vmem:[%s1 + $0x78] sm:$0xf]
  %v173 = vld [vmem:[%s1 + $0x7c] sm:$0xf]
  %v174 = vld [vmem:[%s1 + $0x80] sm:$0xf]
  %v175 = vld [vmem:[%s1 + $0x84] sm:$0xf]
  %v176 = vld [vmem:[%s1 + $0x88] sm:$0xf]
  %v177 = vld [vmem:[%s1 + $0x8c] sm:$0xf]
  %v178 = vld [vmem:[%s1 + $0x90] sm:$0xf]
  %v179 = vld [vmem:[%s1 + $0x94] sm:$0xf]
  %v180 = vld [vmem:[%s1 + $0x98] sm:$0xf]
  %v181 = vld [vmem:[%s1 + $0x9c] sm:$0xf]
  %v182 = vld [vmem:[%s1 + $0xa0] sm:$0xf]
  %v183 = vld [vmem:[%s1 + $0xa4] sm:$0xf]
  %v184 = vld [vmem:[%s1 + $0xa8] sm:$0xf]
  %v185 = vld [vmem:[%s1 + $0xac] sm:$0xf]
  %v186 = vld [vmem:[%s1 + $0xb0] sm:$0xf]
  %v187 = vld [vmem:[%s1 + $0xb4] sm:$0xf]
  %v188 = vld [vmem:[%s1 + $0xb8] sm:$0xf]
  %v189 = vld [vmem:[%s1 + $0xbc] sm:$0xf]
  %v190 = vld [vmem:[%s1 + $0xc0] sm:$0xf]
  %v191 = vld [vmem:[%s1 + $0xc4] sm:$0xf]
  %v192 = vld [vmem:[%s1 + $0xc8] sm:$0xf]
  %v193 = vld [vmem:[%s1 + $0xcc] sm:$0xf]
  %v194 = vld [vmem:[%s1 + $0xd0] sm:$0xf]
  %v195 = vld [vmem:[%s1 + $0xd4] sm:$0xf]
  %v196 = vld [vmem:[%s1 + $0xd8] sm:$0xf]
  %v197 = vld [vmem:[%s1 + $0xdc] sm:$0xf]
  %v198 = vld [vmem:[%s1 + $0xe0] sm:$0xf]
  %v199 = vld [vmem:[%s1 + $0xe4] sm:$0xf]
  %v200 = vld [vmem:[%s1 + $0xe8] sm:$0xf]
  %v201 = vld [vmem:[%s1 + $0xec] sm:$0xf]
  %v202 = vld [vmem:[%s1 + $0xf0] sm:$0xf]
  %v203 = vld [vmem:[%s1 + $0xf4] sm:$0xf]
  %v204 = vld [vmem:[%s1 + $0xf8] sm:$0xf]
  %v205 = vld [vmem:[%s1 + $0xfc] sm:$0xf]
  %v206 = vld [vmem:[%s2] sm:$0x1]
  %v208 = vperm.slane %v206, 0
  %v338 = vunpack.c.l.b16 %v14
  %v339 = vunpack.c.h.b16 %v14
  %v340 = vunpack.c.l.b16 %v15
  %v341 = vunpack.c.h.b16 %v15
  %v342 = vunpack.c.l.b16 %v16
  %v343 = vunpack.c.h.b16 %v16
  %v344 = vunpack.c.l.b16 %v17
  %v345 = vunpack.c.h.b16 %v17
  %v346 = vunpack.c.l.b16 %v18
  %v347 = vunpack.c.h.b16 %v18
  %v348 = vunpack.c.l.b16 %v19
  %v349 = vunpack.c.h.b16 %v19
  %v350 = vunpack.c.l.b16 %v20
  %v351 = vunpack.c.h.b16 %v20
  %v352 = vunpack.c.l.b16 %v21
  %v353 = vunpack.c.h.b16 %v21
  %v354 = vunpack.c.l.b16 %v22
  %v355 = vunpack.c.h.b16 %v22
  %v356 = vunpack.c.l.b16 %v23
  %v357 = vunpack.c.h.b16 %v23
  %v358 = vunpack.c.l.b16 %v24
  %v359 = vunpack.c.h.b16 %v24
  %v360 = vunpack.c.l.b16 %v25
  %v361 = vunpack.c.h.b16 %v25
  %v362 = vunpack.c.l.b16 %v26
  %v363 = vunpack.c.h.b16 %v26
  %v364 = vunpack.c.l.b16 %v27
  %v365 = vunpack.c.h.b16 %v27
  %v366 = vunpack.c.l.b16 %v28
  %v367 = vunpack.c.h.b16 %v28
  %v368 = vunpack.c.l.b16 %v29
  %v369 = vunpack.c.h.b16 %v29
  %v370 = vunpack.c.l.b16 %v30
  %v371 = vunpack.c.h.b16 %v30
  %v372 = vunpack.c.l.b16 %v31
  %v373 = vunpack.c.h.b16 %v31
  %v374 = vunpack.c.l.b16 %v32
  %v375 = vunpack.c.h.b16 %v32
  %v376 = vunpack.c.l.b16 %v33
  %v377 = vunpack.c.h.b16 %v33
  %v378 = vunpack.c.l.b16 %v34
  %v379 = vunpack.c.h.b16 %v34
  %v380 = vunpack.c.l.b16 %v35
  %v381 = vunpack.c.h.b16 %v35
  %v382 = vunpack.c.l.b16 %v36
  %v383 = vunpack.c.h.b16 %v36
  %v384 = vunpack.c.l.b16 %v37
  %v385 = vunpack.c.h.b16 %v37
  %v386 = vunpack.c.l.b16 %v38
  %v387 = vunpack.c.h.b16 %v38
  %v388 = vunpack.c.l.b16 %v39
  %v389 = vunpack.c.h.b16 %v39
  %v390 = vunpack.c.l.b16 %v40
  %v391 = vunpack.c.h.b16 %v40
  %v392 = vunpack.c.l.b16 %v41
  %v393 = vunpack.c.h.b16 %v41
  %v394 = vunpack.c.l.b16 %v42
  %v395 = vunpack.c.h.b16 %v42
  %v396 = vunpack.c.l.b16 %v43
  %v397 = vunpack.c.h.b16 %v43
  %v398 = vunpack.c.l.b16 %v44
  %v399 = vunpack.c.h.b16 %v44
  %v400 = vunpack.c.l.b16 %v45
  %v401 = vunpack.c.h.b16 %v45
  %v402 = vunpack.c.l.b16 %v46
  %v403 = vunpack.c.h.b16 %v46
  %v404 = vunpack.c.l.b16 %v47
  %v405 = vunpack.c.h.b16 %v47
  %v406 = vunpack.c.l.b16 %v48
  %v407 = vunpack.c.h.b16 %v48
  %v408 = vunpack.c.l.b16 %v49
  %v409 = vunpack.c.h.b16 %v49
  %v410 = vunpack.c.l.b16 %v50
  %v411 = vunpack.c.h.b16 %v50
  %v412 = vunpack.c.l.b16 %v51
  %v413 = vunpack.c.h.b16 %v51
  %v414 = vunpack.c.l.b16 %v52
  %v415 = vunpack.c.h.b16 %v52
  %v416 = vunpack.c.l.b16 %v53
  %v417 = vunpack.c.h.b16 %v53
  %v418 = vunpack.c.l.b16 %v54
  %v419 = vunpack.c.h.b16 %v54
  %v420 = vunpack.c.l.b16 %v55
  %v421 = vunpack.c.h.b16 %v55
  %v422 = vunpack.c.l.b16 %v56
  %v423 = vunpack.c.h.b16 %v56
  %v424 = vunpack.c.l.b16 %v57
  %v425 = vunpack.c.h.b16 %v57
  %v426 = vunpack.c.l.b16 %v58
  %v427 = vunpack.c.h.b16 %v58
  %v428 = vunpack.c.l.b16 %v59
  %v429 = vunpack.c.h.b16 %v59
  %v430 = vunpack.c.l.b16 %v60
  %v431 = vunpack.c.h.b16 %v60
  %v432 = vunpack.c.l.b16 %v61
  %v433 = vunpack.c.h.b16 %v61
  %v434 = vunpack.c.l.b16 %v62
  %v435 = vunpack.c.h.b16 %v62
  %v436 = vunpack.c.l.b16 %v63
  %v437 = vunpack.c.h.b16 %v63
  %v438 = vunpack.c.l.b16 %v64
  %v439 = vunpack.c.h.b16 %v64
  %v440 = vunpack.c.l.b16 %v65
  %v441 = vunpack.c.h.b16 %v65
  %v442 = vunpack.c.l.b16 %v66
  %v443 = vunpack.c.h.b16 %v66
  %v444 = vunpack.c.l.b16 %v67
  %v445 = vunpack.c.h.b16 %v67
  %v446 = vunpack.c.l.b16 %v68
  %v447 = vunpack.c.h.b16 %v68
  %v448 = vunpack.c.l.b16 %v69
  %v449 = vunpack.c.h.b16 %v69
  %v450 = vunpack.c.l.b16 %v70
  %v451 = vunpack.c.h.b16 %v70
  %v452 = vunpack.c.l.b16 %v71
  %v453 = vunpack.c.h.b16 %v71
  %v454 = vunpack.c.l.b16 %v72
  %v455 = vunpack.c.h.b16 %v72
  %v456 = vunpack.c.l.b16 %v73
  %v457 = vunpack.c.h.b16 %v73
  %v458 = vunpack.c.l.b16 %v74
  %v459 = vunpack.c.h.b16 %v74
  %v460 = vunpack.c.l.b16 %v75
  %v461 = vunpack.c.h.b16 %v75
  %v462 = vunpack.c.l.b16 %v76
  %v463 = vunpack.c.h.b16 %v76
  %v464 = vunpack.c.l.b16 %v77
  %v465 = vunpack.c.h.b16 %v77
  %v466 = vunpack.c.l.b16 %v78
  %v467 = vunpack.c.h.b16 %v78
  %v468 = vunpack.c.l.b16 %v79
  %v469 = vunpack.c.h.b16 %v79
  %v470 = vunpack.c.l.b16 %v80
  %v471 = vunpack.c.h.b16 %v80
  %v472 = vunpack.c.l.b16 %v81
  %v473 = vunpack.c.h.b16 %v81
  %v474 = vunpack.c.l.b16 %v82
  %v475 = vunpack.c.h.b16 %v82
  %v476 = vunpack.c.l.b16 %v83
  %v477 = vunpack.c.h.b16 %v83
  %v478 = vunpack.c.l.b16 %v84
  %v479 = vunpack.c.h.b16 %v84
  %v480 = vunpack.c.l.b16 %v85
  %v481 = vunpack.c.h.b16 %v85
  %v482 = vunpack.c.l.b16 %v86
  %v483 = vunpack.c.h.b16 %v86
  %v484 = vunpack.c.l.b16 %v87
  %v485 = vunpack.c.h.b16 %v87
  %v486 = vunpack.c.l.b16 %v88
  %v487 = vunpack.c.h.b16 %v88
  %v488 = vunpack.c.l.b16 %v89
  %v489 = vunpack.c.h.b16 %v89
  %v490 = vunpack.c.l.b16 %v90
  %v491 = vunpack.c.h.b16 %v90
  %v492 = vunpack.c.l.b16 %v91
  %v493 = vunpack.c.h.b16 %v91
  %v494 = vunpack.c.l.b16 %v92
  %v495 = vunpack.c.h.b16 %v92
  %v496 = vunpack.c.l.b16 %v93
  %v497 = vunpack.c.h.b16 %v93
  %v498 = vunpack.c.l.b16 %v94
  %v499 = vunpack.c.h.b16 %v94
  %v500 = vunpack.c.l.b16 %v95
  %v501 = vunpack.c.h.b16 %v95
  %v502 = vunpack.c.l.b16 %v96
  %v503 = vunpack.c.h.b16 %v96
  %v504 = vunpack.c.l.b16 %v97
  %v505 = vunpack.c.h.b16 %v97
  %v506 = vunpack.c.l.b16 %v98
  %v507 = vunpack.c.h.b16 %v98
  %v508 = vunpack.c.l.b16 %v99
  %v509 = vunpack.c.h.b16 %v99
  %v510 = vunpack.c.l.b16 %v100
  %v511 = vunpack.c.h.b16 %v100
  %v512 = vunpack.c.l.b16 %v101
  %v513 = vunpack.c.h.b16 %v101
  %v514 = vunpack.c.l.b16 %v102
  %v515 = vunpack.c.h.b16 %v102
  %v516 = vunpack.c.l.b16 %v103
  %v517 = vunpack.c.h.b16 %v103
  %v518 = vunpack.c.l.b16 %v104
  %v519 = vunpack.c.h.b16 %v104
  %v520 = vunpack.c.l.b16 %v105
  %v521 = vunpack.c.h.b16 %v105
  %v522 = vunpack.c.l.b16 %v106
  %v523 = vunpack.c.h.b16 %v106
  %v524 = vunpack.c.l.b16 %v107
  %v525 = vunpack.c.h.b16 %v107
  %v526 = vunpack.c.l.b16 %v108
  %v527 = vunpack.c.h.b16 %v108
  %v528 = vunpack.c.l.b16 %v109
  %v529 = vunpack.c.h.b16 %v109
  %v530 = vunpack.c.l.b16 %v110
  %v531 = vunpack.c.h.b16 %v110
  %v532 = vunpack.c.l.b16 %v111
  %v533 = vunpack.c.h.b16 %v111
  %v534 = vunpack.c.l.b16 %v112
  %v535 = vunpack.c.h.b16 %v112
  %v536 = vunpack.c.l.b16 %v113
  %v537 = vunpack.c.h.b16 %v113
  %v538 = vunpack.c.l.b16 %v114
  %v539 = vunpack.c.h.b16 %v114
  %v540 = vunpack.c.l.b16 %v115
  %v541 = vunpack.c.h.b16 %v115
  %v542 = vunpack.c.l.b16 %v116
  %v543 = vunpack.c.h.b16 %v116
  %v544 = vunpack.c.l.b16 %v117
  %v545 = vunpack.c.h.b16 %v117
  %v546 = vunpack.c.l.b16 %v118
  %v547 = vunpack.c.h.b16 %v118
  %v548 = vunpack.c.l.b16 %v119
  %v549 = vunpack.c.h.b16 %v119
  %v550 = vunpack.c.l.b16 %v120
  %v551 = vunpack.c.h.b16 %v120
  %v552 = vunpack.c.l.b16 %v121
  %v553 = vunpack.c.h.b16 %v121
  %v554 = vunpack.c.l.b16 %v122
  %v555 = vunpack.c.h.b16 %v122
  %v556 = vunpack.c.l.b16 %v123
  %v557 = vunpack.c.h.b16 %v123
  %v558 = vunpack.c.l.b16 %v124
  %v559 = vunpack.c.h.b16 %v124
  %v560 = vunpack.c.l.b16 %v125
  %v561 = vunpack.c.h.b16 %v125
  %v562 = vunpack.c.l.b16 %v126
  %v563 = vunpack.c.h.b16 %v126
  %v564 = vunpack.c.l.b16 %v127
  %v565 = vunpack.c.h.b16 %v127
  %v566 = vunpack.c.l.b16 %v128
  %v567 = vunpack.c.h.b16 %v128
  %v568 = vunpack.c.l.b16 %v129
  %v569 = vunpack.c.h.b16 %v129
  %v570 = vunpack.c.l.b16 %v130
  %v571 = vunpack.c.h.b16 %v130
  %v572 = vunpack.c.l.b16 %v131
  %v573 = vunpack.c.h.b16 %v131
  %v574 = vunpack.c.l.b16 %v132
  %v575 = vunpack.c.h.b16 %v132
  %v576 = vunpack.c.l.b16 %v133
  %v577 = vunpack.c.h.b16 %v133
  %v578 = vunpack.c.l.b16 %v134
  %v579 = vunpack.c.h.b16 %v134
  %v580 = vunpack.c.l.b16 %v135
  %v581 = vunpack.c.h.b16 %v135
  %v582 = vunpack.c.l.b16 %v136
  %v583 = vunpack.c.h.b16 %v136
  %v584 = vunpack.c.l.b16 %v137
  %v585 = vunpack.c.h.b16 %v137
  %v586 = vunpack.c.l.b16 %v138
  %v587 = vunpack.c.h.b16 %v138
  %v588 = vunpack.c.l.b16 %v139
  %v589 = vunpack.c.h.b16 %v139
  %v590 = vunpack.c.l.b16 %v140
  %v591 = vunpack.c.h.b16 %v140
  %v592 = vunpack.c.l.b16 %v141
  %v593 = vunpack.c.h.b16 %v141
  %v594 = vpack.c.b16 %v342, %v338
  %v595 = vpack.c.b16 %v343, %v339
  %v596 = vpack.c.b16 %v344, %v340
  %v597 = vpack.c.b16 %v345, %v341
  %v598 = vpack.c.b16 %v350, %v346
  %v599 = vpack.c.b16 %v351, %v347
  %v600 = vpack.c.b16 %v352, %v348
  %v601 = vpack.c.b16 %v353, %v349
  %v602 = vpack.c.b16 %v358, %v354
  %v603 = vpack.c.b16 %v359, %v355
  %v604 = vpack.c.b16 %v360, %v356
  %v605 = vpack.c.b16 %v361, %v357
  %v606 = vpack.c.b16 %v366, %v362
  %v607 = vpack.c.b16 %v367, %v363
  %v608 = vpack.c.b16 %v368, %v364
  %v609 = vpack.c.b16 %v369, %v365
  %v610 = vpack.c.b16 %v374, %v370
  %v611 = vpack.c.b16 %v375, %v371
  %v612 = vpack.c.b16 %v376, %v372
  %v613 = vpack.c.b16 %v377, %v373
  %v614 = vpack.c.b16 %v382, %v378
  %v615 = vpack.c.b16 %v383, %v379
  %v616 = vpack.c.b16 %v384, %v380
  %v617 = vpack.c.b16 %v385, %v381
  %v618 = vpack.c.b16 %v390, %v386
  %v619 = vpack.c.b16 %v391, %v387
  %v620 = vpack.c.b16 %v392, %v388
  %v621 = vpack.c.b16 %v393, %v389
  %v622 = vpack.c.b16 %v398, %v394
  %v623 = vpack.c.b16 %v399, %v395
  %v624 = vpack.c.b16 %v400, %v396
  %v625 = vpack.c.b16 %v401, %v397
  %v626 = vpack.c.b16 %v406, %v402
  %v627 = vpack.c.b16 %v407, %v403
  %v628 = vpack.c.b16 %v408, %v404
  %v629 = vpack.c.b16 %v409, %v405
  %v630 = vpack.c.b16 %v414, %v410
  %v631 = vpack.c.b16 %v415, %v411
  %v632 = vpack.c.b16 %v416, %v412
  %v633 = vpack.c.b16 %v417, %v413
  %v634 = vpack.c.b16 %v422, %v418
  %v635 = vpack.c.b16 %v423, %v419
  %v636 = vpack.c.b16 %v424, %v420
  %v637 = vpack.c.b16 %v425, %v421
  %v638 = vpack.c.b16 %v430, %v426
  %v639 = vpack.c.b16 %v431, %v427
  %v640 = vpack.c.b16 %v432, %v428
  %v641 = vpack.c.b16 %v433, %v429
  %v642 = vpack.c.b16 %v438, %v434
  %v643 = vpack.c.b16 %v439, %v435
  %v644 = vpack.c.b16 %v440, %v436
  %v645 = vpack.c.b16 %v441, %v437
  %v646 = vpack.c.b16 %v446, %v442
  %v647 = vpack.c.b16 %v447, %v443
  %v648 = vpack.c.b16 %v448, %v444
  %v649 = vpack.c.b16 %v449, %v445
  %v650 = vpack.c.b16 %v454, %v450
  %v651 = vpack.c.b16 %v455, %v451
  %v652 = vpack.c.b16 %v456, %v452
  %v653 = vpack.c.b16 %v457, %v453
  %v654 = vpack.c.b16 %v462, %v458
  %v655 = vpack.c.b16 %v463, %v459
  %v656 = vpack.c.b16 %v464, %v460
  %v657 = vpack.c.b16 %v465, %v461
  %v658 = vpack.c.b16 %v470, %v466
  %v659 = vpack.c.b16 %v471, %v467
  %v660 = vpack.c.b16 %v472, %v468
  %v661 = vpack.c.b16 %v473, %v469
  %v662 = vpack.c.b16 %v478, %v474
  %v663 = vpack.c.b16 %v479, %v475
  %v664 = vpack.c.b16 %v480, %v476
  %v665 = vpack.c.b16 %v481, %v477
  %v666 = vpack.c.b16 %v486, %v482
  %v667 = vpack.c.b16 %v487, %v483
  %v668 = vpack.c.b16 %v488, %v484
  %v669 = vpack.c.b16 %v489, %v485
  %v670 = vpack.c.b16 %v494, %v490
  %v671 = vpack.c.b16 %v495, %v491
  %v672 = vpack.c.b16 %v496, %v492
  %v673 = vpack.c.b16 %v497, %v493
  %v674 = vpack.c.b16 %v502, %v498
  %v675 = vpack.c.b16 %v503, %v499
  %v676 = vpack.c.b16 %v504, %v500
  %v677 = vpack.c.b16 %v505, %v501
  %v678 = vpack.c.b16 %v510, %v506
  %v679 = vpack.c.b16 %v511, %v507
  %v680 = vpack.c.b16 %v512, %v508
  %v681 = vpack.c.b16 %v513, %v509
  %v682 = vpack.c.b16 %v518, %v514
  %v683 = vpack.c.b16 %v519, %v515
  %v684 = vpack.c.b16 %v520, %v516
  %v685 = vpack.c.b16 %v521, %v517
  %v686 = vpack.c.b16 %v526, %v522
  %v687 = vpack.c.b16 %v527, %v523
  %v688 = vpack.c.b16 %v528, %v524
  %v689 = vpack.c.b16 %v529, %v525
  %v690 = vpack.c.b16 %v534, %v530
  %v691 = vpack.c.b16 %v535, %v531
  %v692 = vpack.c.b16 %v536, %v532
  %v693 = vpack.c.b16 %v537, %v533
  %v694 = vpack.c.b16 %v542, %v538
  %v695 = vpack.c.b16 %v543, %v539
  %v696 = vpack.c.b16 %v544, %v540
  %v697 = vpack.c.b16 %v545, %v541
  %v698 = vpack.c.b16 %v550, %v546
  %v699 = vpack.c.b16 %v551, %v547
  %v700 = vpack.c.b16 %v552, %v548
  %v701 = vpack.c.b16 %v553, %v549
  %v702 = vpack.c.b16 %v558, %v554
  %v703 = vpack.c.b16 %v559, %v555
  %v704 = vpack.c.b16 %v560, %v556
  %v705 = vpack.c.b16 %v561, %v557
  %v706 = vpack.c.b16 %v566, %v562
  %v707 = vpack.c.b16 %v567, %v563
  %v708 = vpack.c.b16 %v568, %v564
  %v709 = vpack.c.b16 %v569, %v565
  %v710 = vpack.c.b16 %v574, %v570
  %v711 = vpack.c.b16 %v575, %v571
  %v712 = vpack.c.b16 %v576, %v572
  %v713 = vpack.c.b16 %v577, %v573
  %v714 = vpack.c.b16 %v582, %v578
  %v715 = vpack.c.b16 %v583, %v579
  %v716 = vpack.c.b16 %v584, %v580
  %v717 = vpack.c.b16 %v585, %v581
  %v718 = vpack.c.b16 %v590, %v586
  %v719 = vpack.c.b16 %v591, %v587
  %v720 = vpack.c.b16 %v592, %v588
  %v721 = vpack.c.b16 %v593, %v589
  %v914 = vunpack.c.l.b16 %v142
  %v915 = vunpack.c.l.b16 %v143
  %v916 = vunpack.c.l.b16 %v144
  %v917 = vunpack.c.l.b16 %v145
  %v918 = vunpack.c.l.b16 %v146
  %v919 = vunpack.c.l.b16 %v147
  %v920 = vunpack.c.l.b16 %v148
  %v921 = vunpack.c.l.b16 %v149
  %v922 = vunpack.c.l.b16 %v150
  %v923 = vunpack.c.l.b16 %v151
  %v924 = vunpack.c.l.b16 %v152
  %v925 = vunpack.c.l.b16 %v153
  %v926 = vunpack.c.l.b16 %v154
  %v927 = vunpack.c.l.b16 %v155
  %v928 = vunpack.c.l.b16 %v156
  %v929 = vunpack.c.l.b16 %v157
  %v930 = vunpack.c.l.b16 %v158
  %v931 = vunpack.c.l.b16 %v159
  %v932 = vunpack.c.l.b16 %v160
  %v933 = vunpack.c.l.b16 %v161
  %v934 = vunpack.c.l.b16 %v162
  %v935 = vunpack.c.l.b16 %v163
  %v936 = vunpack.c.l.b16 %v164
  %v937 = vunpack.c.l.b16 %v165
  %v938 = vunpack.c.l.b16 %v166
  %v939 = vunpack.c.l.b16 %v167
  %v940 = vunpack.c.l.b16 %v168
  %v941 = vunpack.c.l.b16 %v169
  %v942 = vunpack.c.l.b16 %v170
  %v943 = vunpack.c.l.b16 %v171
  %v944 = vunpack.c.l.b16 %v172
  %v945 = vunpack.c.l.b16 %v173
  %v946 = vunpack.c.l.b16 %v174
  %v947 = vunpack.c.l.b16 %v175
  %v948 = vunpack.c.l.b16 %v176
  %v949 = vunpack.c.l.b16 %v177
  %v950 = vunpack.c.l.b16 %v178
  %v951 = vunpack.c.l.b16 %v179
  %v952 = vunpack.c.l.b16 %v180
  %v953 = vunpack.c.l.b16 %v181
  %v954 = vunpack.c.l.b16 %v182
  %v955 = vunpack.c.l.b16 %v183
  %v956 = vunpack.c.l.b16 %v184
  %v957 = vunpack.c.l.b16 %v185
  %v958 = vunpack.c.l.b16 %v186
  %v959 = vunpack.c.l.b16 %v187
  %v960 = vunpack.c.l.b16 %v188
  %v961 = vunpack.c.l.b16 %v189
  %v962 = vunpack.c.l.b16 %v190
  %v963 = vunpack.c.l.b16 %v191
  %v964 = vunpack.c.l.b16 %v192
  %v965 = vunpack.c.l.b16 %v193
  %v966 = vunpack.c.l.b16 %v194
  %v967 = vunpack.c.l.b16 %v195
  %v968 = vunpack.c.l.b16 %v196
  %v969 = vunpack.c.l.b16 %v197
  %v970 = vunpack.c.l.b16 %v198
  %v971 = vunpack.c.l.b16 %v199
  %v972 = vunpack.c.l.b16 %v200
  %v973 = vunpack.c.l.b16 %v201
  %v974 = vunpack.c.l.b16 %v202
  %v975 = vunpack.c.l.b16 %v203
  %v976 = vunpack.c.l.b16 %v204
  %v977 = vunpack.c.l.b16 %v205
  %v978 = vpack.c.b16 %v915, %v914
  %v979 = vpack.c.b16 %v917, %v916
  %v980 = vpack.c.b16 %v919, %v918
  %v981 = vpack.c.b16 %v921, %v920
  %v982 = vpack.c.b16 %v923, %v922
  %v983 = vpack.c.b16 %v925, %v924
  %v984 = vpack.c.b16 %v927, %v926
  %v985 = vpack.c.b16 %v929, %v928
  %v986 = vpack.c.b16 %v931, %v930
  %v987 = vpack.c.b16 %v933, %v932
  %v988 = vpack.c.b16 %v935, %v934
  %v989 = vpack.c.b16 %v937, %v936
  %v990 = vpack.c.b16 %v939, %v938
  %v991 = vpack.c.b16 %v941, %v940
  %v992 = vpack.c.b16 %v943, %v942
  %v993 = vpack.c.b16 %v945, %v944
  %v994 = vpack.c.b16 %v947, %v946
  %v995 = vpack.c.b16 %v949, %v948
  %v996 = vpack.c.b16 %v951, %v950
  %v997 = vpack.c.b16 %v953, %v952
  %v998 = vpack.c.b16 %v955, %v954
  %v999 = vpack.c.b16 %v957, %v956
  %v1000 = vpack.c.b16 %v959, %v958
  %v1001 = vpack.c.b16 %v961, %v960
  %v1002 = vpack.c.b16 %v963, %v962
  %v1003 = vpack.c.b16 %v965, %v964
  %v1004 = vpack.c.b16 %v967, %v966
  %v1005 = vpack.c.b16 %v969, %v968
  %v1006 = vpack.c.b16 %v971, %v970
  %v1007 = vpack.c.b16 %v973, %v972
  %v1008 = vpack.c.b16 %v975, %v974
  %v1009 = vpack.c.b16 %v977, %v976
  %1042 = vmatpush.bf16.msra.mxu0 %v985
  %1043 = vmatpush.bf16.msra.mxu0 %v984
  %1044 = vmatpush.bf16.msra.mxu0 %v983
  %1045 = vmatpush.bf16.msra.mxu0 %v982
  %1046 = vmatpush.bf16.msra.mxu0 %v981
  %1047 = vmatpush.bf16.msra.mxu0 %v980
  %1048 = vmatpush.bf16.msra.mxu0 %v979
  %1049 = vmatpush.bf16.msra.mxu0 %v978
  %1050 = vmatmul.bf16.gmra.mxu0 %v594
  %v1051 = vpop.f32.mrf.mxu0
  %v1052 = vadd.f32 %v208, %v1051
  %v1053 = vpop.f32.mrf.mxu0
  %v1054 = vadd.f32 %v208, %v1053
  %1055 = vmatmul.bf16.gmra.mxu0 %v598
  %v1056 = vpop.f32.mrf.mxu0
  %v1057 = vadd.f32 %v208, %v1056
  %v1058 = vpop.f32.mrf.mxu0
  %v1059 = vadd.f32 %v208, %v1058
  %1060 = vmatmul.bf16.gmra.mxu0 %v602
  %v1061 = vpop.f32.mrf.mxu0
  %v1062 = vadd.f32 %v208, %v1061
  %v1063 = vpop.f32.mrf.mxu0
  %v1064 = vadd.f32 %v208, %v1063
  %1065 = vmatmul.bf16.gmra.mxu0 %v606
  %v1066 = vpop.f32.mrf.mxu0
  %v1067 = vadd.f32 %v208, %v1066
  %v1068 = vpop.f32.mrf.mxu0
  %v1069 = vadd.f32 %v208, %v1068
  %1070 = vmatmul.bf16.gmra.mxu0 %v610
  %v1071 = vpop.f32.mrf.mxu0
  %v1072 = vadd.f32 %v208, %v1071
  %v1073 = vpop.f32.mrf.mxu0
  %v1074 = vadd.f32 %v208, %v1073
  %1075 = vmatmul.bf16.gmra.mxu0 %v614
  %v1076 = vpop.f32.mrf.mxu0
  %v1077 = vadd.f32 %v208, %v1076
  %v1078 = vpop.f32.mrf.mxu0
  %v1079 = vadd.f32 %v208, %v1078
  %1080 = vmatmul.bf16.gmra.mxu0 %v618
  %v1081 = vpop.f32.mrf.mxu0
  %v1082 = vadd.f32 %v208, %v1081
  %v1083 = vpop.f32.mrf.mxu0
  %v1084 = vadd.f32 %v208, %v1083
  %1085 = vmatmul.bf16.gmra.mxu0 %v622
  %v1086 = vpop.f32.mrf.mxu0
  %v1087 = vadd.f32 %v208, %v1086
  %v1088 = vpop.f32.mrf.mxu0
  %v1089 = vadd.f32 %v208, %v1088
  %1090 = vmatmul.bf16.gmra.mxu0 %v626
  %v1091 = vpop.f32.mrf.mxu0
  %v1092 = vadd.f32 %v208, %v1091
  %v1093 = vpop.f32.mrf.mxu0
  %v1094 = vadd.f32 %v208, %v1093
  %1095 = vmatmul.bf16.gmra.mxu0 %v630
  %v1096 = vpop.f32.mrf.mxu0
  %v1097 = vadd.f32 %v208, %v1096
  %v1098 = vpop.f32.mrf.mxu0
  %v1099 = vadd.f32 %v208, %v1098
  %1100 = vmatmul.bf16.gmra.mxu0 %v634
  %v1101 = vpop.f32.mrf.mxu0
  %v1102 = vadd.f32 %v208, %v1101
  %v1103 = vpop.f32.mrf.mxu0
  %v1104 = vadd.f32 %v208, %v1103
  %1105 = vmatmul.bf16.gmra.mxu0 %v638
  %v1106 = vpop.f32.mrf.mxu0
  %v1107 = vadd.f32 %v208, %v1106
  %v1108 = vpop.f32.mrf.mxu0
  %v1109 = vadd.f32 %v208, %v1108
  %1110 = vmatmul.bf16.gmra.mxu0 %v642
  %v1111 = vpop.f32.mrf.mxu0
  %v1112 = vadd.f32 %v208, %v1111
  %v1113 = vpop.f32.mrf.mxu0
  %v1114 = vadd.f32 %v208, %v1113
  %1115 = vmatmul.bf16.gmra.mxu0 %v646
  %v1116 = vpop.f32.mrf.mxu0
  %v1117 = vadd.f32 %v208, %v1116
  %v1118 = vpop.f32.mrf.mxu0
  %v1119 = vadd.f32 %v208, %v1118
  %1120 = vmatmul.bf16.gmra.mxu0 %v650
  %v1121 = vpop.f32.mrf.mxu0
  %v1122 = vadd.f32 %v208, %v1121
  %v1123 = vpop.f32.mrf.mxu0
  %v1124 = vadd.f32 %v208, %v1123
  %1125 = vmatmul.bf16.gmra.mxu0 %v654
  %v1126 = vpop.f32.mrf.mxu0
  %v1127 = vadd.f32 %v208, %v1126
  %v1128 = vpop.f32.mrf.mxu0
  %v1129 = vadd.f32 %v208, %v1128
  %1130 = vmatmul.bf16.gmra.mxu0 %v658
  %v1131 = vpop.f32.mrf.mxu0
  %v1132 = vadd.f32 %v208, %v1131
  %v1133 = vpop.f32.mrf.mxu0
  %v1134 = vadd.f32 %v208, %v1133
  %1135 = vmatmul.bf16.gmra.mxu0 %v662
  %v1136 = vpop.f32.mrf.mxu0
  %v1137 = vadd.f32 %v208, %v1136
  %v1138 = vpop.f32.mrf.mxu0
  %v1139 = vadd.f32 %v208, %v1138
  %1140 = vmatmul.bf16.gmra.mxu0 %v666
  %v1141 = vpop.f32.mrf.mxu0
  %v1142 = vadd.f32 %v208, %v1141
  %v1143 = vpop.f32.mrf.mxu0
  %v1144 = vadd.f32 %v208, %v1143
  %1145 = vmatmul.bf16.gmra.mxu0 %v670
  %v1146 = vpop.f32.mrf.mxu0
  %v1147 = vadd.f32 %v208, %v1146
  %v1148 = vpop.f32.mrf.mxu0
  %v1149 = vadd.f32 %v208, %v1148
  %1150 = vmatmul.bf16.gmra.mxu0 %v674
  %v1151 = vpop.f32.mrf.mxu0
  %v1152 = vadd.f32 %v208, %v1151
  %v1153 = vpop.f32.mrf.mxu0
  %v1154 = vadd.f32 %v208, %v1153
  %1155 = vmatmul.bf16.gmra.mxu0 %v678
  %v1156 = vpop.f32.mrf.mxu0
  %v1157 = vadd.f32 %v208, %v1156
  %v1158 = vpop.f32.mrf.mxu0
  %v1159 = vadd.f32 %v208, %v1158
  %1160 = vmatmul.bf16.gmra.mxu0 %v682
  %v1161 = vpop.f32.mrf.mxu0
  %v1162 = vadd.f32 %v208, %v1161
  %v1163 = vpop.f32.mrf.mxu0
  %v1164 = vadd.f32 %v208, %v1163
  %1165 = vmatmul.bf16.gmra.mxu0 %v686
  %v1166 = vpop.f32.mrf.mxu0
  %v1167 = vadd.f32 %v208, %v1166
  %v1168 = vpop.f32.mrf.mxu0
  %v1169 = vadd.f32 %v208, %v1168
  %1170 = vmatmul.bf16.gmra.mxu0 %v690
  %v1171 = vpop.f32.mrf.mxu0
  %v1172 = vadd.f32 %v208, %v1171
  %v1173 = vpop.f32.mrf.mxu0
  %v1174 = vadd.f32 %v208, %v1173
  %1175 = vmatmul.bf16.gmra.mxu0 %v694
  %v1176 = vpop.f32.mrf.mxu0
  %v1177 = vadd.f32 %v208, %v1176
  %v1178 = vpop.f32.mrf.mxu0
  %v1179 = vadd.f32 %v208, %v1178
  %1180 = vmatmul.bf16.gmra.mxu0 %v698
  %v1181 = vpop.f32.mrf.mxu0
  %v1182 = vadd.f32 %v208, %v1181
  %v1183 = vpop.f32.mrf.mxu0
  %v1184 = vadd.f32 %v208, %v1183
  %1185 = vmatmul.bf16.gmra.mxu0 %v702
  %v1186 = vpop.f32.mrf.mxu0
  %v1187 = vadd.f32 %v208, %v1186
  %v1188 = vpop.f32.mrf.mxu0
  %v1189 = vadd.f32 %v208, %v1188
  %1190 = vmatmul.bf16.gmra.mxu0 %v706
  %v1191 = vpop.f32.mrf.mxu0
  %v1192 = vadd.f32 %v208, %v1191
  %v1193 = vpop.f32.mrf.mxu0
  %v1194 = vadd.f32 %v208, %v1193
  %1195 = vmatmul.bf16.gmra.mxu0 %v710
  %v1196 = vpop.f32.mrf.mxu0
  %v1197 = vadd.f32 %v208, %v1196
  %v1198 = vpop.f32.mrf.mxu0
  %v1199 = vadd.f32 %v208, %v1198
  %1200 = vmatmul.bf16.gmra.mxu0 %v714
  %v1201 = vpop.f32.mrf.mxu0
  %v1202 = vadd.f32 %v208, %v1201
  %v1203 = vpop.f32.mrf.mxu0
  %v1204 = vadd.f32 %v208, %v1203
  %1205 = vmatmul.bf16.gmra.mxu0 %v718
  %v1206 = vpop.f32.mrf.mxu0
  %v1207 = vadd.f32 %v208, %v1206
  %v1208 = vpop.f32.mrf.mxu0
  %v1209 = vadd.f32 %v208, %v1208
  %1210 = vdwg.mxu0
  %1211 = vmatpush.bf16.msra.mxu0 %v993
  %1212 = vmatpush.bf16.msra.mxu0 %v992
  %1213 = vmatpush.bf16.msra.mxu0 %v991
  %1214 = vmatpush.bf16.msra.mxu0 %v990
  %1215 = vmatpush.bf16.msra.mxu0 %v989
  %1216 = vmatpush.bf16.msra.mxu0 %v988
  %1217 = vmatpush.bf16.msra.mxu0 %v987
  %1218 = vmatpush.bf16.msra.mxu0 %v986
  %1219 = vmatmul.bf16.gmra.mxu0 %v595
  %v1220 = vpop.f32.mrf.mxu0
  %v1221 = vadd.f32 %v1052, %v1220
  %v1222 = vpop.f32.mrf.mxu0
  %v1223 = vadd.f32 %v1054, %v1222
  %1224 = vmatmul.bf16.gmra.mxu0 %v599
  %v1225 = vpop.f32.mrf.mxu0
  %v1226 = vadd.f32 %v1057, %v1225
  %v1227 = vpop.f32.mrf.mxu0
  %v1228 = vadd.f32 %v1059, %v1227
  %1229 = vmatmul.bf16.gmra.mxu0 %v603
  %v1230 = vpop.f32.mrf.mxu0
  %v1231 = vadd.f32 %v1062, %v1230
  %v1232 = vpop.f32.mrf.mxu0
  %v1233 = vadd.f32 %v1064, %v1232
  %1234 = vmatmul.bf16.gmra.mxu0 %v607
  %v1235 = vpop.f32.mrf.mxu0
  %v1236 = vadd.f32 %v1067, %v1235
  %v1237 = vpop.f32.mrf.mxu0
  %v1238 = vadd.f32 %v1069, %v1237
  %1239 = vmatmul.bf16.gmra.mxu0 %v611
  %v1240 = vpop.f32.mrf.mxu0
  %v1241 = vadd.f32 %v1072, %v1240
  %v1242 = vpop.f32.mrf.mxu0
  %v1243 = vadd.f32 %v1074, %v1242
  %1244 = vmatmul.bf16.gmra.mxu0 %v615
  %v1245 = vpop.f32.mrf.mxu0
  %v1246 = vadd.f32 %v1077, %v1245
  %v1247 = vpop.f32.mrf.mxu0
  %v1248 = vadd.f32 %v1079, %v1247
  %1249 = vmatmul.bf16.gmra.mxu0 %v619
  %v1250 = vpop.f32.mrf.mxu0
  %v1251 = vadd.f32 %v1082, %v1250
  %v1252 = vpop.f32.mrf.mxu0
  %v1253 = vadd.f32 %v1084, %v1252
  %1254 = vmatmul.bf16.gmra.mxu0 %v623
  %v1255 = vpop.f32.mrf.mxu0
  %v1256 = vadd.f32 %v1087, %v1255
  %v1257 = vpop.f32.mrf.mxu0
  %v1258 = vadd.f32 %v1089, %v1257
  %1259 = vmatmul.bf16.gmra.mxu0 %v627
  %v1260 = vpop.f32.mrf.mxu0
  %v1261 = vadd.f32 %v1092, %v1260
  %v1262 = vpop.f32.mrf.mxu0
  %v1263 = vadd.f32 %v1094, %v1262
  %1264 = vmatmul.bf16.gmra.mxu0 %v631
  %v1265 = vpop.f32.mrf.mxu0
  %v1266 = vadd.f32 %v1097, %v1265
  %v1267 = vpop.f32.mrf.mxu0
  %v1268 = vadd.f32 %v1099, %v1267
  %1269 = vmatmul.bf16.gmra.mxu0 %v635
  %v1270 = vpop.f32.mrf.mxu0
  %v1271 = vadd.f32 %v1102, %v1270
  %v1272 = vpop.f32.mrf.mxu0
  %v1273 = vadd.f32 %v1104, %v1272
  %1274 = vmatmul.bf16.gmra.mxu0 %v639
  %v1275 = vpop.f32.mrf.mxu0
  %v1276 = vadd.f32 %v1107, %v1275
  %v1277 = vpop.f32.mrf.mxu0
  %v1278 = vadd.f32 %v1109, %v1277
  %1279 = vmatmul.bf16.gmra.mxu0 %v643
  %v1280 = vpop.f32.mrf.mxu0
  %v1281 = vadd.f32 %v1112, %v1280
  %v1282 = vpop.f32.mrf.mxu0
  %v1283 = vadd.f32 %v1114, %v1282
  %1284 = vmatmul.bf16.gmra.mxu0 %v647
  %v1285 = vpop.f32.mrf.mxu0
  %v1286 = vadd.f32 %v1117, %v1285
  %v1287 = vpop.f32.mrf.mxu0
  %v1288 = vadd.f32 %v1119, %v1287
  %1289 = vmatmul.bf16.gmra.mxu0 %v651
  %v1290 = vpop.f32.mrf.mxu0
  %v1291 = vadd.f32 %v1122, %v1290
  %v1292 = vpop.f32.mrf.mxu0
  %v1293 = vadd.f32 %v1124, %v1292
  %1294 = vmatmul.bf16.gmra.mxu0 %v655
  %v1295 = vpop.f32.mrf.mxu0
  %v1296 = vadd.f32 %v1127, %v1295
  %v1297 = vpop.f32.mrf.mxu0
  %v1298 = vadd.f32 %v1129, %v1297
  %1299 = vmatmul.bf16.gmra.mxu0 %v659
  %v1300 = vpop.f32.mrf.mxu0
  %v1301 = vadd.f32 %v1132, %v1300
  %v1302 = vpop.f32.mrf.mxu0
  %v1303 = vadd.f32 %v1134, %v1302
  %1304 = vmatmul.bf16.gmra.mxu0 %v663
  %v1305 = vpop.f32.mrf.mxu0
  %v1306 = vadd.f32 %v1137, %v1305
  %v1307 = vpop.f32.mrf.mxu0
  %v1308 = vadd.f32 %v1139, %v1307
  %1309 = vmatmul.bf16.gmra.mxu0 %v667
  %v1310 = vpop.f32.mrf.mxu0
  %v1311 = vadd.f32 %v1142, %v1310
  %v1312 = vpop.f32.mrf.mxu0
  %v1313 = vadd.f32 %v1144, %v1312
  %1314 = vmatmul.bf16.gmra.mxu0 %v671
  %v1315 = vpop.f32.mrf.mxu0
  %v1316 = vadd.f32 %v1147, %v1315
  %v1317 = vpop.f32.mrf.mxu0
  %v1318 = vadd.f32 %v1149, %v1317
  %1319 = vmatmul.bf16.gmra.mxu0 %v675
  %v1320 = vpop.f32.mrf.mxu0
  %v1321 = vadd.f32 %v1152, %v1320
  %v1322 = vpop.f32.mrf.mxu0
  %v1323 = vadd.f32 %v1154, %v1322
  %1324 = vmatmul.bf16.gmra.mxu0 %v679
  %v1325 = vpop.f32.mrf.mxu0
  %v1326 = vadd.f32 %v1157, %v1325
  %v1327 = vpop.f32.mrf.mxu0
  %v1328 = vadd.f32 %v1159, %v1327
  %1329 = vmatmul.bf16.gmra.mxu0 %v683
  %v1330 = vpop.f32.mrf.mxu0
  %v1331 = vadd.f32 %v1162, %v1330
  %v1332 = vpop.f32.mrf.mxu0
  %v1333 = vadd.f32 %v1164, %v1332
  %1334 = vmatmul.bf16.gmra.mxu0 %v687
  %v1335 = vpop.f32.mrf.mxu0
  %v1336 = vadd.f32 %v1167, %v1335
  %v1337 = vpop.f32.mrf.mxu0
  %v1338 = vadd.f32 %v1169, %v1337
  %1339 = vmatmul.bf16.gmra.mxu0 %v691
  %v1340 = vpop.f32.mrf.mxu0
  %v1341 = vadd.f32 %v1172, %v1340
  %v1342 = vpop.f32.mrf.mxu0
  %v1343 = vadd.f32 %v1174, %v1342
  %1344 = vmatmul.bf16.gmra.mxu0 %v695
  %v1345 = vpop.f32.mrf.mxu0
  %v1346 = vadd.f32 %v1177, %v1345
  %v1347 = vpop.f32.mrf.mxu0
  %v1348 = vadd.f32 %v1179, %v1347
  %1349 = vmatmul.bf16.gmra.mxu0 %v699
  %v1350 = vpop.f32.mrf.mxu0
  %v1351 = vadd.f32 %v1182, %v1350
  %v1352 = vpop.f32.mrf.mxu0
  %v1353 = vadd.f32 %v1184, %v1352
  %1354 = vmatmul.bf16.gmra.mxu0 %v703
  %v1355 = vpop.f32.mrf.mxu0
  %v1356 = vadd.f32 %v1187, %v1355
  %v1357 = vpop.f32.mrf.mxu0
  %v1358 = vadd.f32 %v1189, %v1357
  %1359 = vmatmul.bf16.gmra.mxu0 %v707
  %v1360 = vpop.f32.mrf.mxu0
  %v1361 = vadd.f32 %v1192, %v1360
  %v1362 = vpop.f32.mrf.mxu0
  %v1363 = vadd.f32 %v1194, %v1362
  %1364 = vmatmul.bf16.gmra.mxu0 %v711
  %v1365 = vpop.f32.mrf.mxu0
  %v1366 = vadd.f32 %v1197, %v1365
  %v1367 = vpop.f32.mrf.mxu0
  %v1368 = vadd.f32 %v1199, %v1367
  %1369 = vmatmul.bf16.gmra.mxu0 %v715
  %v1370 = vpop.f32.mrf.mxu0
  %v1371 = vadd.f32 %v1202, %v1370
  %v1372 = vpop.f32.mrf.mxu0
  %v1373 = vadd.f32 %v1204, %v1372
  %1374 = vmatmul.bf16.gmra.mxu0 %v719
  %v1375 = vpop.f32.mrf.mxu0
  %v1376 = vadd.f32 %v1207, %v1375
  %v1377 = vpop.f32.mrf.mxu0
  %v1378 = vadd.f32 %v1209, %v1377
  %1379 = vdwg.mxu0
  %1380 = vmatpush.bf16.msra.mxu0 %v1001
  %1381 = vmatpush.bf16.msra.mxu0 %v1000
  %1382 = vmatpush.bf16.msra.mxu0 %v999
  %1383 = vmatpush.bf16.msra.mxu0 %v998
  %1384 = vmatpush.bf16.msra.mxu0 %v997
  %1385 = vmatpush.bf16.msra.mxu0 %v996
  %1386 = vmatpush.bf16.msra.mxu0 %v995
  %1387 = vmatpush.bf16.msra.mxu0 %v994
  %1388 = vmatmul.bf16.gmra.mxu0 %v596
  %v1389 = vpop.f32.mrf.mxu0
  %v1390 = vadd.f32 %v1221, %v1389
  %v1391 = vpop.f32.mrf.mxu0
  %v1392 = vadd.f32 %v1223, %v1391
  %1393 = vmatmul.bf16.gmra.mxu0 %v600
  %v1394 = vpop.f32.mrf.mxu0
  %v1395 = vadd.f32 %v1226, %v1394
  %v1396 = vpop.f32.mrf.mxu0
  %v1397 = vadd.f32 %v1228, %v1396
  %1398 = vmatmul.bf16.gmra.mxu0 %v604
  %v1399 = vpop.f32.mrf.mxu0
  %v1400 = vadd.f32 %v1231, %v1399
  %v1401 = vpop.f32.mrf.mxu0
  %v1402 = vadd.f32 %v1233, %v1401
  %1403 = vmatmul.bf16.gmra.mxu0 %v608
  %v1404 = vpop.f32.mrf.mxu0
  %v1405 = vadd.f32 %v1236, %v1404
  %v1406 = vpop.f32.mrf.mxu0
  %v1407 = vadd.f32 %v1238, %v1406
  %1408 = vmatmul.bf16.gmra.mxu0 %v612
  %v1409 = vpop.f32.mrf.mxu0
  %v1410 = vadd.f32 %v1241, %v1409
  %v1411 = vpop.f32.mrf.mxu0
  %v1412 = vadd.f32 %v1243, %v1411
  %1413 = vmatmul.bf16.gmra.mxu0 %v616
  %v1414 = vpop.f32.mrf.mxu0
  %v1415 = vadd.f32 %v1246, %v1414
  %v1416 = vpop.f32.mrf.mxu0
  %v1417 = vadd.f32 %v1248, %v1416
  %1418 = vmatmul.bf16.gmra.mxu0 %v620
  %v1419 = vpop.f32.mrf.mxu0
  %v1420 = vadd.f32 %v1251, %v1419
  %v1421 = vpop.f32.mrf.mxu0
  %v1422 = vadd.f32 %v1253, %v1421
  %1423 = vmatmul.bf16.gmra.mxu0 %v624
  %v1424 = vpop.f32.mrf.mxu0
  %v1425 = vadd.f32 %v1256, %v1424
  %v1426 = vpop.f32.mrf.mxu0
  %v1427 = vadd.f32 %v1258, %v1426
  %1428 = vmatmul.bf16.gmra.mxu0 %v628
  %v1429 = vpop.f32.mrf.mxu0
  %v1430 = vadd.f32 %v1261, %v1429
  %v1431 = vpop.f32.mrf.mxu0
  %v1432 = vadd.f32 %v1263, %v1431
  %1433 = vmatmul.bf16.gmra.mxu0 %v632
  %v1434 = vpop.f32.mrf.mxu0
  %v1435 = vadd.f32 %v1266, %v1434
  %v1436 = vpop.f32.mrf.mxu0
  %v1437 = vadd.f32 %v1268, %v1436
  %1438 = vmatmul.bf16.gmra.mxu0 %v636
  %v1439 = vpop.f32.mrf.mxu0
  %v1440 = vadd.f32 %v1271, %v1439
  %v1441 = vpop.f32.mrf.mxu0
  %v1442 = vadd.f32 %v1273, %v1441
  %1443 = vmatmul.bf16.gmra.mxu0 %v640
  %v1444 = vpop.f32.mrf.mxu0
  %v1445 = vadd.f32 %v1276, %v1444
  %v1446 = vpop.f32.mrf.mxu0
  %v1447 = vadd.f32 %v1278, %v1446
  %1448 = vmatmul.bf16.gmra.mxu0 %v644
  %v1449 = vpop.f32.mrf.mxu0
  %v1450 = vadd.f32 %v1281, %v1449
  %v1451 = vpop.f32.mrf.mxu0
  %v1452 = vadd.f32 %v1283, %v1451
  %1453 = vmatmul.bf16.gmra.mxu0 %v648
  %v1454 = vpop.f32.mrf.mxu0
  %v1455 = vadd.f32 %v1286, %v1454
  %v1456 = vpop.f32.mrf.mxu0
  %v1457 = vadd.f32 %v1288, %v1456
  %1458 = vmatmul.bf16.gmra.mxu0 %v652
  %v1459 = vpop.f32.mrf.mxu0
  %v1460 = vadd.f32 %v1291, %v1459
  %v1461 = vpop.f32.mrf.mxu0
  %v1462 = vadd.f32 %v1293, %v1461
  %1463 = vmatmul.bf16.gmra.mxu0 %v656
  %v1464 = vpop.f32.mrf.mxu0
  %v1465 = vadd.f32 %v1296, %v1464
  %v1466 = vpop.f32.mrf.mxu0
  %v1467 = vadd.f32 %v1298, %v1466
  %1468 = vmatmul.bf16.gmra.mxu0 %v660
  %v1469 = vpop.f32.mrf.mxu0
  %v1470 = vadd.f32 %v1301, %v1469
  %v1471 = vpop.f32.mrf.mxu0
  %v1472 = vadd.f32 %v1303, %v1471
  %1473 = vmatmul.bf16.gmra.mxu0 %v664
  %v1474 = vpop.f32.mrf.mxu0
  %v1475 = vadd.f32 %v1306, %v1474
  %v1476 = vpop.f32.mrf.mxu0
  %v1477 = vadd.f32 %v1308, %v1476
  %1478 = vmatmul.bf16.gmra.mxu0 %v668
  %v1479 = vpop.f32.mrf.mxu0
  %v1480 = vadd.f32 %v1311, %v1479
  %v1481 = vpop.f32.mrf.mxu0
  %v1482 = vadd.f32 %v1313, %v1481
  %1483 = vmatmul.bf16.gmra.mxu0 %v672
  %v1484 = vpop.f32.mrf.mxu0
  %v1485 = vadd.f32 %v1316, %v1484
  %v1486 = vpop.f32.mrf.mxu0
  %v1487 = vadd.f32 %v1318, %v1486
  %1488 = vmatmul.bf16.gmra.mxu0 %v676
  %v1489 = vpop.f32.mrf.mxu0
  %v1490 = vadd.f32 %v1321, %v1489
  %v1491 = vpop.f32.mrf.mxu0
  %v1492 = vadd.f32 %v1323, %v1491
  %1493 = vmatmul.bf16.gmra.mxu0 %v680
  %v1494 = vpop.f32.mrf.mxu0
  %v1495 = vadd.f32 %v1326, %v1494
  %v1496 = vpop.f32.mrf.mxu0
  %v1497 = vadd.f32 %v1328, %v1496
  %1498 = vmatmul.bf16.gmra.mxu0 %v684
  %v1499 = vpop.f32.mrf.mxu0
  %v1500 = vadd.f32 %v1331, %v1499
  %v1501 = vpop.f32.mrf.mxu0
  %v1502 = vadd.f32 %v1333, %v1501
  %1503 = vmatmul.bf16.gmra.mxu0 %v688
  %v1504 = vpop.f32.mrf.mxu0
  %v1505 = vadd.f32 %v1336, %v1504
  %v1506 = vpop.f32.mrf.mxu0
  %v1507 = vadd.f32 %v1338, %v1506
  %1508 = vmatmul.bf16.gmra.mxu0 %v692
  %v1509 = vpop.f32.mrf.mxu0
  %v1510 = vadd.f32 %v1341, %v1509
  %v1511 = vpop.f32.mrf.mxu0
  %v1512 = vadd.f32 %v1343, %v1511
  %1513 = vmatmul.bf16.gmra.mxu0 %v696
  %v1514 = vpop.f32.mrf.mxu0
  %v1515 = vadd.f32 %v1346, %v1514
  %v1516 = vpop.f32.mrf.mxu0
  %v1517 = vadd.f32 %v1348, %v1516
  %1518 = vmatmul.bf16.gmra.mxu0 %v700
  %v1519 = vpop.f32.mrf.mxu0
  %v1520 = vadd.f32 %v1351, %v1519
  %v1521 = vpop.f32.mrf.mxu0
  %v1522 = vadd.f32 %v1353, %v1521
  %1523 = vmatmul.bf16.gmra.mxu0 %v704
  %v1524 = vpop.f32.mrf.mxu0
  %v1525 = vadd.f32 %v1356, %v1524
  %v1526 = vpop.f32.mrf.mxu0
  %v1527 = vadd.f32 %v1358, %v1526
  %1528 = vmatmul.bf16.gmra.mxu0 %v708
  %v1529 = vpop.f32.mrf.mxu0
  %v1530 = vadd.f32 %v1361, %v1529
  %v1531 = vpop.f32.mrf.mxu0
  %v1532 = vadd.f32 %v1363, %v1531
  %1533 = vmatmul.bf16.gmra.mxu0 %v712
  %v1534 = vpop.f32.mrf.mxu0
  %v1535 = vadd.f32 %v1366, %v1534
  %v1536 = vpop.f32.mrf.mxu0
  %v1537 = vadd.f32 %v1368, %v1536
  %1538 = vmatmul.bf16.gmra.mxu0 %v716
  %v1539 = vpop.f32.mrf.mxu0
  %v1540 = vadd.f32 %v1371, %v1539
  %v1541 = vpop.f32.mrf.mxu0
  %v1542 = vadd.f32 %v1373, %v1541
  %1543 = vmatmul.bf16.gmra.mxu0 %v720
  %v1544 = vpop.f32.mrf.mxu0
  %v1545 = vadd.f32 %v1376, %v1544
  %v1546 = vpop.f32.mrf.mxu0
  %v1547 = vadd.f32 %v1378, %v1546
  %1548 = vdwg.mxu0
  %1549 = vmatpush.bf16.msra.mxu0 %v1009
  %1550 = vmatpush.bf16.msra.mxu0 %v1008
  %1551 = vmatpush.bf16.msra.mxu0 %v1007
  %1552 = vmatpush.bf16.msra.mxu0 %v1006
  %1553 = vmatpush.bf16.msra.mxu0 %v1005
  %1554 = vmatpush.bf16.msra.mxu0 %v1004
  %1555 = vmatpush.bf16.msra.mxu0 %v1003
  %1556 = vmatpush.bf16.msra.mxu0 %v1002
  %1557 = vmatmul.bf16.gmra.mxu0 %v597
  %v1558 = vpop.f32.mrf.mxu0
  %v1559 = vadd.f32 %v1390, %v1558
  %v1560 = vpop.f32.mrf.mxu0
  %v1561 = vadd.f32 %v1392, %v1560
  %1562 = vmatmul.bf16.gmra.mxu0 %v601
  %v1563 = vpop.f32.mrf.mxu0
  %v1564 = vadd.f32 %v1395, %v1563
  %v1565 = vpop.f32.mrf.mxu0
  %v1566 = vadd.f32 %v1397, %v1565
  %1567 = vmatmul.bf16.gmra.mxu0 %v605
  %v1568 = vpop.f32.mrf.mxu0
  %v1569 = vadd.f32 %v1400, %v1568
  %v1570 = vpop.f32.mrf.mxu0
  %v1571 = vadd.f32 %v1402, %v1570
  %1572 = vmatmul.bf16.gmra.mxu0 %v609
  %v1573 = vpop.f32.mrf.mxu0
  %v1574 = vadd.f32 %v1405, %v1573
  %v1575 = vpop.f32.mrf.mxu0
  %v1576 = vadd.f32 %v1407, %v1575
  %1577 = vmatmul.bf16.gmra.mxu0 %v613
  %v1578 = vpop.f32.mrf.mxu0
  %v1579 = vadd.f32 %v1410, %v1578
  %v1580 = vpop.f32.mrf.mxu0
  %v1581 = vadd.f32 %v1412, %v1580
  %1582 = vmatmul.bf16.gmra.mxu0 %v617
  %v1583 = vpop.f32.mrf.mxu0
  %v1584 = vadd.f32 %v1415, %v1583
  %v1585 = vpop.f32.mrf.mxu0
  %v1586 = vadd.f32 %v1417, %v1585
  %1587 = vmatmul.bf16.gmra.mxu0 %v621
  %v1588 = vpop.f32.mrf.mxu0
  %v1589 = vadd.f32 %v1420, %v1588
  %v1590 = vpop.f32.mrf.mxu0
  %v1591 = vadd.f32 %v1422, %v1590
  %1592 = vmatmul.bf16.gmra.mxu0 %v625
  %v1593 = vpop.f32.mrf.mxu0
  %v1594 = vadd.f32 %v1425, %v1593
  %v1595 = vpop.f32.mrf.mxu0
  %v1596 = vadd.f32 %v1427, %v1595
  %1597 = vmatmul.bf16.gmra.mxu0 %v629
  %v1598 = vpop.f32.mrf.mxu0
  %v1599 = vadd.f32 %v1430, %v1598
  %v1600 = vpop.f32.mrf.mxu0
  %v1601 = vadd.f32 %v1432, %v1600
  %1602 = vmatmul.bf16.gmra.mxu0 %v633
  %v1603 = vpop.f32.mrf.mxu0
  %v1604 = vadd.f32 %v1435, %v1603
  %v1605 = vpop.f32.mrf.mxu0
  %v1606 = vadd.f32 %v1437, %v1605
  %1607 = vmatmul.bf16.gmra.mxu0 %v637
  %v1608 = vpop.f32.mrf.mxu0
  %v1609 = vadd.f32 %v1440, %v1608
  %v1610 = vpop.f32.mrf.mxu0
  %v1611 = vadd.f32 %v1442, %v1610
  %1612 = vmatmul.bf16.gmra.mxu0 %v641
  %v1613 = vpop.f32.mrf.mxu0
  %v1614 = vadd.f32 %v1445, %v1613
  %v1615 = vpop.f32.mrf.mxu0
  %v1616 = vadd.f32 %v1447, %v1615
  %1617 = vmatmul.bf16.gmra.mxu0 %v645
  %v1618 = vpop.f32.mrf.mxu0
  %v1619 = vadd.f32 %v1450, %v1618
  %v1620 = vpop.f32.mrf.mxu0
  %v1621 = vadd.f32 %v1452, %v1620
  %1622 = vmatmul.bf16.gmra.mxu0 %v649
  %v1623 = vpop.f32.mrf.mxu0
  %v1624 = vadd.f32 %v1455, %v1623
  %v1625 = vpop.f32.mrf.mxu0
  %v1626 = vadd.f32 %v1457, %v1625
  %1627 = vmatmul.bf16.gmra.mxu0 %v653
  %v1628 = vpop.f32.mrf.mxu0
  %v1629 = vadd.f32 %v1460, %v1628
  %v1630 = vpop.f32.mrf.mxu0
  %v1631 = vadd.f32 %v1462, %v1630
  %1632 = vmatmul.bf16.gmra.mxu0 %v657
  %v1633 = vpop.f32.mrf.mxu0
  %v1634 = vadd.f32 %v1465, %v1633
  %v1635 = vpop.f32.mrf.mxu0
  %v1636 = vadd.f32 %v1467, %v1635
  %1637 = vmatmul.bf16.gmra.mxu0 %v661
  %v1638 = vpop.f32.mrf.mxu0
  %v1639 = vadd.f32 %v1470, %v1638
  %v1640 = vpop.f32.mrf.mxu0
  %v1641 = vadd.f32 %v1472, %v1640
  %1642 = vmatmul.bf16.gmra.mxu0 %v665
  %v1643 = vpop.f32.mrf.mxu0
  %v1644 = vadd.f32 %v1475, %v1643
  %v1645 = vpop.f32.mrf.mxu0
  %v1646 = vadd.f32 %v1477, %v1645
  %1647 = vmatmul.bf16.gmra.mxu0 %v669
  %v1648 = vpop.f32.mrf.mxu0
  %v1649 = vadd.f32 %v1480, %v1648
  %v1650 = vpop.f32.mrf.mxu0
  %v1651 = vadd.f32 %v1482, %v1650
  %1652 = vmatmul.bf16.gmra.mxu0 %v673
  %v1653 = vpop.f32.mrf.mxu0
  %v1654 = vadd.f32 %v1485, %v1653
  %v1655 = vpop.f32.mrf.mxu0
  %v1656 = vadd.f32 %v1487, %v1655
  %1657 = vmatmul.bf16.gmra.mxu0 %v677
  %v1658 = vpop.f32.mrf.mxu0
  %v1659 = vadd.f32 %v1490, %v1658
  %v1660 = vpop.f32.mrf.mxu0
  %v1661 = vadd.f32 %v1492, %v1660
  %1662 = vmatmul.bf16.gmra.mxu0 %v681
  %v1663 = vpop.f32.mrf.mxu0
  %v1664 = vadd.f32 %v1495, %v1663
  %v1665 = vpop.f32.mrf.mxu0
  %v1666 = vadd.f32 %v1497, %v1665
  %1667 = vmatmul.bf16.gmra.mxu0 %v685
  %v1668 = vpop.f32.mrf.mxu0
  %v1669 = vadd.f32 %v1500, %v1668
  %v1670 = vpop.f32.mrf.mxu0
  %v1671 = vadd.f32 %v1502, %v1670
  %1672 = vmatmul.bf16.gmra.mxu0 %v689
  %v1673 = vpop.f32.mrf.mxu0
  %v1674 = vadd.f32 %v1505, %v1673
  %v1675 = vpop.f32.mrf.mxu0
  %v1676 = vadd.f32 %v1507, %v1675
  %1677 = vmatmul.bf16.gmra.mxu0 %v693
  %v1678 = vpop.f32.mrf.mxu0
  %v1679 = vadd.f32 %v1510, %v1678
  %v1680 = vpop.f32.mrf.mxu0
  %v1681 = vadd.f32 %v1512, %v1680
  %1682 = vmatmul.bf16.gmra.mxu0 %v697
  %v1683 = vpop.f32.mrf.mxu0
  %v1684 = vadd.f32 %v1515, %v1683
  %v1685 = vpop.f32.mrf.mxu0
  %v1686 = vadd.f32 %v1517, %v1685
  %1687 = vmatmul.bf16.gmra.mxu0 %v701
  %v1688 = vpop.f32.mrf.mxu0
  %v1689 = vadd.f32 %v1520, %v1688
  %v1690 = vpop.f32.mrf.mxu0
  %v1691 = vadd.f32 %v1522, %v1690
  %1692 = vmatmul.bf16.gmra.mxu0 %v705
  %v1693 = vpop.f32.mrf.mxu0
  %v1694 = vadd.f32 %v1525, %v1693
  %v1695 = vpop.f32.mrf.mxu0
  %v1696 = vadd.f32 %v1527, %v1695
  %1697 = vmatmul.bf16.gmra.mxu0 %v709
  %v1698 = vpop.f32.mrf.mxu0
  %v1699 = vadd.f32 %v1530, %v1698
  %v1700 = vpop.f32.mrf.mxu0
  %v1701 = vadd.f32 %v1532, %v1700
  %1702 = vmatmul.bf16.gmra.mxu0 %v713
  %v1703 = vpop.f32.mrf.mxu0
  %v1704 = vadd.f32 %v1535, %v1703
  %v1705 = vpop.f32.mrf.mxu0
  %v1706 = vadd.f32 %v1537, %v1705
  %1707 = vmatmul.bf16.gmra.mxu0 %v717
  %v1708 = vpop.f32.mrf.mxu0
  %v1709 = vadd.f32 %v1540, %v1708
  %v1710 = vpop.f32.mrf.mxu0
  %v1711 = vadd.f32 %v1542, %v1710
  %1712 = vmatmul.bf16.gmra.mxu0 %v721
  %v1713 = vpop.f32.mrf.mxu0
  %v1714 = vadd.f32 %v1545, %v1713
  %v1715 = vpop.f32.mrf.mxu0
  %v1716 = vadd.f32 %v1547, %v1715
  %1717 = vdwg.mxu0
  %v1718 = vtanh.pop %v1559
  %v1719 = vtanh.pop %v1561
  %v1720 = vtanh.pop %v1564
  %v1721 = vtanh.pop %v1566
  %v1722 = vtanh.pop %v1569
  %v1723 = vtanh.pop %v1571
  %v1724 = vtanh.pop %v1574
  %v1725 = vtanh.pop %v1576
  %v1726 = vtanh.pop %v1579
  %v1727 = vtanh.pop %v1581
  %v1728 = vtanh.pop %v1584
  %v1729 = vtanh.pop %v1586
  %v1730 = vtanh.pop %v1589
  %v1731 = vtanh.pop %v1591
  %v1732 = vtanh.pop %v1594
  %v1733 = vtanh.pop %v1596
  %v1734 = vtanh.pop %v1599
  %v1735 = vtanh.pop %v1601
  %v1736 = vtanh.pop %v1604
  %v1737 = vtanh.pop %v1606
  %v1738 = vtanh.pop %v1609
  %v1739 = vtanh.pop %v1611
  %v1740 = vtanh.pop %v1614
  %v1741 = vtanh.pop %v1616
  %v1742 = vtanh.pop %v1619
  %v1743 = vtanh.pop %v1621
  %v1744 = vtanh.pop %v1624
  %v1745 = vtanh.pop %v1626
  %v1746 = vtanh.pop %v1629
  %v1747 = vtanh.pop %v1631
  %v1748 = vtanh.pop %v1634
  %v1749 = vtanh.pop %v1636
  %v1750 = vtanh.pop %v1639
  %v1751 = vtanh.pop %v1641
  %v1752 = vtanh.pop %v1644
  %v1753 = vtanh.pop %v1646
  %v1754 = vtanh.pop %v1649
  %v1755 = vtanh.pop %v1651
  %v1756 = vtanh.pop %v1654
  %v1757 = vtanh.pop %v1656
  %v1758 = vtanh.pop %v1659
  %v1759 = vtanh.pop %v1661
  %v1760 = vtanh.pop %v1664
  %v1761 = vtanh.pop %v1666
  %v1762 = vtanh.pop %v1669
  %v1763 = vtanh.pop %v1671
  %v1764 = vtanh.pop %v1674
  %v1765 = vtanh.pop %v1676
  %v1766 = vtanh.pop %v1679
  %v1767 = vtanh.pop %v1681
  %v1768 = vtanh.pop %v1684
  %v1769 = vtanh.pop %v1686
  %v1770 = vtanh.pop %v1689
  %v1771 = vtanh.pop %v1691
  %v1772 = vtanh.pop %v1694
  %v1773 = vtanh.pop %v1696
  %v1774 = vtanh.pop %v1699
  %v1775 = vtanh.pop %v1701
  %v1776 = vtanh.pop %v1704
  %v1777 = vtanh.pop %v1706
  %v1778 = vtanh.pop %v1709
  %v1779 = vtanh.pop %v1711
  %v1780 = vtanh.pop %v1714
  %v1781 = vtanh.pop %v1716
  %1782 = vst [vmem:[%s3] sm:$0xff] %v1718
  %1783 = vst [vmem:[%s3 + $0x8] sm:$0xff] %v1719
  %1784 = vst [vmem:[%s3 + $0x10] sm:$0xff] %v1720
  %1785 = vst [vmem:[%s3 + $0x18] sm:$0xff] %v1721
  %1786 = vst [vmem:[%s3 + $0x20] sm:$0xff] %v1722
  %1787 = vst [vmem:[%s3 + $0x28] sm:$0xff] %v1723
  %1788 = vst [vmem:[%s3 + $0x30] sm:$0xff] %v1724
  %1789 = vst [vmem:[%s3 + $0x38] sm:$0xff] %v1725
  %1790 = vst [vmem:[%s3 + $0x40] sm:$0xff] %v1726
  %1791 = vst [vmem:[%s3 + $0x48] sm:$0xff] %v1727
  %1792 = vst [vmem:[%s3 + $0x50] sm:$0xff] %v1728
  %1793 = vst [vmem:[%s3 + $0x58] sm:$0xff] %v1729
  %1794 = vst [vmem:[%s3 + $0x60] sm:$0xff] %v1730
  %1795 = vst [vmem:[%s3 + $0x68] sm:$0xff] %v1731
  %1796 = vst [vmem:[%s3 + $0x70] sm:$0xff] %v1732
  %1797 = vst [vmem:[%s3 + $0x78] sm:$0xff] %v1733
  %1798 = vst [vmem:[%s3 + $0x80] sm:$0xff] %v1734
  %1799 = vst [vmem:[%s3 + $0x88] sm:$0xff] %v1735
  %1800 = vst [vmem:[%s3 + $0x90] sm:$0xff] %v1736
  %1801 = vst [vmem:[%s3 + $0x98] sm:$0xff] %v1737
  %1802 = vst [vmem:[%s3 + $0xa0] sm:$0xff] %v1738
  %1803 = vst [vmem:[%s3 + $0xa8] sm:$0xff] %v1739
  %1804 = vst [vmem:[%s3 + $0xb0] sm:$0xff] %v1740
  %1805 = vst [vmem:[%s3 + $0xb8] sm:$0xff] %v1741
  %1806 = vst [vmem:[%s3 + $0xc0] sm:$0xff] %v1742
  %1807 = vst [vmem:[%s3 + $0xc8] sm:$0xff] %v1743
  %1808 = vst [vmem:[%s3 + $0xd0] sm:$0xff] %v1744
  %1809 = vst [vmem:[%s3 + $0xd8] sm:$0xff] %v1745
  %1810 = vst [vmem:[%s3 + $0xe0] sm:$0xff] %v1746
  %1811 = vst [vmem:[%s3 + $0xe8] sm:$0xff] %v1747
  %1812 = vst [vmem:[%s3 + $0xf0] sm:$0xff] %v1748
  %1813 = vst [vmem:[%s3 + $0xf8] sm:$0xff] %v1749
  %1814 = vst [vmem:[%s3 + $0x100] sm:$0xff] %v1750
  %1815 = vst [vmem:[%s3 + $0x108] sm:$0xff] %v1751
  %1816 = vst [vmem:[%s3 + $0x110] sm:$0xff] %v1752
  %1817 = vst [vmem:[%s3 + $0x118] sm:$0xff] %v1753
  %1818 = vst [vmem:[%s3 + $0x120] sm:$0xff] %v1754
  %1819 = vst [vmem:[%s3 + $0x128] sm:$0xff] %v1755
  %1820 = vst [vmem:[%s3 + $0x130] sm:$0xff] %v1756
  %1821 = vst [vmem:[%s3 + $0x138] sm:$0xff] %v1757
  %1822 = vst [vmem:[%s3 + $0x140] sm:$0xff] %v1758
  %1823 = vst [vmem:[%s3 + $0x148] sm:$0xff] %v1759
  %1824 = vst [vmem:[%s3 + $0x150] sm:$0xff] %v1760
  %1825 = vst [vmem:[%s3 + $0x158] sm:$0xff] %v1761
  %1826 = vst [vmem:[%s3 + $0x160] sm:$0xff] %v1762
  %1827 = vst [vmem:[%s3 + $0x168] sm:$0xff] %v1763
  %1828 = vst [vmem:[%s3 + $0x170] sm:$0xff] %v1764
  %1829 = vst [vmem:[%s3 + $0x178] sm:$0xff] %v1765
  %1830 = vst [vmem:[%s3 + $0x180] sm:$0xff] %v1766
  %1831 = vst [vmem:[%s3 + $0x188] sm:$0xff] %v1767
  %1832 = vst [vmem:[%s3 + $0x190] sm:$0xff] %v1768
  %1833 = vst [vmem:[%s3 + $0x198] sm:$0xff] %v1769
  %1834 = vst [vmem:[%s3 + $0x1a0] sm:$0xff] %v1770
  %1835 = vst [vmem:[%s3 + $0x1a8] sm:$0xff] %v1771
  %1836 = vst [vmem:[%s3 + $0x1b0] sm:$0xff] %v1772
  %1837 = vst [vmem:[%s3 + $0x1b8] sm:$0xff] %v1773
  %1838 = vst [vmem:[%s3 + $0x1c0] sm:$0xff] %v1774
  %1839 = vst [vmem:[%s3 + $0x1c8] sm:$0xff] %v1775
  %1840 = vst [vmem:[%s3 + $0x1d0] sm:$0xff] %v1776
  %1841 = vst [vmem:[%s3 + $0x1d8] sm:$0xff] %v1777
  %1842 = vst [vmem:[%s3 + $0x1e0] sm:$0xff] %v1778
  %1843 = vst [vmem:[%s3 + $0x1e8] sm:$0xff] %v1779
  %1844 = vst [vmem:[%s3 + $0x1f0] sm:$0xff] %v1780
  %1845 = vst [vmem:[%s3 + $0x1f8] sm:$0xff] %v1781
  // Predicated region
  $region14: #{_lambda_.37} parent=0 // pred_check
    _
  $region15: #{_lambda_.37} parent=0 // pred_check_branch
    %1847 = sbr.rel (0) target = $region17
  $region16: #{_lambda_.37} parent=0 // pred_region
    _
  $region17: #{_lambda_.37} parent=0 // pred_fallthru
    _
  // Predicated region
  $region18: #{_lambda_.37} parent=0 // pred_check
    _
  $region19: #{_lambda_.37} parent=0 // pred_check_branch
    %1849 = sbr.rel (0) target = $region21
  $region20: #{_lambda_.37} parent=0 // pred_region
    _
  $region21: #{_lambda_.37} parent=0 // pred_fallthru
    _

</llo_original>
